<compile_context>
chip_gen: v6e
topology: v6e:2x2x1
jax: 0.10.0
libtpu: 0.0.40
codegen_flags: <defaults>
</compile_context>

<pallas_src>
import functools

import jax
import jax.numpy as jnp
from jax.experimental import pallas as pl
from jax.experimental.pallas import tpu as pltpu

LANE = 128
LANE_BLOCK = 1024   # ray-tile granularity: keeps (g_tile, 128) blocks 8-sublane aligned
CHUNK = 8           # sublanes per in-kernel ray chunk -> each f32 chunk array is one vreg


def _round_up(x, m):
    return ((x + m - 1) // m) * m


def _cdiv(a, b):
    return -(-a // b)


def _tensorcores_per_chip():
    # v7x has 2 TensorCores per chip; v5e/v6e have 1.  Best-effort detection,
    # falls back to 1 (never crashes).
    try:
        kind = jax.devices()[0].device_kind.lower()
    except Exception:
        return 1
    return 2 if ("v7" in kind or "7x" in kind) else 1


def _ray_march_kernel(depths_ref, dens_ref, colors_ref, dinos_ref,
                      chan_ref, weights_ref,
                      *, n_rgb, n_dino, add_bg_rgb, add_bg_dino):
    f32 = jnp.float32
    S = depths_ref.shape[0]
    g_tile = depths_ref.shape[1]
    n_chunks = g_tile // CHUNK

    # TODO(synk): if S ever grows large (>~32), switch the unrolled interval
    # loops below to lax.fori_loop with a small unroll factor to bound code
    # size, and re-check the (S-1, g_tile, 128) weights block vs. VMEM.
    @pl.loop(0, n_chunks)
    def _(c):
        g0 = pl.multiple_of(c * CHUNK, CHUNK)
        sl = pl.ds(g0, CHUNK)
        shape = (CHUNK, LANE)

        t = jnp.ones(shape, f32)          # running transmittance T[i]
        bg_lam = t                        # T used by the last interval (== T[..., -1])
        sum_w = jnp.zeros(shape, f32)
        sum_wd = jnp.zeros(shape, f32)
        rgb_acc = [jnp.zeros(shape, f32) for _ in range(n_rgb)]
        dino_acc = [jnp.zeros(shape, f32) for _ in range(n_dino)]
        d0 = depths_ref[0, sl, :].astype(f32)
        d_min = d0
        d_max = d0

        # Main streaming recurrence: everything re-read from VMEM each interval
        # (cheap vld slots, HBM-bound kernel); no cross-iteration register
        # carries besides the single-vreg accumulators above.
        for i in range(S - 1):
            d_prev = depths_ref[i, sl, :].astype(f32)
            d_next = depths_ref[i + 1, sl, :].astype(f32)
            sg_mid = (dens_ref[i, sl, :].astype(f32)
                      + dens_ref[i + 1, sl, :].astype(f32)) * 0.5
            sg_mid = jax.nn.softplus(sg_mid - 1.0)      # clamp_mode == 'softplus'
            delta = d_next - d_prev
            d_mid = (d_prev + d_next) * 0.5
            alpha = 1.0 - jnp.exp(-sg_mid * delta)

            w = alpha * t                               # weights for this interval
            weights_ref[i, sl, :] = w

            for rc in range(n_rgb):
                c_mid = (colors_ref[rc, i, sl, :].astype(f32)
                         + colors_ref[rc, i + 1, sl, :].astype(f32)) * 0.5
                rgb_acc[rc] = rgb_acc[rc] + w * c_mid
            for dc in range(n_dino):
                dn_mid = (dinos_ref[dc, i, sl, :].astype(f32)
                          + dinos_ref[dc, i + 1, sl, :].astype(f32)) * 0.5
                dino_acc[dc] = dino_acc[dc] + w * dn_mid

            sum_w = sum_w + w
            sum_wd = sum_wd + w * d_mid
            d_min = jnp.minimum(d_min, d_next)
            d_max = jnp.maximum(d_max, d_next)

            bg_lam = t                                  # T before this interval's attenuation
            t = t * (1.0 - alpha + 1e-10)

        # Second (VMEM-resident, cheap) pass for the depth variance: exact
        # two-pass form, re-reading the just-written weights instead of keeping
        # S-1 rows live in vregs.
        mean_depth = sum_wd                             # reference uses the *unnormalized* sum
        var_acc = jnp.zeros(shape, f32)
        for i in range(S - 1):
            d_mid = (depths_ref[i, sl, :].astype(f32)
                     + depths_ref[i + 1, sl, :].astype(f32)) * 0.5
            dd = d_mid - mean_depth
            var_acc = var_acc + weights_ref[i, sl, :] * dd * dd

        if add_bg_rgb:
            bg = 1.0 - sum_w
            rgb_acc = [a + bg for a in rgb_acc]
        if add_bg_dino:
            bg = 1.0 - sum_w
            dino_acc = [a + bg for a in dino_acc]

        for rc in range(n_rgb):
            chan_ref[rc, sl, :] = rgb_acc[rc] * 2.0 - 1.0
        for dc in range(n_dino):
            chan_ref[n_rgb + dc, sl, :] = dino_acc[dc] * 2.0 - 1.0
        base = n_rgb + n_dino
        # Exact divides kept (not pl.reciprocal(approx=True)) so 0/0 -> NaN
        # semantics and bit-parity with the reference are preserved; the
        # wrapper applies nan_to_num + clip.
        chan_ref[base + 0, sl, :] = sum_wd / sum_w
        chan_ref[base + 1, sl, :] = bg_lam
        chan_ref[base + 2, sl, :] = sum_w
        chan_ref[base + 3, sl, :] = var_acc / (sum_w + 1e-6)
        chan_ref[base + 4, sl, :] = d_min                # per-ray depth min over S
        chan_ref[base + 5, sl, :] = d_max                # per-ray depth max over S


def mip_ray_marcher2(colors, densities, depths, dinos, rendering_options, *, tile_n=None):
    assert rendering_options['clamp_mode'] == 'softplus', \
        'MipRayMarcher only supports `clamp_mode`=`softplus`!'
    B, R, S, Crgb = colors.shape
    Cd = dinos.shape[-1]
    assert S >= 2, 'MipRayMarcher2 needs at least 2 samples per ray'
    N = B * R
    # packed rows: rgb | dino | depth | bg_lambda | wtot | var | dmin | dmax
    n_chan = Crgb + Cd + 6

    in_itemsize = jnp.dtype(colors.dtype).itemsize
    per_ray_bytes = S * (2 + Crgb + Cd) * in_itemsize + (n_chan + (S - 1)) * 4

    # ---- ray-tile selection -------------------------------------------------
    # Big lane-dense tiles amortize the ~0.35us/step grid overhead; VMEM cost is
    # ~2*per_ray_bytes per ray double-buffered (~800 B/ray here), so the default
    # 8192-ray tile uses <8 MiB of VMEM on every generation.
    if tile_n is None:
        tile_n = 8192
    tile_n = max(LANE_BLOCK, (tile_n // LANE_BLOCK) * LANE_BLOCK)
    tile_n = min(tile_n, _round_up(N, LANE_BLOCK))
    # Only on 2-TensorCore chips (v7x): split the rays across cores so both TCs
    # get work, keeping each step as large as possible.  Single-TC chips keep
    # one big tile (no artificial halving).
    n_cores = _tensorcores_per_chip()
    if n_cores > 1:
        tile_n = min(tile_n, max(LANE_BLOCK, _round_up(_cdiv(N, n_cores), LANE_BLOCK)))
    # VMEM guard: matters on v5e (16 MiB default scoped VMEM) and v7x (64 MiB
    # physical).  Shrink the tile if the double-buffered blocks would exceed
    # the budget, and raise the scoped limit explicitly to what we need.
    VMEM_BUDGET = 40 << 20
    while tile_n > LANE_BLOCK and 2 * per_ray_bytes * tile_n > VMEM_BUDGET:
        tile_n -= LANE_BLOCK
    vmem_limit = int(min(max(2 * per_ray_bytes * tile_n + (4 << 20), 16 << 20), 64 << 20))

    n_pad = _round_up(N, tile_n)
    G = n_pad // LANE
    g_tile = tile_n // LANE
    grid = (n_pad // tile_n,)

    # ---- layout plumbing to the lane-dense kernel layout.  No f32 upcast here:
    # the kernel DMAs the original dtype and casts in VMEM.
    # TODO(synk): if the upstream producer can emit [S, N] / [C, S, N] directly,
    # these transposes (≈2/3 of end-to-end HBM traffic) vanish.
    depths_t = jnp.transpose(depths[..., 0].reshape(N, S))               # [S, N]
    dens_t = jnp.transpose(densities[..., 0].reshape(N, S))              # [S, N]
    colors_t = jnp.transpose(colors.reshape(N, S, Crgb), (2, 1, 0))      # [Crgb, S, N]
    dinos_t = jnp.transpose(dinos.reshape(N, S, Cd), (2, 1, 0))          # [Cd, S, N]

    if n_pad != N:
        pad2 = ((0, 0), (0, n_pad - N))
        depths_t = jnp.pad(depths_t, pad2)
        dens_t = jnp.pad(dens_t, pad2)
        colors_t = jnp.pad(colors_t, ((0, 0),) + pad2)
        dinos_t = jnp.pad(dinos_t, ((0, 0),) + pad2)

    depths_t = depths_t.reshape(S, G, LANE)
    dens_t = dens_t.reshape(S, G, LANE)
    colors_t = colors_t.reshape(Crgb, S, G, LANE)
    dinos_t = dinos_t.reshape(Cd, S, G, LANE)

    opts = rendering_options
    kernel = functools.partial(
        _ray_march_kernel,
        n_rgb=Crgb, n_dino=Cd,
        add_bg_rgb=bool(opts.get('given_bg', False)) and not bool(opts.get('black_bg', False)),
        add_bg_dino=bool(opts.get('given_bg_dino', True)) and not bool(opts.get('black_bg_dino', False)),
    )

    f32 = jnp.float32
    out_shape = (
        jax.ShapeDtypeStruct((n_chan, G, LANE), f32),   # packed per-ray channels
        jax.ShapeDtypeStruct((S - 1, G, LANE), f32),    # weights
    )
    in_specs = [
        pl.BlockSpec((S, g_tile, LANE), lambda i: (0, i, 0)),
        pl.BlockSpec((S, g_tile, LANE), lambda i: (0, i, 0)),
        pl.BlockSpec((Crgb, S, g_tile, LANE), lambda i: (0, 0, i, 0)),
        pl.BlockSpec((Cd, S, g_tile, LANE), lambda i: (0, 0, i, 0)),
    ]
    out_specs = (
        pl.BlockSpec((n_chan, g_tile, LANE), lambda i: (0, i, 0)),
        pl.BlockSpec((S - 1, g_tile, LANE), lambda i: (0, i, 0)),
    )

    in_bytes = ((depths_t.size + dens_t.size) * in_itemsize
                + (colors_t.size + dinos_t.size) * in_itemsize)
    out_bytes = (n_chan + (S - 1)) * n_pad * 4
    cost = pl.CostEstimate(
        flops=int(40 * (S - 1) * n_pad),
        transcendentals=int(3 * (S - 1) * n_pad),     # softplus (exp+log1p) + alpha exp
        bytes_accessed=int(in_bytes + out_bytes),
    )

    chan, w_t = pl.pallas_call(
        kernel,
        out_shape=out_shape,
        grid_spec=pltpu.PrefetchScalarGridSpec(
            num_scalar_prefetch=0, grid=grid,
            in_specs=in_specs, out_specs=out_specs),
        compiler_params=pltpu.CompilerParams(
            dimension_semantics=("parallel",),
            vmem_limit_bytes=vmem_limit),
        cost_estimate=cost,
    )(depths_t, dens_t, colors_t, dinos_t)

    # ---- unpack & layout back to the PyTorch [B, R, ...] convention.
    chan = chan.reshape(n_chan, n_pad)[:, :N]          # drop padded lanes
    w_t = w_t.reshape(S - 1, n_pad)[:, :N]

    composite_rgb = jnp.transpose(chan[:Crgb]).reshape(B, R, Crgb)
    composite_dino = jnp.transpose(chan[Crgb:Crgb + Cd]).reshape(B, R, Cd)
    base = Crgb + Cd
    composite_depth = chan[base + 0].reshape(B, R, 1)
    bg_lambda = chan[base + 1].reshape(B, R, 1)
    fg_mask = chan[base + 2].reshape(B, R, 1)
    var_rows = chan[base + 3]                          # [N]
    depth_min = jnp.min(chan[base + 4])                # global depth min (from kernel rows)
    depth_max = jnp.max(chan[base + 5])                # global depth max
    weights = jnp.transpose(w_t).reshape(B, R, S - 1, 1)

    # Global-scalar glue stays in JAX: needs cross-tile reductions over all
    # *real* rays (padded lanes already sliced off).  No second HBM read of the
    # depths tensor — the kernel emitted per-ray min/max.
    composite_depth = jnp.nan_to_num(composite_depth, nan=jnp.inf)
    composite_depth = jnp.clip(composite_depth, depth_min, depth_max)
    var_depth = jnp.mean(var_rows)

    return (composite_rgb, composite_depth, weights, bg_lambda,
            composite_dino, fg_mask, var_depth)


def _reference(colors, densities, depths, dinos, opts):
    """Pure-JAX transcription of the PyTorch module (defaults baked in)."""
    deltas = depths[:, :, 1:] - depths[:, :, :-1]
    colors_mid = (colors[:, :, :-1] + colors[:, :, 1:]) / 2
    densities_mid = (densities[:, :, :-1] + densities[:, :, 1:]) / 2
    depths_mid = (depths[:, :, :-1] + depths[:, :, 1:]) / 2
    dinos_mid = (dinos[:, :, :-1] + dinos[:, :, 1:]) / 2
    densities_mid = jax.nn.softplus(densities_mid - 1)
    density_delta = densities_mid * deltas
    alpha = 1 - jnp.exp(-density_delta)
    alpha_shifted = jnp.concatenate(
        [jnp.ones_like(alpha[:, :, :1]), 1 - alpha + 1e-10], -2)
    T = jnp.cumprod(alpha_shifted, -2)[:, :, :-1]
    weights = alpha * T
    composite_rgb = jnp.sum(weights * colors_mid, -2)
    weight_total = weights.sum(2)
    composite_depth = jnp.sum(weights * depths_mid, -2) / weight_total
    composite_dino = jnp.sum(weights * dinos_mid, -2)
    mean_depth = jnp.sum(weights * depths_mid, -2, keepdims=True)
    var_depth = jnp.sum(weights * (depths_mid - mean_depth) ** 2, -2) / (weight_total + 1e-6)
    var_depth = jnp.mean(var_depth)
    composite_depth = jnp.nan_to_num(composite_depth, nan=jnp.inf)
    composite_depth = jnp.clip(composite_depth, jnp.min(depths), jnp.max(depths))
    if opts.get('given_bg', False) and not opts.get('black_bg', False):
        composite_rgb = composite_rgb + 1 - weight_total
    if opts.get('given_bg_dino', True) and not opts.get('black_bg_dino', False):
        composite_dino = composite_dino + 1 - weight_total
    composite_rgb = composite_rgb * 2 - 1
    composite_dino = composite_dino * 2 - 1
    return (composite_rgb, composite_depth, weights, T[:, :, -1],
            composite_dino, weight_total, var_depth)


if __name__ == "__main__":
    rendering_options = {'clamp_mode': 'softplus'}
    names = ["composite_rgb", "composite_depth", "weights", "bg_lambda",
             "composite_dino", "fg_mask", "var_depth"]
    root_key = jax.random.PRNGKey(0)

    def run_case(B, R, S, Crgb, Cd, case_id, **kwargs):
        key = jax.random.fold_in(root_key, case_id)
        k1, k2, k3, k4 = jax.random.split(key, 4)
        colors = jax.random.uniform(k1, (B, R, S, Crgb), dtype=jnp.float32)
        densities = jax.random.normal(k2, (B, R, S, 1), dtype=jnp.float32)
        depths = jnp.sort(
            jax.random.uniform(k3, (B, R, S, 1), minval=0.5, maxval=2.5,
                               dtype=jnp.float32), axis=2)
        dinos = jax.random.uniform(k4, (B, R, S, Cd), dtype=jnp.float32)

        outs = mip_ray_marcher2(colors, densities, depths, dinos,
                                rendering_options, **kwargs)
        outs = jax.block_until_ready(outs)
        refs = _reference(colors, densities, depths, dinos, rendering_options)
        for name, got, want in zip(names, outs, refs):
            want = jnp.asarray(want)
            assert got.shape == want.shape, (name, got.shape, want.shape)
            assert jnp.allclose(got, want, rtol=1e-5, atol=1e-5), name

    # Small ragged ray count (lane padding, single grid step, single chunk).
    run_case(B=2, R=100, S=9, Crgb=3, Cd=4, case_id=0)
    # Mid-size: multiple in-kernel chunks, still one grid step on single-TC chips.
    run_case(B=2, R=1200, S=9, Crgb=3, Cd=4, case_id=1)
    # Larger: multiple grid steps + tail padding with the big default tile.
    run_case(B=2, R=6000, S=9, Crgb=3, Cd=4, case_id=2)

    print("KERNEL_OK")
</pallas_src>

<mosaic_0001>
module attributes {stable_mosaic.version = 11 : i64} {
  func.func @_ray_march_kernel(%arg0: i32, %arg1: memref<9x8x128xf32, #tpu.memory_space<vmem>>, %arg2: memref<9x8x128xf32, #tpu.memory_space<vmem>>, %arg3: memref<3x9x8x128xf32, #tpu.memory_space<vmem>>, %arg4: memref<4x9x8x128xf32, #tpu.memory_space<vmem>>, %arg5: memref<13x8x128xf32, #tpu.memory_space<vmem>>, %arg6: memref<8x8x128xf32, #tpu.memory_space<vmem>>) attributes {dimension_semantics = [#tpu.dimension_semantics<parallel>], iteration_bounds = array<i64: 1>, scalar_prefetch = 0 : i64, scratch_operands = 0 : i64, tpu.core_type = #tpu.core_type<tc>, window_params = [{transform_indices = @transform_0, window_bounds = array<i64: 9, 8, 128>}, {transform_indices = @transform_1, window_bounds = array<i64: 9, 8, 128>}, {transform_indices = @transform_2, window_bounds = array<i64: 3, 9, 8, 128>}, {transform_indices = @transform_3, window_bounds = array<i64: 4, 9, 8, 128>}, {transform_indices = @transform_4, window_bounds = array<i64: 13, 8, 128>}, {transform_indices = @transform_5, window_bounds = array<i64: 8, 8, 128>}]} {
    %c0_i32 = arith.constant 0 : i32
    %c1_i32 = arith.constant 1 : i32
    %0 = arith.muli %c0_i32, %c1_i32 : i32
    %c0_i32_0 = arith.constant 0 : i32
    %1 = arith.addi %c0_i32_0, %0 : i32
    %c8_i32 = arith.constant 8 : i32
    %2 = arith.muli %1, %c8_i32 : i32
    %3 = tpu.assume_multiple %2, 8 : i32
    %cst = arith.constant 1.000000e+00 : f32
    %4 = vector.broadcast %cst : f32 to vector<8x128xf32>
    %cst_1 = arith.constant 0.000000e+00 : f32
    %5 = vector.broadcast %cst_1 : f32 to vector<8x128xf32>
    %cst_2 = arith.constant 0.000000e+00 : f32
    %6 = vector.broadcast %cst_2 : f32 to vector<8x128xf32>
    %cst_3 = arith.constant 0.000000e+00 : f32
    %7 = vector.broadcast %cst_3 : f32 to vector<8x128xf32>
    %cst_4 = arith.constant 0.000000e+00 : f32
    %8 = vector.broadcast %cst_4 : f32 to vector<8x128xf32>
    %cst_5 = arith.constant 0.000000e+00 : f32
    %9 = vector.broadcast %cst_5 : f32 to vector<8x128xf32>
    %cst_6 = arith.constant 0.000000e+00 : f32
    %10 = vector.broadcast %cst_6 : f32 to vector<8x128xf32>
    %cst_7 = arith.constant 0.000000e+00 : f32
    %11 = vector.broadcast %cst_7 : f32 to vector<8x128xf32>
    %cst_8 = arith.constant 0.000000e+00 : f32
    %12 = vector.broadcast %cst_8 : f32 to vector<8x128xf32>
    %cst_9 = arith.constant 0.000000e+00 : f32
    %13 = vector.broadcast %cst_9 : f32 to vector<8x128xf32>
    %c0 = arith.constant 0 : index
    %14 = arith.index_cast %3 : i32 to index
    %c0_10 = arith.constant 0 : index
    %15 = vector.load %arg1[%c0, %14, %c0_10] : memref<9x8x128xf32, #tpu.memory_space<vmem>>, vector<1x8x128xf32>
    %16 = vector.shape_cast %15 : vector<1x8x128xf32> to vector<8x128xf32>
    %c0_11 = arith.constant 0 : index
    %17 = arith.index_cast %3 : i32 to index
    %c0_12 = arith.constant 0 : index
    %18 = vector.load %arg1[%c0_11, %17, %c0_12] : memref<9x8x128xf32, #tpu.memory_space<vmem>>, vector<1x8x128xf32>
    %19 = vector.shape_cast %18 : vector<1x8x128xf32> to vector<8x128xf32>
    %c1 = arith.constant 1 : index
    %20 = arith.index_cast %3 : i32 to index
    %c0_13 = arith.constant 0 : index
    %21 = vector.load %arg1[%c1, %20, %c0_13] : memref<9x8x128xf32, #tpu.memory_space<vmem>>, vector<1x8x128xf32>
    %22 = vector.shape_cast %21 : vector<1x8x128xf32> to vector<8x128xf32>
    %c0_14 = arith.constant 0 : index
    %23 = arith.index_cast %3 : i32 to index
    %c0_15 = arith.constant 0 : index
    %24 = vector.load %arg2[%c0_14, %23, %c0_15] : memref<9x8x128xf32, #tpu.memory_space<vmem>>, vector<1x8x128xf32>
    %25 = vector.shape_cast %24 : vector<1x8x128xf32> to vector<8x128xf32>
    %c1_16 = arith.constant 1 : index
    %26 = arith.index_cast %3 : i32 to index
    %c0_17 = arith.constant 0 : index
    %27 = vector.load %arg2[%c1_16, %26, %c0_17] : memref<9x8x128xf32, #tpu.memory_space<vmem>>, vector<1x8x128xf32>
    %28 = vector.shape_cast %27 : vector<1x8x128xf32> to vector<8x128xf32>
    %29 = arith.addf %25, %28 : vector<8x128xf32>
    %cst_18 = arith.constant 5.000000e-01 : f32
    %30 = vector.broadcast %cst_18 : f32 to vector<8x128xf32>
    %31 = arith.mulf %29, %30 : vector<8x128xf32>
    %cst_19 = arith.constant 1.000000e+00 : f32
    %32 = vector.broadcast %cst_19 : f32 to vector<8x128xf32>
    %33 = arith.subf %31, %32 : vector<8x128xf32>
    %cst_20 = arith.constant 0.000000e+00 : f32
    %34 = vector.broadcast %cst_20 : f32 to vector<8x128xf32>
    %35 = arith.maximumf %33, %34 : vector<8x128xf32>
    %36 = vector.broadcast %cst_20 : f32 to vector<8x128xf32>
    %37 = arith.subf %33, %36 : vector<8x128xf32>
    %38 = arith.cmpf one, %37, %37 : vector<8x128xf32>
    %39 = vector.broadcast %cst_20 : f32 to vector<8x128xf32>
    %40 = arith.addf %33, %39 : vector<8x128xf32>
    %41 = math.absf %37 : vector<8x128xf32>
    %cst_21 = arith.constant 0.000000e+00 : f32
    %42 = vector.broadcast %cst_21 : f32 to vector<8x128xf32>
    %43 = arith.subf %42, %41 : vector<8x128xf32>
    %44 = math.exp %43 : vector<8x128xf32>
    %45 = math.log1p %44 : vector<8x128xf32>
    %46 = arith.addf %35, %45 : vector<8x128xf32>
    %47 = arith.select %38, %40, %46 : vector<8x128xi1>, vector<8x128xf32>
    %48 = arith.subf %22, %19 : vector<8x128xf32>
    %49 = arith.addf %19, %22 : vector<8x128xf32>
    %cst_22 = arith.constant 5.000000e-01 : f32
    %50 = vector.broadcast %cst_22 : f32 to vector<8x128xf32>
    %51 = arith.mulf %49, %50 : vector<8x128xf32>
    %cst_23 = arith.constant 0.000000e+00 : f32
    %52 = vector.broadcast %cst_23 : f32 to vector<8x128xf32>
    %53 = arith.subf %52, %47 : vector<8x128xf32>
    %54 = arith.mulf %53, %48 : vector<8x128xf32>
    %55 = math.exp %54 : vector<8x128xf32>
    %cst_24 = arith.constant 1.000000e+00 : f32
    %56 = vector.broadcast %cst_24 : f32 to vector<8x128xf32>
    %57 = arith.subf %56, %55 : vector<8x128xf32>
    %58 = arith.mulf %57, %4 : vector<8x128xf32>
    %c0_25 = arith.constant 0 : index
    %59 = arith.index_cast %3 : i32 to index
    %c0_26 = arith.constant 0 : index
    %60 = vector.load %arg6[%c0_25, %59, %c0_26] : memref<8x8x128xf32, #tpu.memory_space<vmem>>, vector<1x8x128xf32>
    %61 = vector.shape_cast %60 : vector<1x8x128xf32> to vector<8x128xf32>
    %62 = vector.shape_cast %58 : vector<8x128xf32> to vector<1x8x128xf32>
    tpu.vector_store %arg6[%c0_25, %59, %c0_26], %62 {strides = array<i32>} : memref<8x8x128xf32, #tpu.memory_space<vmem>>, vector<1x8x128xf32>,
    %c0_27 = arith.constant 0 : index
    %c0_28 = arith.constant 0 : index
    %63 = arith.index_cast %3 : i32 to index
    %c0_29 = arith.constant 0 : index
    %64 = vector.load %arg3[%c0_27, %c0_28, %63, %c0_29] : memref<3x9x8x128xf32, #tpu.memory_space<vmem>>, vector<1x1x8x128xf32>
    %65 = vector.shape_cast %64 : vector<1x1x8x128xf32> to vector<8x128xf32>
    %c0_30 = arith.constant 0 : index
    %c1_31 = arith.constant 1 : index
    %66 = arith.index_cast %3 : i32 to index
    %c0_32 = arith.constant 0 : index
    %67 = vector.load %arg3[%c0_30, %c1_31, %66, %c0_32] : memref<3x9x8x128xf32, #tpu.memory_space<vmem>>, vector<1x1x8x128xf32>
    %68 = vector.shape_cast %67 : vector<1x1x8x128xf32> to vector<8x128xf32>
    %69 = arith.addf %65, %68 : vector<8x128xf32>
    %cst_33 = arith.constant 5.000000e-01 : f32
    %70 = vector.broadcast %cst_33 : f32 to vector<8x128xf32>
    %71 = arith.mulf %69, %70 : vector<8x128xf32>
    %72 = arith.mulf %58, %71 : vector<8x128xf32>
    %73 = arith.addf %7, %72 : vector<8x128xf32>
    %c1_34 = arith.constant 1 : index
    %c0_35 = arith.constant 0 : index
    %74 = arith.index_cast %3 : i32 to index
    %c0_36 = arith.constant 0 : index
    %75 = vector.load %arg3[%c1_34, %c0_35, %74, %c0_36] : memref<3x9x8x128xf32, #tpu.memory_space<vmem>>, vector<1x1x8x128xf32>
    %76 = vector.shape_cast %75 : vector<1x1x8x128xf32> to vector<8x128xf32>
    %c1_37 = arith.constant 1 : index
    %c1_38 = arith.constant 1 : index
    %77 = arith.index_cast %3 : i32 to index
    %c0_39 = arith.constant 0 : index
    %78 = vector.load %arg3[%c1_37, %c1_38, %77, %c0_39] : memref<3x9x8x128xf32, #tpu.memory_space<vmem>>, vector<1x1x8x128xf32>
    %79 = vector.shape_cast %78 : vector<1x1x8x128xf32> to vector<8x128xf32>
    %80 = arith.addf %76, %79 : vector<8x128xf32>
    %cst_40 = arith.constant 5.000000e-01 : f32
    %81 = vector.broadcast %cst_40 : f32 to vector<8x128xf32>
    %82 = arith.mulf %80, %81 : vector<8x128xf32>
    %83 = arith.mulf %58, %82 : vector<8x128xf32>
    %84 = arith.addf %8, %83 : vector<8x128xf32>
    %c2 = arith.constant 2 : index
    %c0_41 = arith.constant 0 : index
    %85 = arith.index_cast %3 : i32 to index
    %c0_42 = arith.constant 0 : index
    %86 = vector.load %arg3[%c2, %c0_41, %85, %c0_42] : memref<3x9x8x128xf32, #tpu.memory_space<vmem>>, vector<1x1x8x128xf32>
    %87 = vector.shape_cast %86 : vector<1x1x8x128xf32> to vector<8x128xf32>
    %c2_43 = arith.constant 2 : index
    %c1_44 = arith.constant 1 : index
    %88 = arith.index_cast %3 : i32 to index
    %c0_45 = arith.constant 0 : index
    %89 = vector.load %arg3[%c2_43, %c1_44, %88, %c0_45] : memref<3x9x8x128xf32, #tpu.memory_space<vmem>>, vector<1x1x8x128xf32>
    %90 = vector.shape_cast %89 : vector<1x1x8x128xf32> to vector<8x128xf32>
    %91 = arith.addf %87, %90 : vector<8x128xf32>
    %cst_46 = arith.constant 5.000000e-01 : f32
    %92 = vector.broadcast %cst_46 : f32 to vector<8x128xf32>
    %93 = arith.mulf %91, %92 : vector<8x128xf32>
    %94 = arith.mulf %58, %93 : vector<8x128xf32>
    %95 = arith.addf %9, %94 : vector<8x128xf32>
    %c0_47 = arith.constant 0 : index
    %c0_48 = arith.constant 0 : index
    %96 = arith.index_cast %3 : i32 to index
    %c0_49 = arith.constant 0 : index
    %97 = vector.load %arg4[%c0_47, %c0_48, %96, %c0_49] : memref<4x9x8x128xf32, #tpu.memory_space<vmem>>, vector<1x1x8x128xf32>
    %98 = vector.shape_cast %97 : vector<1x1x8x128xf32> to vector<8x128xf32>
    %c0_50 = arith.constant 0 : index
    %c1_51 = arith.constant 1 : index
    %99 = arith.index_cast %3 : i32 to index
    %c0_52 = arith.constant 0 : index
    %100 = vector.load %arg4[%c0_50, %c1_51, %99, %c0_52] : memref<4x9x8x128xf32, #tpu.memory_space<vmem>>, vector<1x1x8x128xf32>
    %101 = vector.shape_cast %100 : vector<1x1x8x128xf32> to vector<8x128xf32>
    %102 = arith.addf %98, %101 : vector<8x128xf32>
    %cst_53 = arith.constant 5.000000e-01 : f32
    %103 = vector.broadcast %cst_53 : f32 to vector<8x128xf32>
    %104 = arith.mulf %102, %103 : vector<8x128xf32>
    %105 = arith.mulf %58, %104 : vector<8x128xf32>
    %106 = arith.addf %10, %105 : vector<8x128xf32>
    %c1_54 = arith.constant 1 : index
    %c0_55 = arith.constant 0 : index
    %107 = arith.index_cast %3 : i32 to index
    %c0_56 = arith.constant 0 : index
    %108 = vector.load %arg4[%c1_54, %c0_55, %107, %c0_56] : memref<4x9x8x128xf32, #tpu.memory_space<vmem>>, vector<1x1x8x128xf32>
    %109 = vector.shape_cast %108 : vector<1x1x8x128xf32> to vector<8x128xf32>
    %c1_57 = arith.constant 1 : index
    %c1_58 = arith.constant 1 : index
    %110 = arith.index_cast %3 : i32 to index
    %c0_59 = arith.constant 0 : index
    %111 = vector.load %arg4[%c1_57, %c1_58, %110, %c0_59] : memref<4x9x8x128xf32, #tpu.memory_space<vmem>>, vector<1x1x8x128xf32>
    %112 = vector.shape_cast %111 : vector<1x1x8x128xf32> to vector<8x128xf32>
    %113 = arith.addf %109, %112 : vector<8x128xf32>
    %cst_60 = arith.constant 5.000000e-01 : f32
    %114 = vector.broadcast %cst_60 : f32 to vector<8x128xf32>
    %115 = arith.mulf %113, %114 : vector<8x128xf32>
    %116 = arith.mulf %58, %115 : vector<8x128xf32>
    %117 = arith.addf %11, %116 : vector<8x128xf32>
    %c2_61 = arith.constant 2 : index
    %c0_62 = arith.constant 0 : index
    %118 = arith.index_cast %3 : i32 to index
    %c0_63 = arith.constant 0 : index
    %119 = vector.load %arg4[%c2_61, %c0_62, %118, %c0_63] : memref<4x9x8x128xf32, #tpu.memory_space<vmem>>, vector<1x1x8x128xf32>
    %120 = vector.shape_cast %119 : vector<1x1x8x128xf32> to vector<8x128xf32>
    %c2_64 = arith.constant 2 : index
    %c1_65 = arith.constant 1 : index
    %121 = arith.index_cast %3 : i32 to index
    %c0_66 = arith.constant 0 : index
    %122 = vector.load %arg4[%c2_64, %c1_65, %121, %c0_66] : memref<4x9x8x128xf32, #tpu.memory_space<vmem>>, vector<1x1x8x128xf32>
    %123 = vector.shape_cast %122 : vector<1x1x8x128xf32> to vector<8x128xf32>
    %124 = arith.addf %120, %123 : vector<8x128xf32>
    %cst_67 = arith.constant 5.000000e-01 : f32
    %125 = vector.broadcast %cst_67 : f32 to vector<8x128xf32>
    %126 = arith.mulf %124, %125 : vector<8x128xf32>
    %127 = arith.mulf %58, %126 : vector<8x128xf32>
    %128 = arith.addf %12, %127 : vector<8x128xf32>
    %c3 = arith.constant 3 : index
    %c0_68 = arith.constant 0 : index
    %129 = arith.index_cast %3 : i32 to index
    %c0_69 = arith.constant 0 : index
    %130 = vector.load %arg4[%c3, %c0_68, %129, %c0_69] : memref<4x9x8x128xf32, #tpu.memory_space<vmem>>, vector<1x1x8x128xf32>
    %131 = vector.shape_cast %130 : vector<1x1x8x128xf32> to vector<8x128xf32>
    %c3_70 = arith.constant 3 : index
    %c1_71 = arith.constant 1 : index
    %132 = arith.index_cast %3 : i32 to index
    %c0_72 = arith.constant 0 : index
    %133 = vector.load %arg4[%c3_70, %c1_71, %132, %c0_72] : memref<4x9x8x128xf32, #tpu.memory_space<vmem>>, vector<1x1x8x128xf32>
    %134 = vector.shape_cast %133 : vector<1x1x8x128xf32> to vector<8x128xf32>
    %135 = arith.addf %131, %134 : vector<8x128xf32>
    %cst_73 = arith.constant 5.000000e-01 : f32
    %136 = vector.broadcast %cst_73 : f32 to vector<8x128xf32>
    %137 = arith.mulf %135, %136 : vector<8x128xf32>
    %138 = arith.mulf %58, %137 : vector<8x128xf32>
    %139 = arith.addf %13, %138 : vector<8x128xf32>
    %140 = arith.addf %5, %58 : vector<8x128xf32>
    %141 = arith.mulf %58, %51 : vector<8x128xf32>
    %142 = arith.addf %6, %141 : vector<8x128xf32>
    %143 = arith.minimumf %16, %22 : vector<8x128xf32>
    %144 = arith.maximumf %16, %22 : vector<8x128xf32>
    %cst_74 = arith.constant 1.000000e+00 : f32
    %145 = vector.broadcast %cst_74 : f32 to vector<8x128xf32>
    %146 = arith.subf %145, %57 : vector<8x128xf32>
    %cst_75 = arith.constant 1.000000e-10 : f32
    %147 = vector.broadcast %cst_75 : f32 to vector<8x128xf32>
    %148 = arith.addf %146, %147 : vector<8x128xf32>
    %149 = arith.mulf %4, %148 : vector<8x128xf32>
    %c1_76 = arith.constant 1 : index
    %150 = arith.index_cast %3 : i32 to index
    %c0_77 = arith.constant 0 : index
    %151 = vector.load %arg1[%c1_76, %150, %c0_77] : memref<9x8x128xf32, #tpu.memory_space<vmem>>, vector<1x8x128xf32>
    %152 = vector.shape_cast %151 : vector<1x8x128xf32> to vector<8x128xf32>
    %c2_78 = arith.constant 2 : index
    %153 = arith.index_cast %3 : i32 to index
    %c0_79 = arith.constant 0 : index
    %154 = vector.load %arg1[%c2_78, %153, %c0_79] : memref<9x8x128xf32, #tpu.memory_space<vmem>>, vector<1x8x128xf32>
    %155 = vector.shape_cast %154 : vector<1x8x128xf32> to vector<8x128xf32>
    %c1_80 = arith.constant 1 : index
    %156 = arith.index_cast %3 : i32 to index
    %c0_81 = arith.constant 0 : index
    %157 = vector.load %arg2[%c1_80, %156, %c0_81] : memref<9x8x128xf32, #tpu.memory_space<vmem>>, vector<1x8x128xf32>
    %158 = vector.shape_cast %157 : vector<1x8x128xf32> to vector<8x128xf32>
    %c2_82 = arith.constant 2 : index
    %159 = arith.index_cast %3 : i32 to index
    %c0_83 = arith.constant 0 : index
    %160 = vector.load %arg2[%c2_82, %159, %c0_83] : memref<9x8x128xf32, #tpu.memory_space<vmem>>, vector<1x8x128xf32>
    %161 = vector.shape_cast %160 : vector<1x8x128xf32> to vector<8x128xf32>
    %162 = arith.addf %158, %161 : vector<8x128xf32>
    %cst_84 = arith.constant 5.000000e-01 : f32
    %163 = vector.broadcast %cst_84 : f32 to vector<8x128xf32>
    %164 = arith.mulf %162, %163 : vector<8x128xf32>
    %cst_85 = arith.constant 1.000000e+00 : f32
    %165 = vector.broadcast %cst_85 : f32 to vector<8x128xf32>
    %166 = arith.subf %164, %165 : vector<8x128xf32>
    %cst_86 = arith.constant 0.000000e+00 : f32
    %167 = vector.broadcast %cst_86 : f32 to vector<8x128xf32>
    %168 = arith.maximumf %166, %167 : vector<8x128xf32>
    %169 = vector.broadcast %cst_86 : f32 to vector<8x128xf32>
    %170 = arith.subf %166, %169 : vector<8x128xf32>
    %171 = arith.cmpf one, %170, %170 : vector<8x128xf32>
    %172 = vector.broadcast %cst_86 : f32 to vector<8x128xf32>
    %173 = arith.addf %166, %172 : vector<8x128xf32>
    %174 = math.absf %170 : vector<8x128xf32>
    %cst_87 = arith.constant 0.000000e+00 : f32
    %175 = vector.broadcast %cst_87 : f32 to vector<8x128xf32>
    %176 = arith.subf %175, %174 : vector<8x128xf32>
    %177 = math.exp %176 : vector<8x128xf32>
    %178 = math.log1p %177 : vector<8x128xf32>
    %179 = arith.addf %168, %178 : vector<8x128xf32>
    %180 = arith.select %171, %173, %179 : vector<8x128xi1>, vector<8x128xf32>
    %181 = arith.subf %155, %152 : vector<8x128xf32>
    %182 = arith.addf %152, %155 : vector<8x128xf32>
    %cst_88 = arith.constant 5.000000e-01 : f32
    %183 = vector.broadcast %cst_88 : f32 to vector<8x128xf32>
    %184 = arith.mulf %182, %183 : vector<8x128xf32>
    %cst_89 = arith.constant 0.000000e+00 : f32
    %185 = vector.broadcast %cst_89 : f32 to vector<8x128xf32>
    %186 = arith.subf %185, %180 : vector<8x128xf32>
    %187 = arith.mulf %186, %181 : vector<8x128xf32>
    %188 = math.exp %187 : vector<8x128xf32>
    %cst_90 = arith.constant 1.000000e+00 : f32
    %189 = vector.broadcast %cst_90 : f32 to vector<8x128xf32>
    %190 = arith.subf %189, %188 : vector<8x128xf32>
    %191 = arith.mulf %190, %149 : vector<8x128xf32>
    %c1_91 = arith.constant 1 : index
    %192 = arith.index_cast %3 : i32 to index
    %c0_92 = arith.constant 0 : index
    %193 = vector.load %arg6[%c1_91, %192, %c0_92] : memref<8x8x128xf32, #tpu.memory_space<vmem>>, vector<1x8x128xf32>
    %194 = vector.shape_cast %193 : vector<1x8x128xf32> to vector<8x128xf32>
    %195 = vector.shape_cast %191 : vector<8x128xf32> to vector<1x8x128xf32>
    tpu.vector_store %arg6[%c1_91, %192, %c0_92], %195 {strides = array<i32>} : memref<8x8x128xf32, #tpu.memory_space<vmem>>, vector<1x8x128xf32>,
    %c0_93 = arith.constant 0 : index
    %c1_94 = arith.constant 1 : index
    %196 = arith.index_cast %3 : i32 to index
    %c0_95 = arith.constant 0 : index
    %197 = vector.load %arg3[%c0_93, %c1_94, %196, %c0_95] : memref<3x9x8x128xf32, #tpu.memory_space<vmem>>, vector<1x1x8x128xf32>
    %198 = vector.shape_cast %197 : vector<1x1x8x128xf32> to vector<8x128xf32>
    %c0_96 = arith.constant 0 : index
    %c2_97 = arith.constant 2 : index
    %199 = arith.index_cast %3 : i32 to index
    %c0_98 = arith.constant 0 : index
    %200 = vector.load %arg3[%c0_96, %c2_97, %199, %c0_98] : memref<3x9x8x128xf32, #tpu.memory_space<vmem>>, vector<1x1x8x128xf32>
    %201 = vector.shape_cast %200 : vector<1x1x8x128xf32> to vector<8x128xf32>
    %202 = arith.addf %198, %201 : vector<8x128xf32>
    %cst_99 = arith.constant 5.000000e-01 : f32
    %203 = vector.broadcast %cst_99 : f32 to vector<8x128xf32>
    %204 = arith.mulf %202, %203 : vector<8x128xf32>
    %205 = arith.mulf %191, %204 : vector<8x128xf32>
    %206 = arith.addf %73, %205 : vector<8x128xf32>
    %c1_100 = arith.constant 1 : index
    %c1_101 = arith.constant 1 : index
    %207 = arith.index_cast %3 : i32 to index
    %c0_102 = arith.constant 0 : index
    %208 = vector.load %arg3[%c1_100, %c1_101, %207, %c0_102] : memref<3x9x8x128xf32, #tpu.memory_space<vmem>>, vector<1x1x8x128xf32>
    %209 = vector.shape_cast %208 : vector<1x1x8x128xf32> to vector<8x128xf32>
    %c1_103 = arith.constant 1 : index
    %c2_104 = arith.constant 2 : index
    %210 = arith.index_cast %3 : i32 to index
    %c0_105 = arith.constant 0 : index
    %211 = vector.load %arg3[%c1_103, %c2_104, %210, %c0_105] : memref<3x9x8x128xf32, #tpu.memory_space<vmem>>, vector<1x1x8x128xf32>
    %212 = vector.shape_cast %211 : vector<1x1x8x128xf32> to vector<8x128xf32>
    %213 = arith.addf %209, %212 : vector<8x128xf32>
    %cst_106 = arith.constant 5.000000e-01 : f32
    %214 = vector.broadcast %cst_106 : f32 to vector<8x128xf32>
    %215 = arith.mulf %213, %214 : vector<8x128xf32>
    %216 = arith.mulf %191, %215 : vector<8x128xf32>
    %217 = arith.addf %84, %216 : vector<8x128xf32>
    %c2_107 = arith.constant 2 : index
    %c1_108 = arith.constant 1 : index
    %218 = arith.index_cast %3 : i32 to index
    %c0_109 = arith.constant 0 : index
    %219 = vector.load %arg3[%c2_107, %c1_108, %218, %c0_109] : memref<3x9x8x128xf32, #tpu.memory_space<vmem>>, vector<1x1x8x128xf32>
    %220 = vector.shape_cast %219 : vector<1x1x8x128xf32> to vector<8x128xf32>
    %c2_110 = arith.constant 2 : index
    %c2_111 = arith.constant 2 : index
    %221 = arith.index_cast %3 : i32 to index
    %c0_112 = arith.constant 0 : index
    %222 = vector.load %arg3[%c2_110, %c2_111, %221, %c0_112] : memref<3x9x8x128xf32, #tpu.memory_space<vmem>>, vector<1x1x8x128xf32>
    %223 = vector.shape_cast %222 : vector<1x1x8x128xf32> to vector<8x128xf32>
    %224 = arith.addf %220, %223 : vector<8x128xf32>
    %cst_113 = arith.constant 5.000000e-01 : f32
    %225 = vector.broadcast %cst_113 : f32 to vector<8x128xf32>
    %226 = arith.mulf %224, %225 : vector<8x128xf32>
    %227 = arith.mulf %191, %226 : vector<8x128xf32>
    %228 = arith.addf %95, %227 : vector<8x128xf32>
    %c0_114 = arith.constant 0 : index
    %c1_115 = arith.constant 1 : index
    %229 = arith.index_cast %3 : i32 to index
    %c0_116 = arith.constant 0 : index
    %230 = vector.load %arg4[%c0_114, %c1_115, %229, %c0_116] : memref<4x9x8x128xf32, #tpu.memory_space<vmem>>, vector<1x1x8x128xf32>
    %231 = vector.shape_cast %230 : vector<1x1x8x128xf32> to vector<8x128xf32>
    %c0_117 = arith.constant 0 : index
    %c2_118 = arith.constant 2 : index
    %232 = arith.index_cast %3 : i32 to index
    %c0_119 = arith.constant 0 : index
    %233 = vector.load %arg4[%c0_117, %c2_118, %232, %c0_119] : memref<4x9x8x128xf32, #tpu.memory_space<vmem>>, vector<1x1x8x128xf32>
    %234 = vector.shape_cast %233 : vector<1x1x8x128xf32> to vector<8x128xf32>
    %235 = arith.addf %231, %234 : vector<8x128xf32>
    %cst_120 = arith.constant 5.000000e-01 : f32
    %236 = vector.broadcast %cst_120 : f32 to vector<8x128xf32>
    %237 = arith.mulf %235, %236 : vector<8x128xf32>
    %238 = arith.mulf %191, %237 : vector<8x128xf32>
    %239 = arith.addf %106, %238 : vector<8x128xf32>
    %c1_121 = arith.constant 1 : index
    %c1_122 = arith.constant 1 : index
    %240 = arith.index_cast %3 : i32 to index
    %c0_123 = arith.constant 0 : index
    %241 = vector.load %arg4[%c1_121, %c1_122, %240, %c0_123] : memref<4x9x8x128xf32, #tpu.memory_space<vmem>>, vector<1x1x8x128xf32>
    %242 = vector.shape_cast %241 : vector<1x1x8x128xf32> to vector<8x128xf32>
    %c1_124 = arith.constant 1 : index
    %c2_125 = arith.constant 2 : index
    %243 = arith.index_cast %3 : i32 to index
    %c0_126 = arith.constant 0 : index
    %244 = vector.load %arg4[%c1_124, %c2_125, %243, %c0_126] : memref<4x9x8x128xf32, #tpu.memory_space<vmem>>, vector<1x1x8x128xf32>
    %245 = vector.shape_cast %244 : vector<1x1x8x128xf32> to vector<8x128xf32>
    %246 = arith.addf %242, %245 : vector<8x128xf32>
    %cst_127 = arith.constant 5.000000e-01 : f32
    %247 = vector.broadcast %cst_127 : f32 to vector<8x128xf32>
    %248 = arith.mulf %246, %247 : vector<8x128xf32>
    %249 = arith.mulf %191, %248 : vector<8x128xf32>
    %250 = arith.addf %117, %249 : vector<8x128xf32>
    %c2_128 = arith.constant 2 : index
    %c1_129 = arith.constant 1 : index
    %251 = arith.index_cast %3 : i32 to index
    %c0_130 = arith.constant 0 : index
    %252 = vector.load %arg4[%c2_128, %c1_129, %251, %c0_130] : memref<4x9x8x128xf32, #tpu.memory_space<vmem>>, vector<1x1x8x128xf32>
    %253 = vector.shape_cast %252 : vector<1x1x8x128xf32> to vector<8x128xf32>
    %c2_131 = arith.constant 2 : index
    %c2_132 = arith.constant 2 : index
    %254 = arith.index_cast %3 : i32 to index
    %c0_133 = arith.constant 0 : index
    %255 = vector.load %arg4[%c2_131, %c2_132, %254, %c0_133] : memref<4x9x8x128xf32, #tpu.memory_space<vmem>>, vector<1x1x8x128xf32>
    %256 = vector.shape_cast %255 : vector<1x1x8x128xf32> to vector<8x128xf32>
    %257 = arith.addf %253, %256 : vector<8x128xf32>
    %cst_134 = arith.constant 5.000000e-01 : f32
    %258 = vector.broadcast %cst_134 : f32 to vector<8x128xf32>
    %259 = arith.mulf %257, %258 : vector<8x128xf32>
    %260 = arith.mulf %191, %259 : vector<8x128xf32>
    %261 = arith.addf %128, %260 : vector<8x128xf32>
    %c3_135 = arith.constant 3 : index
    %c1_136 = arith.constant 1 : index
    %262 = arith.index_cast %3 : i32 to index
    %c0_137 = arith.constant 0 : index
    %263 = vector.load %arg4[%c3_135, %c1_136, %262, %c0_137] : memref<4x9x8x128xf32, #tpu.memory_space<vmem>>, vector<1x1x8x128xf32>
    %264 = vector.shape_cast %263 : vector<1x1x8x128xf32> to vector<8x128xf32>
    %c3_138 = arith.constant 3 : index
    %c2_139 = arith.constant 2 : index
    %265 = arith.index_cast %3 : i32 to index
    %c0_140 = arith.constant 0 : index
    %266 = vector.load %arg4[%c3_138, %c2_139, %265, %c0_140] : memref<4x9x8x128xf32, #tpu.memory_space<vmem>>, vector<1x1x8x128xf32>
    %267 = vector.shape_cast %266 : vector<1x1x8x128xf32> to vector<8x128xf32>
    %268 = arith.addf %264, %267 : vector<8x128xf32>
    %cst_141 = arith.constant 5.000000e-01 : f32
    %269 = vector.broadcast %cst_141 : f32 to vector<8x128xf32>
    %270 = arith.mulf %268, %269 : vector<8x128xf32>
    %271 = arith.mulf %191, %270 : vector<8x128xf32>
    %272 = arith.addf %139, %271 : vector<8x128xf32>
    %273 = arith.addf %140, %191 : vector<8x128xf32>
    %274 = arith.mulf %191, %184 : vector<8x128xf32>
    %275 = arith.addf %142, %274 : vector<8x128xf32>
    %276 = arith.minimumf %143, %155 : vector<8x128xf32>
    %277 = arith.maximumf %144, %155 : vector<8x128xf32>
    %cst_142 = arith.constant 1.000000e+00 : f32
    %278 = vector.broadcast %cst_142 : f32 to vector<8x128xf32>
    %279 = arith.subf %278, %190 : vector<8x128xf32>
    %cst_143 = arith.constant 1.000000e-10 : f32
    %280 = vector.broadcast %cst_143 : f32 to vector<8x128xf32>
    %281 = arith.addf %279, %280 : vector<8x128xf32>
    %282 = arith.mulf %149, %281 : vector<8x128xf32>
    %c2_144 = arith.constant 2 : index
    %283 = arith.index_cast %3 : i32 to index
    %c0_145 = arith.constant 0 : index
    %284 = vector.load %arg1[%c2_144, %283, %c0_145] : memref<9x8x128xf32, #tpu.memory_space<vmem>>, vector<1x8x128xf32>
    %285 = vector.shape_cast %284 : vector<1x8x128xf32> to vector<8x128xf32>
    %c3_146 = arith.constant 3 : index
    %286 = arith.index_cast %3 : i32 to index
    %c0_147 = arith.constant 0 : index
    %287 = vector.load %arg1[%c3_146, %286, %c0_147] : memref<9x8x128xf32, #tpu.memory_space<vmem>>, vector<1x8x128xf32>
    %288 = vector.shape_cast %287 : vector<1x8x128xf32> to vector<8x128xf32>
    %c2_148 = arith.constant 2 : index
    %289 = arith.index_cast %3 : i32 to index
    %c0_149 = arith.constant 0 : index
    %290 = vector.load %arg2[%c2_148, %289, %c0_149] : memref<9x8x128xf32, #tpu.memory_space<vmem>>, vector<1x8x128xf32>
    %291 = vector.shape_cast %290 : vector<1x8x128xf32> to vector<8x128xf32>
    %c3_150 = arith.constant 3 : index
    %292 = arith.index_cast %3 : i32 to index
    %c0_151 = arith.constant 0 : index
    %293 = vector.load %arg2[%c3_150, %292, %c0_151] : memref<9x8x128xf32, #tpu.memory_space<vmem>>, vector<1x8x128xf32>
    %294 = vector.shape_cast %293 : vector<1x8x128xf32> to vector<8x128xf32>
    %295 = arith.addf %291, %294 : vector<8x128xf32>
    %cst_152 = arith.constant 5.000000e-01 : f32
    %296 = vector.broadcast %cst_152 : f32 to vector<8x128xf32>
    %297 = arith.mulf %295, %296 : vector<8x128xf32>
    %cst_153 = arith.constant 1.000000e+00 : f32
    %298 = vector.broadcast %cst_153 : f32 to vector<8x128xf32>
    %299 = arith.subf %297, %298 : vector<8x128xf32>
    %cst_154 = arith.constant 0.000000e+00 : f32
    %300 = vector.broadcast %cst_154 : f32 to vector<8x128xf32>
    %301 = arith.maximumf %299, %300 : vector<8x128xf32>
    %302 = vector.broadcast %cst_154 : f32 to vector<8x128xf32>
    %303 = arith.subf %299, %302 : vector<8x128xf32>
    %304 = arith.cmpf one, %303, %303 : vector<8x128xf32>
    %305 = vector.broadcast %cst_154 : f32 to vector<8x128xf32>
    %306 = arith.addf %299, %305 : vector<8x128xf32>
    %307 = math.absf %303 : vector<8x128xf32>
    %cst_155 = arith.constant 0.000000e+00 : f32
    %308 = vector.broadcast %cst_155 : f32 to vector<8x128xf32>
    %309 = arith.subf %308, %307 : vector<8x128xf32>
    %310 = math.exp %309 : vector<8x128xf32>
    %311 = math.log1p %310 : vector<8x128xf32>
    %312 = arith.addf %301, %311 : vector<8x128xf32>
    %313 = arith.select %304, %306, %312 : vector<8x128xi1>, vector<8x128xf32>
    %314 = arith.subf %288, %285 : vector<8x128xf32>
    %315 = arith.addf %285, %288 : vector<8x128xf32>
    %cst_156 = arith.constant 5.000000e-01 : f32
    %316 = vector.broadcast %cst_156 : f32 to vector<8x128xf32>
    %317 = arith.mulf %315, %316 : vector<8x128xf32>
    %cst_157 = arith.constant 0.000000e+00 : f32
    %318 = vector.broadcast %cst_157 : f32 to vector<8x128xf32>
    %319 = arith.subf %318, %313 : vector<8x128xf32>
    %320 = arith.mulf %319, %314 : vector<8x128xf32>
    %321 = math.exp %320 : vector<8x128xf32>
    %cst_158 = arith.constant 1.000000e+00 : f32
    %322 = vector.broadcast %cst_158 : f32 to vector<8x128xf32>
    %323 = arith.subf %322, %321 : vector<8x128xf32>
    %324 = arith.mulf %323, %282 : vector<8x128xf32>
    %c2_159 = arith.constant 2 : index
    %325 = arith.index_cast %3 : i32 to index
    %c0_160 = arith.constant 0 : index
    %326 = vector.load %arg6[%c2_159, %325, %c0_160] : memref<8x8x128xf32, #tpu.memory_space<vmem>>, vector<1x8x128xf32>
    %327 = vector.shape_cast %326 : vector<1x8x128xf32> to vector<8x128xf32>
    %328 = vector.shape_cast %324 : vector<8x128xf32> to vector<1x8x128xf32>
    tpu.vector_store %arg6[%c2_159, %325, %c0_160], %328 {strides = array<i32>} : memref<8x8x128xf32, #tpu.memory_space<vmem>>, vector<1x8x128xf32>,
    %c0_161 = arith.constant 0 : index
    %c2_162 = arith.constant 2 : index
    %329 = arith.index_cast %3 : i32 to index
    %c0_163 = arith.constant 0 : index
    %330 = vector.load %arg3[%c0_161, %c2_162, %329, %c0_163] : memref<3x9x8x128xf32, #tpu.memory_space<vmem>>, vector<1x1x8x128xf32>
    %331 = vector.shape_cast %330 : vector<1x1x8x128xf32> to vector<8x128xf32>
    %c0_164 = arith.constant 0 : index
    %c3_165 = arith.constant 3 : index
    %332 = arith.index_cast %3 : i32 to index
    %c0_166 = arith.constant 0 : index
    %333 = vector.load %arg3[%c0_164, %c3_165, %332, %c0_166] : memref<3x9x8x128xf32, #tpu.memory_space<vmem>>, vector<1x1x8x128xf32>
    %334 = vector.shape_cast %333 : vector<1x1x8x128xf32> to vector<8x128xf32>
    %335 = arith.addf %331, %334 : vector<8x128xf32>
    %cst_167 = arith.constant 5.000000e-01 : f32
    %336 = vector.broadcast %cst_167 : f32 to vector<8x128xf32>
    %337 = arith.mulf %335, %336 : vector<8x128xf32>
    %338 = arith.mulf %324, %337 : vector<8x128xf32>
    %339 = arith.addf %206, %338 : vector<8x128xf32>
    %c1_168 = arith.constant 1 : index
    %c2_169 = arith.constant 2 : index
    %340 = arith.index_cast %3 : i32 to index
    %c0_170 = arith.constant 0 : index
    %341 = vector.load %arg3[%c1_168, %c2_169, %340, %c0_170] : memref<3x9x8x128xf32, #tpu.memory_space<vmem>>, vector<1x1x8x128xf32>
    %342 = vector.shape_cast %341 : vector<1x1x8x128xf32> to vector<8x128xf32>
    %c1_171 = arith.constant 1 : index
    %c3_172 = arith.constant 3 : index
    %343 = arith.index_cast %3 : i32 to index
    %c0_173 = arith.constant 0 : index
    %344 = vector.load %arg3[%c1_171, %c3_172, %343, %c0_173] : memref<3x9x8x128xf32, #tpu.memory_space<vmem>>, vector<1x1x8x128xf32>
    %345 = vector.shape_cast %344 : vector<1x1x8x128xf32> to vector<8x128xf32>
    %346 = arith.addf %342, %345 : vector<8x128xf32>
    %cst_174 = arith.constant 5.000000e-01 : f32
    %347 = vector.broadcast %cst_174 : f32 to vector<8x128xf32>
    %348 = arith.mulf %346, %347 : vector<8x128xf32>
    %349 = arith.mulf %324, %348 : vector<8x128xf32>
    %350 = arith.addf %217, %349 : vector<8x128xf32>
    %c2_175 = arith.constant 2 : index
    %c2_176 = arith.constant 2 : index
    %351 = arith.index_cast %3 : i32 to index
    %c0_177 = arith.constant 0 : index
    %352 = vector.load %arg3[%c2_175, %c2_176, %351, %c0_177] : memref<3x9x8x128xf32, #tpu.memory_space<vmem>>, vector<1x1x8x128xf32>
    %353 = vector.shape_cast %352 : vector<1x1x8x128xf32> to vector<8x128xf32>
    %c2_178 = arith.constant 2 : index
    %c3_179 = arith.constant 3 : index
    %354 = arith.index_cast %3 : i32 to index
    %c0_180 = arith.constant 0 : index
    %355 = vector.load %arg3[%c2_178, %c3_179, %354, %c0_180] : memref<3x9x8x128xf32, #tpu.memory_space<vmem>>, vector<1x1x8x128xf32>
    %356 = vector.shape_cast %355 : vector<1x1x8x128xf32> to vector<8x128xf32>
    %357 = arith.addf %353, %356 : vector<8x128xf32>
    %cst_181 = arith.constant 5.000000e-01 : f32
    %358 = vector.broadcast %cst_181 : f32 to vector<8x128xf32>
    %359 = arith.mulf %357, %358 : vector<8x128xf32>
    %360 = arith.mulf %324, %359 : vector<8x128xf32>
    %361 = arith.addf %228, %360 : vector<8x128xf32>
    %c0_182 = arith.constant 0 : index
    %c2_183 = arith.constant 2 : index
    %362 = arith.index_cast %3 : i32 to index
    %c0_184 = arith.constant 0 : index
    %363 = vector.load %arg4[%c0_182, %c2_183, %362, %c0_184] : memref<4x9x8x128xf32, #tpu.memory_space<vmem>>, vector<1x1x8x128xf32>
    %364 = vector.shape_cast %363 : vector<1x1x8x128xf32> to vector<8x128xf32>
    %c0_185 = arith.constant 0 : index
    %c3_186 = arith.constant 3 : index
    %365 = arith.index_cast %3 : i32 to index
    %c0_187 = arith.constant 0 : index
    %366 = vector.load %arg4[%c0_185, %c3_186, %365, %c0_187] : memref<4x9x8x128xf32, #tpu.memory_space<vmem>>, vector<1x1x8x128xf32>
    %367 = vector.shape_cast %366 : vector<1x1x8x128xf32> to vector<8x128xf32>
    %368 = arith.addf %364, %367 : vector<8x128xf32>
    %cst_188 = arith.constant 5.000000e-01 : f32
    %369 = vector.broadcast %cst_188 : f32 to vector<8x128xf32>
    %370 = arith.mulf %368, %369 : vector<8x128xf32>
    %371 = arith.mulf %324, %370 : vector<8x128xf32>
    %372 = arith.addf %239, %371 : vector<8x128xf32>
    %c1_189 = arith.constant 1 : index
    %c2_190 = arith.constant 2 : index
    %373 = arith.index_cast %3 : i32 to index
    %c0_191 = arith.constant 0 : index
    %374 = vector.load %arg4[%c1_189, %c2_190, %373, %c0_191] : memref<4x9x8x128xf32, #tpu.memory_space<vmem>>, vector<1x1x8x128xf32>
    %375 = vector.shape_cast %374 : vector<1x1x8x128xf32> to vector<8x128xf32>
    %c1_192 = arith.constant 1 : index
    %c3_193 = arith.constant 3 : index
    %376 = arith.index_cast %3 : i32 to index
    %c0_194 = arith.constant 0 : index
    %377 = vector.load %arg4[%c1_192, %c3_193, %376, %c0_194] : memref<4x9x8x128xf32, #tpu.memory_space<vmem>>, vector<1x1x8x128xf32>
    %378 = vector.shape_cast %377 : vector<1x1x8x128xf32> to vector<8x128xf32>
    %379 = arith.addf %375, %378 : vector<8x128xf32>
    %cst_195 = arith.constant 5.000000e-01 : f32
    %380 = vector.broadcast %cst_195 : f32 to vector<8x128xf32>
    %381 = arith.mulf %379, %380 : vector<8x128xf32>
    %382 = arith.mulf %324, %381 : vector<8x128xf32>
    %383 = arith.addf %250, %382 : vector<8x128xf32>
    %c2_196 = arith.constant 2 : index
    %c2_197 = arith.constant 2 : index
    %384 = arith.index_cast %3 : i32 to index
    %c0_198 = arith.constant 0 : index
    %385 = vector.load %arg4[%c2_196, %c2_197, %384, %c0_198] : memref<4x9x8x128xf32, #tpu.memory_space<vmem>>, vector<1x1x8x128xf32>
    %386 = vector.shape_cast %385 : vector<1x1x8x128xf32> to vector<8x128xf32>
    %c2_199 = arith.constant 2 : index
    %c3_200 = arith.constant 3 : index
    %387 = arith.index_cast %3 : i32 to index
    %c0_201 = arith.constant 0 : index
    %388 = vector.load %arg4[%c2_199, %c3_200, %387, %c0_201] : memref<4x9x8x128xf32, #tpu.memory_space<vmem>>, vector<1x1x8x128xf32>
    %389 = vector.shape_cast %388 : vector<1x1x8x128xf32> to vector<8x128xf32>
    %390 = arith.addf %386, %389 : vector<8x128xf32>
    %cst_202 = arith.constant 5.000000e-01 : f32
    %391 = vector.broadcast %cst_202 : f32 to vector<8x128xf32>
    %392 = arith.mulf %390, %391 : vector<8x128xf32>
    %393 = arith.mulf %324, %392 : vector<8x128xf32>
    %394 = arith.addf %261, %393 : vector<8x128xf32>
    %c3_203 = arith.constant 3 : index
    %c2_204 = arith.constant 2 : index
    %395 = arith.index_cast %3 : i32 to index
    %c0_205 = arith.constant 0 : index
    %396 = vector.load %arg4[%c3_203, %c2_204, %395, %c0_205] : memref<4x9x8x128xf32, #tpu.memory_space<vmem>>, vector<1x1x8x128xf32>
    %397 = vector.shape_cast %396 : vector<1x1x8x128xf32> to vector<8x128xf32>
    %c3_206 = arith.constant 3 : index
    %c3_207 = arith.constant 3 : index
    %398 = arith.index_cast %3 : i32 to index
    %c0_208 = arith.constant 0 : index
    %399 = vector.load %arg4[%c3_206, %c3_207, %398, %c0_208] : memref<4x9x8x128xf32, #tpu.memory_space<vmem>>, vector<1x1x8x128xf32>
    %400 = vector.shape_cast %399 : vector<1x1x8x128xf32> to vector<8x128xf32>
    %401 = arith.addf %397, %400 : vector<8x128xf32>
    %cst_209 = arith.constant 5.000000e-01 : f32
    %402 = vector.broadcast %cst_209 : f32 to vector<8x128xf32>
    %403 = arith.mulf %401, %402 : vector<8x128xf32>
    %404 = arith.mulf %324, %403 : vector<8x128xf32>
    %405 = arith.addf %272, %404 : vector<8x128xf32>
    %406 = arith.addf %273, %324 : vector<8x128xf32>
    %407 = arith.mulf %324, %317 : vector<8x128xf32>
    %408 = arith.addf %275, %407 : vector<8x128xf32>
    %409 = arith.minimumf %276, %288 : vector<8x128xf32>
    %410 = arith.maximumf %277, %288 : vector<8x128xf32>
    %cst_210 = arith.constant 1.000000e+00 : f32
    %411 = vector.broadcast %cst_210 : f32 to vector<8x128xf32>
    %412 = arith.subf %411, %323 : vector<8x128xf32>
    %cst_211 = arith.constant 1.000000e-10 : f32
    %413 = vector.broadcast %cst_211 : f32 to vector<8x128xf32>
    %414 = arith.addf %412, %413 : vector<8x128xf32>
    %415 = arith.mulf %282, %414 : vector<8x128xf32>
    %c3_212 = arith.constant 3 : index
    %416 = arith.index_cast %3 : i32 to index
    %c0_213 = arith.constant 0 : index
    %417 = vector.load %arg1[%c3_212, %416, %c0_213] : memref<9x8x128xf32, #tpu.memory_space<vmem>>, vector<1x8x128xf32>
    %418 = vector.shape_cast %417 : vector<1x8x128xf32> to vector<8x128xf32>
    %c4 = arith.constant 4 : index
    %419 = arith.index_cast %3 : i32 to index
    %c0_214 = arith.constant 0 : index
    %420 = vector.load %arg1[%c4, %419, %c0_214] : memref<9x8x128xf32, #tpu.memory_space<vmem>>, vector<1x8x128xf32>
    %421 = vector.shape_cast %420 : vector<1x8x128xf32> to vector<8x128xf32>
    %c3_215 = arith.constant 3 : index
    %422 = arith.index_cast %3 : i32 to index
    %c0_216 = arith.constant 0 : index
    %423 = vector.load %arg2[%c3_215, %422, %c0_216] : memref<9x8x128xf32, #tpu.memory_space<vmem>>, vector<1x8x128xf32>
    %424 = vector.shape_cast %423 : vector<1x8x128xf32> to vector<8x128xf32>
    %c4_217 = arith.constant 4 : index
    %425 = arith.index_cast %3 : i32 to index
    %c0_218 = arith.constant 0 : index
    %426 = vector.load %arg2[%c4_217, %425, %c0_218] : memref<9x8x128xf32, #tpu.memory_space<vmem>>, vector<1x8x128xf32>
    %427 = vector.shape_cast %426 : vector<1x8x128xf32> to vector<8x128xf32>
    %428 = arith.addf %424, %427 : vector<8x128xf32>
    %cst_219 = arith.constant 5.000000e-01 : f32
    %429 = vector.broadcast %cst_219 : f32 to vector<8x128xf32>
    %430 = arith.mulf %428, %429 : vector<8x128xf32>
    %cst_220 = arith.constant 1.000000e+00 : f32
    %431 = vector.broadcast %cst_220 : f32 to vector<8x128xf32>
    %432 = arith.subf %430, %431 : vector<8x128xf32>
    %cst_221 = arith.constant 0.000000e+00 : f32
    %433 = vector.broadcast %cst_221 : f32 to vector<8x128xf32>
    %434 = arith.maximumf %432, %433 : vector<8x128xf32>
    %435 = vector.broadcast %cst_221 : f32 to vector<8x128xf32>
    %436 = arith.subf %432, %435 : vector<8x128xf32>
    %437 = arith.cmpf one, %436, %436 : vector<8x128xf32>
    %438 = vector.broadcast %cst_221 : f32 to vector<8x128xf32>
    %439 = arith.addf %432, %438 : vector<8x128xf32>
    %440 = math.absf %436 : vector<8x128xf32>
    %cst_222 = arith.constant 0.000000e+00 : f32
    %441 = vector.broadcast %cst_222 : f32 to vector<8x128xf32>
    %442 = arith.subf %441, %440 : vector<8x128xf32>
    %443 = math.exp %442 : vector<8x128xf32>
    %444 = math.log1p %443 : vector<8x128xf32>
    %445 = arith.addf %434, %444 : vector<8x128xf32>
    %446 = arith.select %437, %439, %445 : vector<8x128xi1>, vector<8x128xf32>
    %447 = arith.subf %421, %418 : vector<8x128xf32>
    %448 = arith.addf %418, %421 : vector<8x128xf32>
    %cst_223 = arith.constant 5.000000e-01 : f32
    %449 = vector.broadcast %cst_223 : f32 to vector<8x128xf32>
    %450 = arith.mulf %448, %449 : vector<8x128xf32>
    %cst_224 = arith.constant 0.000000e+00 : f32
    %451 = vector.broadcast %cst_224 : f32 to vector<8x128xf32>
    %452 = arith.subf %451, %446 : vector<8x128xf32>
    %453 = arith.mulf %452, %447 : vector<8x128xf32>
    %454 = math.exp %453 : vector<8x128xf32>
    %cst_225 = arith.constant 1.000000e+00 : f32
    %455 = vector.broadcast %cst_225 : f32 to vector<8x128xf32>
    %456 = arith.subf %455, %454 : vector<8x128xf32>
    %457 = arith.mulf %456, %415 : vector<8x128xf32>
    %c3_226 = arith.constant 3 : index
    %458 = arith.index_cast %3 : i32 to index
    %c0_227 = arith.constant 0 : index
    %459 = vector.load %arg6[%c3_226, %458, %c0_227] : memref<8x8x128xf32, #tpu.memory_space<vmem>>, vector<1x8x128xf32>
    %460 = vector.shape_cast %459 : vector<1x8x128xf32> to vector<8x128xf32>
    %461 = vector.shape_cast %457 : vector<8x128xf32> to vector<1x8x128xf32>
    tpu.vector_store %arg6[%c3_226, %458, %c0_227], %461 {strides = array<i32>} : memref<8x8x128xf32, #tpu.memory_space<vmem>>, vector<1x8x128xf32>,
    %c0_228 = arith.constant 0 : index
    %c3_229 = arith.constant 3 : index
    %462 = arith.index_cast %3 : i32 to index
    %c0_230 = arith.constant 0 : index
    %463 = vector.load %arg3[%c0_228, %c3_229, %462, %c0_230] : memref<3x9x8x128xf32, #tpu.memory_space<vmem>>, vector<1x1x8x128xf32>
    %464 = vector.shape_cast %463 : vector<1x1x8x128xf32> to vector<8x128xf32>
    %c0_231 = arith.constant 0 : index
    %c4_232 = arith.constant 4 : index
    %465 = arith.index_cast %3 : i32 to index
    %c0_233 = arith.constant 0 : index
    %466 = vector.load %arg3[%c0_231, %c4_232, %465, %c0_233] : memref<3x9x8x128xf32, #tpu.memory_space<vmem>>, vector<1x1x8x128xf32>
    %467 = vector.shape_cast %466 : vector<1x1x8x128xf32> to vector<8x128xf32>
    %468 = arith.addf %464, %467 : vector<8x128xf32>
    %cst_234 = arith.constant 5.000000e-01 : f32
    %469 = vector.broadcast %cst_234 : f32 to vector<8x128xf32>
    %470 = arith.mulf %468, %469 : vector<8x128xf32>
    %471 = arith.mulf %457, %470 : vector<8x128xf32>
    %472 = arith.addf %339, %471 : vector<8x128xf32>
    %c1_235 = arith.constant 1 : index
    %c3_236 = arith.constant 3 : index
    %473 = arith.index_cast %3 : i32 to index
    %c0_237 = arith.constant 0 : index
    %474 = vector.load %arg3[%c1_235, %c3_236, %473, %c0_237] : memref<3x9x8x128xf32, #tpu.memory_space<vmem>>, vector<1x1x8x128xf32>
    %475 = vector.shape_cast %474 : vector<1x1x8x128xf32> to vector<8x128xf32>
    %c1_238 = arith.constant 1 : index
    %c4_239 = arith.constant 4 : index
    %476 = arith.index_cast %3 : i32 to index
    %c0_240 = arith.constant 0 : index
    %477 = vector.load %arg3[%c1_238, %c4_239, %476, %c0_240] : memref<3x9x8x128xf32, #tpu.memory_space<vmem>>, vector<1x1x8x128xf32>
    %478 = vector.shape_cast %477 : vector<1x1x8x128xf32> to vector<8x128xf32>
    %479 = arith.addf %475, %478 : vector<8x128xf32>
    %cst_241 = arith.constant 5.000000e-01 : f32
    %480 = vector.broadcast %cst_241 : f32 to vector<8x128xf32>
    %481 = arith.mulf %479, %480 : vector<8x128xf32>
    %482 = arith.mulf %457, %481 : vector<8x128xf32>
    %483 = arith.addf %350, %482 : vector<8x128xf32>
    %c2_242 = arith.constant 2 : index
    %c3_243 = arith.constant 3 : index
    %484 = arith.index_cast %3 : i32 to index
    %c0_244 = arith.constant 0 : index
    %485 = vector.load %arg3[%c2_242, %c3_243, %484, %c0_244] : memref<3x9x8x128xf32, #tpu.memory_space<vmem>>, vector<1x1x8x128xf32>
    %486 = vector.shape_cast %485 : vector<1x1x8x128xf32> to vector<8x128xf32>
    %c2_245 = arith.constant 2 : index
    %c4_246 = arith.constant 4 : index
    %487 = arith.index_cast %3 : i32 to index
    %c0_247 = arith.constant 0 : index
    %488 = vector.load %arg3[%c2_245, %c4_246, %487, %c0_247] : memref<3x9x8x128xf32, #tpu.memory_space<vmem>>, vector<1x1x8x128xf32>
    %489 = vector.shape_cast %488 : vector<1x1x8x128xf32> to vector<8x128xf32>
    %490 = arith.addf %486, %489 : vector<8x128xf32>
    %cst_248 = arith.constant 5.000000e-01 : f32
    %491 = vector.broadcast %cst_248 : f32 to vector<8x128xf32>
    %492 = arith.mulf %490, %491 : vector<8x128xf32>
    %493 = arith.mulf %457, %492 : vector<8x128xf32>
    %494 = arith.addf %361, %493 : vector<8x128xf32>
    %c0_249 = arith.constant 0 : index
    %c3_250 = arith.constant 3 : index
    %495 = arith.index_cast %3 : i32 to index
    %c0_251 = arith.constant 0 : index
    %496 = vector.load %arg4[%c0_249, %c3_250, %495, %c0_251] : memref<4x9x8x128xf32, #tpu.memory_space<vmem>>, vector<1x1x8x128xf32>
    %497 = vector.shape_cast %496 : vector<1x1x8x128xf32> to vector<8x128xf32>
    %c0_252 = arith.constant 0 : index
    %c4_253 = arith.constant 4 : index
    %498 = arith.index_cast %3 : i32 to index
    %c0_254 = arith.constant 0 : index
    %499 = vector.load %arg4[%c0_252, %c4_253, %498, %c0_254] : memref<4x9x8x128xf32, #tpu.memory_space<vmem>>, vector<1x1x8x128xf32>
    %500 = vector.shape_cast %499 : vector<1x1x8x128xf32> to vector<8x128xf32>
    %501 = arith.addf %497, %500 : vector<8x128xf32>
    %cst_255 = arith.constant 5.000000e-01 : f32
    %502 = vector.broadcast %cst_255 : f32 to vector<8x128xf32>
    %503 = arith.mulf %501, %502 : vector<8x128xf32>
    %504 = arith.mulf %457, %503 : vector<8x128xf32>
    %505 = arith.addf %372, %504 : vector<8x128xf32>
    %c1_256 = arith.constant 1 : index
    %c3_257 = arith.constant 3 : index
    %506 = arith.index_cast %3 : i32 to index
    %c0_258 = arith.constant 0 : index
    %507 = vector.load %arg4[%c1_256, %c3_257, %506, %c0_258] : memref<4x9x8x128xf32, #tpu.memory_space<vmem>>, vector<1x1x8x128xf32>
    %508 = vector.shape_cast %507 : vector<1x1x8x128xf32> to vector<8x128xf32>
    %c1_259 = arith.constant 1 : index
    %c4_260 = arith.constant 4 : index
    %509 = arith.index_cast %3 : i32 to index
    %c0_261 = arith.constant 0 : index
    %510 = vector.load %arg4[%c1_259, %c4_260, %509, %c0_261] : memref<4x9x8x128xf32, #tpu.memory_space<vmem>>, vector<1x1x8x128xf32>
    %511 = vector.shape_cast %510 : vector<1x1x8x128xf32> to vector<8x128xf32>
    %512 = arith.addf %508, %511 : vector<8x128xf32>
    %cst_262 = arith.constant 5.000000e-01 : f32
    %513 = vector.broadcast %cst_262 : f32 to vector<8x128xf32>
    %514 = arith.mulf %512, %513 : vector<8x128xf32>
    %515 = arith.mulf %457, %514 : vector<8x128xf32>
    %516 = arith.addf %383, %515 : vector<8x128xf32>
    %c2_263 = arith.constant 2 : index
    %c3_264 = arith.constant 3 : index
    %517 = arith.index_cast %3 : i32 to index
    %c0_265 = arith.constant 0 : index
    %518 = vector.load %arg4[%c2_263, %c3_264, %517, %c0_265] : memref<4x9x8x128xf32, #tpu.memory_space<vmem>>, vector<1x1x8x128xf32>
    %519 = vector.shape_cast %518 : vector<1x1x8x128xf32> to vector<8x128xf32>
    %c2_266 = arith.constant 2 : index
    %c4_267 = arith.constant 4 : index
    %520 = arith.index_cast %3 : i32 to index
    %c0_268 = arith.constant 0 : index
    %521 = vector.load %arg4[%c2_266, %c4_267, %520, %c0_268] : memref<4x9x8x128xf32, #tpu.memory_space<vmem>>, vector<1x1x8x128xf32>
    %522 = vector.shape_cast %521 : vector<1x1x8x128xf32> to vector<8x128xf32>
    %523 = arith.addf %519, %522 : vector<8x128xf32>
    %cst_269 = arith.constant 5.000000e-01 : f32
    %524 = vector.broadcast %cst_269 : f32 to vector<8x128xf32>
    %525 = arith.mulf %523, %524 : vector<8x128xf32>
    %526 = arith.mulf %457, %525 : vector<8x128xf32>
    %527 = arith.addf %394, %526 : vector<8x128xf32>
    %c3_270 = arith.constant 3 : index
    %c3_271 = arith.constant 3 : index
    %528 = arith.index_cast %3 : i32 to index
    %c0_272 = arith.constant 0 : index
    %529 = vector.load %arg4[%c3_270, %c3_271, %528, %c0_272] : memref<4x9x8x128xf32, #tpu.memory_space<vmem>>, vector<1x1x8x128xf32>
    %530 = vector.shape_cast %529 : vector<1x1x8x128xf32> to vector<8x128xf32>
    %c3_273 = arith.constant 3 : index
    %c4_274 = arith.constant 4 : index
    %531 = arith.index_cast %3 : i32 to index
    %c0_275 = arith.constant 0 : index
    %532 = vector.load %arg4[%c3_273, %c4_274, %531, %c0_275] : memref<4x9x8x128xf32, #tpu.memory_space<vmem>>, vector<1x1x8x128xf32>
    %533 = vector.shape_cast %532 : vector<1x1x8x128xf32> to vector<8x128xf32>
    %534 = arith.addf %530, %533 : vector<8x128xf32>
    %cst_276 = arith.constant 5.000000e-01 : f32
    %535 = vector.broadcast %cst_276 : f32 to vector<8x128xf32>
    %536 = arith.mulf %534, %535 : vector<8x128xf32>
    %537 = arith.mulf %457, %536 : vector<8x128xf32>
    %538 = arith.addf %405, %537 : vector<8x128xf32>
    %539 = arith.addf %406, %457 : vector<8x128xf32>
    %540 = arith.mulf %457, %450 : vector<8x128xf32>
    %541 = arith.addf %408, %540 : vector<8x128xf32>
    %542 = arith.minimumf %409, %421 : vector<8x128xf32>
    %543 = arith.maximumf %410, %421 : vector<8x128xf32>
    %cst_277 = arith.constant 1.000000e+00 : f32
    %544 = vector.broadcast %cst_277 : f32 to vector<8x128xf32>
    %545 = arith.subf %544, %456 : vector<8x128xf32>
    %cst_278 = arith.constant 1.000000e-10 : f32
    %546 = vector.broadcast %cst_278 : f32 to vector<8x128xf32>
    %547 = arith.addf %545, %546 : vector<8x128xf32>
    %548 = arith.mulf %415, %547 : vector<8x128xf32>
    %c4_279 = arith.constant 4 : index
    %549 = arith.index_cast %3 : i32 to index
    %c0_280 = arith.constant 0 : index
    %550 = vector.load %arg1[%c4_279, %549, %c0_280] : memref<9x8x128xf32, #tpu.memory_space<vmem>>, vector<1x8x128xf32>
    %551 = vector.shape_cast %550 : vector<1x8x128xf32> to vector<8x128xf32>
    %c5 = arith.constant 5 : index
    %552 = arith.index_cast %3 : i32 to index
    %c0_281 = arith.constant 0 : index
    %553 = vector.load %arg1[%c5, %552, %c0_281] : memref<9x8x128xf32, #tpu.memory_space<vmem>>, vector<1x8x128xf32>
    %554 = vector.shape_cast %553 : vector<1x8x128xf32> to vector<8x128xf32>
    %c4_282 = arith.constant 4 : index
    %555 = arith.index_cast %3 : i32 to index
    %c0_283 = arith.constant 0 : index
    %556 = vector.load %arg2[%c4_282, %555, %c0_283] : memref<9x8x128xf32, #tpu.memory_space<vmem>>, vector<1x8x128xf32>
    %557 = vector.shape_cast %556 : vector<1x8x128xf32> to vector<8x128xf32>
    %c5_284 = arith.constant 5 : index
    %558 = arith.index_cast %3 : i32 to index
    %c0_285 = arith.constant 0 : index
    %559 = vector.load %arg2[%c5_284, %558, %c0_285] : memref<9x8x128xf32, #tpu.memory_space<vmem>>, vector<1x8x128xf32>
    %560 = vector.shape_cast %559 : vector<1x8x128xf32> to vector<8x128xf32>
    %561 = arith.addf %557, %560 : vector<8x128xf32>
    %cst_286 = arith.constant 5.000000e-01 : f32
    %562 = vector.broadcast %cst_286 : f32 to vector<8x128xf32>
    %563 = arith.mulf %561, %562 : vector<8x128xf32>
    %cst_287 = arith.constant 1.000000e+00 : f32
    %564 = vector.broadcast %cst_287 : f32 to vector<8x128xf32>
    %565 = arith.subf %563, %564 : vector<8x128xf32>
    %cst_288 = arith.constant 0.000000e+00 : f32
    %566 = vector.broadcast %cst_288 : f32 to vector<8x128xf32>
    %567 = arith.maximumf %565, %566 : vector<8x128xf32>
    %568 = vector.broadcast %cst_288 : f32 to vector<8x128xf32>
    %569 = arith.subf %565, %568 : vector<8x128xf32>
    %570 = arith.cmpf one, %569, %569 : vector<8x128xf32>
    %571 = vector.broadcast %cst_288 : f32 to vector<8x128xf32>
    %572 = arith.addf %565, %571 : vector<8x128xf32>
    %573 = math.absf %569 : vector<8x128xf32>
    %cst_289 = arith.constant 0.000000e+00 : f32
    %574 = vector.broadcast %cst_289 : f32 to vector<8x128xf32>
    %575 = arith.subf %574, %573 : vector<8x128xf32>
    %576 = math.exp %575 : vector<8x128xf32>
    %577 = math.log1p %576 : vector<8x128xf32>
    %578 = arith.addf %567, %577 : vector<8x128xf32>
    %579 = arith.select %570, %572, %578 : vector<8x128xi1>, vector<8x128xf32>
    %580 = arith.subf %554, %551 : vector<8x128xf32>
    %581 = arith.addf %551, %554 : vector<8x128xf32>
    %cst_290 = arith.constant 5.000000e-01 : f32
    %582 = vector.broadcast %cst_290 : f32 to vector<8x128xf32>
    %583 = arith.mulf %581, %582 : vector<8x128xf32>
    %cst_291 = arith.constant 0.000000e+00 : f32
    %584 = vector.broadcast %cst_291 : f32 to vector<8x128xf32>
    %585 = arith.subf %584, %579 : vector<8x128xf32>
    %586 = arith.mulf %585, %580 : vector<8x128xf32>
    %587 = math.exp %586 : vector<8x128xf32>
    %cst_292 = arith.constant 1.000000e+00 : f32
    %588 = vector.broadcast %cst_292 : f32 to vector<8x128xf32>
    %589 = arith.subf %588, %587 : vector<8x128xf32>
    %590 = arith.mulf %589, %548 : vector<8x128xf32>
    %c4_293 = arith.constant 4 : index
    %591 = arith.index_cast %3 : i32 to index
    %c0_294 = arith.constant 0 : index
    %592 = vector.load %arg6[%c4_293, %591, %c0_294] : memref<8x8x128xf32, #tpu.memory_space<vmem>>, vector<1x8x128xf32>
    %593 = vector.shape_cast %592 : vector<1x8x128xf32> to vector<8x128xf32>
    %594 = vector.shape_cast %590 : vector<8x128xf32> to vector<1x8x128xf32>
    tpu.vector_store %arg6[%c4_293, %591, %c0_294], %594 {strides = array<i32>} : memref<8x8x128xf32, #tpu.memory_space<vmem>>, vector<1x8x128xf32>,
    %c0_295 = arith.constant 0 : index
    %c4_296 = arith.constant 4 : index
    %595 = arith.index_cast %3 : i32 to index
    %c0_297 = arith.constant 0 : index
    %596 = vector.load %arg3[%c0_295, %c4_296, %595, %c0_297] : memref<3x9x8x128xf32, #tpu.memory_space<vmem>>, vector<1x1x8x128xf32>
    %597 = vector.shape_cast %596 : vector<1x1x8x128xf32> to vector<8x128xf32>
    %c0_298 = arith.constant 0 : index
    %c5_299 = arith.constant 5 : index
    %598 = arith.index_cast %3 : i32 to index
    %c0_300 = arith.constant 0 : index
    %599 = vector.load %arg3[%c0_298, %c5_299, %598, %c0_300] : memref<3x9x8x128xf32, #tpu.memory_space<vmem>>, vector<1x1x8x128xf32>
    %600 = vector.shape_cast %599 : vector<1x1x8x128xf32> to vector<8x128xf32>
    %601 = arith.addf %597, %600 : vector<8x128xf32>
    %cst_301 = arith.constant 5.000000e-01 : f32
    %602 = vector.broadcast %cst_301 : f32 to vector<8x128xf32>
    %603 = arith.mulf %601, %602 : vector<8x128xf32>
    %604 = arith.mulf %590, %603 : vector<8x128xf32>
    %605 = arith.addf %472, %604 : vector<8x128xf32>
    %c1_302 = arith.constant 1 : index
    %c4_303 = arith.constant 4 : index
    %606 = arith.index_cast %3 : i32 to index
    %c0_304 = arith.constant 0 : index
    %607 = vector.load %arg3[%c1_302, %c4_303, %606, %c0_304] : memref<3x9x8x128xf32, #tpu.memory_space<vmem>>, vector<1x1x8x128xf32>
    %608 = vector.shape_cast %607 : vector<1x1x8x128xf32> to vector<8x128xf32>
    %c1_305 = arith.constant 1 : index
    %c5_306 = arith.constant 5 : index
    %609 = arith.index_cast %3 : i32 to index
    %c0_307 = arith.constant 0 : index
    %610 = vector.load %arg3[%c1_305, %c5_306, %609, %c0_307] : memref<3x9x8x128xf32, #tpu.memory_space<vmem>>, vector<1x1x8x128xf32>
    %611 = vector.shape_cast %610 : vector<1x1x8x128xf32> to vector<8x128xf32>
    %612 = arith.addf %608, %611 : vector<8x128xf32>
    %cst_308 = arith.constant 5.000000e-01 : f32
    %613 = vector.broadcast %cst_308 : f32 to vector<8x128xf32>
    %614 = arith.mulf %612, %613 : vector<8x128xf32>
    %615 = arith.mulf %590, %614 : vector<8x128xf32>
    %616 = arith.addf %483, %615 : vector<8x128xf32>
    %c2_309 = arith.constant 2 : index
    %c4_310 = arith.constant 4 : index
    %617 = arith.index_cast %3 : i32 to index
    %c0_311 = arith.constant 0 : index
    %618 = vector.load %arg3[%c2_309, %c4_310, %617, %c0_311] : memref<3x9x8x128xf32, #tpu.memory_space<vmem>>, vector<1x1x8x128xf32>
    %619 = vector.shape_cast %618 : vector<1x1x8x128xf32> to vector<8x128xf32>
    %c2_312 = arith.constant 2 : index
    %c5_313 = arith.constant 5 : index
    %620 = arith.index_cast %3 : i32 to index
    %c0_314 = arith.constant 0 : index
    %621 = vector.load %arg3[%c2_312, %c5_313, %620, %c0_314] : memref<3x9x8x128xf32, #tpu.memory_space<vmem>>, vector<1x1x8x128xf32>
    %622 = vector.shape_cast %621 : vector<1x1x8x128xf32> to vector<8x128xf32>
    %623 = arith.addf %619, %622 : vector<8x128xf32>
    %cst_315 = arith.constant 5.000000e-01 : f32
    %624 = vector.broadcast %cst_315 : f32 to vector<8x128xf32>
    %625 = arith.mulf %623, %624 : vector<8x128xf32>
    %626 = arith.mulf %590, %625 : vector<8x128xf32>
    %627 = arith.addf %494, %626 : vector<8x128xf32>
    %c0_316 = arith.constant 0 : index
    %c4_317 = arith.constant 4 : index
    %628 = arith.index_cast %3 : i32 to index
    %c0_318 = arith.constant 0 : index
    %629 = vector.load %arg4[%c0_316, %c4_317, %628, %c0_318] : memref<4x9x8x128xf32, #tpu.memory_space<vmem>>, vector<1x1x8x128xf32>
    %630 = vector.shape_cast %629 : vector<1x1x8x128xf32> to vector<8x128xf32>
    %c0_319 = arith.constant 0 : index
    %c5_320 = arith.constant 5 : index
    %631 = arith.index_cast %3 : i32 to index
    %c0_321 = arith.constant 0 : index
    %632 = vector.load %arg4[%c0_319, %c5_320, %631, %c0_321] : memref<4x9x8x128xf32, #tpu.memory_space<vmem>>, vector<1x1x8x128xf32>
    %633 = vector.shape_cast %632 : vector<1x1x8x128xf32> to vector<8x128xf32>
    %634 = arith.addf %630, %633 : vector<8x128xf32>
    %cst_322 = arith.constant 5.000000e-01 : f32
    %635 = vector.broadcast %cst_322 : f32 to vector<8x128xf32>
    %636 = arith.mulf %634, %635 : vector<8x128xf32>
    %637 = arith.mulf %590, %636 : vector<8x128xf32>
    %638 = arith.addf %505, %637 : vector<8x128xf32>
    %c1_323 = arith.constant 1 : index
    %c4_324 = arith.constant 4 : index
    %639 = arith.index_cast %3 : i32 to index
    %c0_325 = arith.constant 0 : index
    %640 = vector.load %arg4[%c1_323, %c4_324, %639, %c0_325] : memref<4x9x8x128xf32, #tpu.memory_space<vmem>>, vector<1x1x8x128xf32>
    %641 = vector.shape_cast %640 : vector<1x1x8x128xf32> to vector<8x128xf32>
    %c1_326 = arith.constant 1 : index
    %c5_327 = arith.constant 5 : index
    %642 = arith.index_cast %3 : i32 to index
    %c0_328 = arith.constant 0 : index
    %643 = vector.load %arg4[%c1_326, %c5_327, %642, %c0_328] : memref<4x9x8x128xf32, #tpu.memory_space<vmem>>, vector<1x1x8x128xf32>
    %644 = vector.shape_cast %643 : vector<1x1x8x128xf32> to vector<8x128xf32>
    %645 = arith.addf %641, %644 : vector<8x128xf32>
    %cst_329 = arith.constant 5.000000e-01 : f32
    %646 = vector.broadcast %cst_329 : f32 to vector<8x128xf32>
    %647 = arith.mulf %645, %646 : vector<8x128xf32>
    %648 = arith.mulf %590, %647 : vector<8x128xf32>
    %649 = arith.addf %516, %648 : vector<8x128xf32>
    %c2_330 = arith.constant 2 : index
    %c4_331 = arith.constant 4 : index
    %650 = arith.index_cast %3 : i32 to index
    %c0_332 = arith.constant 0 : index
    %651 = vector.load %arg4[%c2_330, %c4_331, %650, %c0_332] : memref<4x9x8x128xf32, #tpu.memory_space<vmem>>, vector<1x1x8x128xf32>
    %652 = vector.shape_cast %651 : vector<1x1x8x128xf32> to vector<8x128xf32>
    %c2_333 = arith.constant 2 : index
    %c5_334 = arith.constant 5 : index
    %653 = arith.index_cast %3 : i32 to index
    %c0_335 = arith.constant 0 : index
    %654 = vector.load %arg4[%c2_333, %c5_334, %653, %c0_335] : memref<4x9x8x128xf32, #tpu.memory_space<vmem>>, vector<1x1x8x128xf32>
    %655 = vector.shape_cast %654 : vector<1x1x8x128xf32> to vector<8x128xf32>
    %656 = arith.addf %652, %655 : vector<8x128xf32>
    %cst_336 = arith.constant 5.000000e-01 : f32
    %657 = vector.broadcast %cst_336 : f32 to vector<8x128xf32>
    %658 = arith.mulf %656, %657 : vector<8x128xf32>
    %659 = arith.mulf %590, %658 : vector<8x128xf32>
    %660 = arith.addf %527, %659 : vector<8x128xf32>
    %c3_337 = arith.constant 3 : index
    %c4_338 = arith.constant 4 : index
    %661 = arith.index_cast %3 : i32 to index
    %c0_339 = arith.constant 0 : index
    %662 = vector.load %arg4[%c3_337, %c4_338, %661, %c0_339] : memref<4x9x8x128xf32, #tpu.memory_space<vmem>>, vector<1x1x8x128xf32>
    %663 = vector.shape_cast %662 : vector<1x1x8x128xf32> to vector<8x128xf32>
    %c3_340 = arith.constant 3 : index
    %c5_341 = arith.constant 5 : index
    %664 = arith.index_cast %3 : i32 to index
    %c0_342 = arith.constant 0 : index
    %665 = vector.load %arg4[%c3_340, %c5_341, %664, %c0_342] : memref<4x9x8x128xf32, #tpu.memory_space<vmem>>, vector<1x1x8x128xf32>
    %666 = vector.shape_cast %665 : vector<1x1x8x128xf32> to vector<8x128xf32>
    %667 = arith.addf %663, %666 : vector<8x128xf32>
    %cst_343 = arith.constant 5.000000e-01 : f32
    %668 = vector.broadcast %cst_343 : f32 to vector<8x128xf32>
    %669 = arith.mulf %667, %668 : vector<8x128xf32>
    %670 = arith.mulf %590, %669 : vector<8x128xf32>
    %671 = arith.addf %538, %670 : vector<8x128xf32>
    %672 = arith.addf %539, %590 : vector<8x128xf32>
    %673 = arith.mulf %590, %583 : vector<8x128xf32>
    %674 = arith.addf %541, %673 : vector<8x128xf32>
    %675 = arith.minimumf %542, %554 : vector<8x128xf32>
    %676 = arith.maximumf %543, %554 : vector<8x128xf32>
    %cst_344 = arith.constant 1.000000e+00 : f32
    %677 = vector.broadcast %cst_344 : f32 to vector<8x128xf32>
    %678 = arith.subf %677, %589 : vector<8x128xf32>
    %cst_345 = arith.constant 1.000000e-10 : f32
    %679 = vector.broadcast %cst_345 : f32 to vector<8x128xf32>
    %680 = arith.addf %678, %679 : vector<8x128xf32>
    %681 = arith.mulf %548, %680 : vector<8x128xf32>
    %c5_346 = arith.constant 5 : index
    %682 = arith.index_cast %3 : i32 to index
    %c0_347 = arith.constant 0 : index
    %683 = vector.load %arg1[%c5_346, %682, %c0_347] : memref<9x8x128xf32, #tpu.memory_space<vmem>>, vector<1x8x128xf32>
    %684 = vector.shape_cast %683 : vector<1x8x128xf32> to vector<8x128xf32>
    %c6 = arith.constant 6 : index
    %685 = arith.index_cast %3 : i32 to index
    %c0_348 = arith.constant 0 : index
    %686 = vector.load %arg1[%c6, %685, %c0_348] : memref<9x8x128xf32, #tpu.memory_space<vmem>>, vector<1x8x128xf32>
    %687 = vector.shape_cast %686 : vector<1x8x128xf32> to vector<8x128xf32>
    %c5_349 = arith.constant 5 : index
    %688 = arith.index_cast %3 : i32 to index
    %c0_350 = arith.constant 0 : index
    %689 = vector.load %arg2[%c5_349, %688, %c0_350] : memref<9x8x128xf32, #tpu.memory_space<vmem>>, vector<1x8x128xf32>
    %690 = vector.shape_cast %689 : vector<1x8x128xf32> to vector<8x128xf32>
    %c6_351 = arith.constant 6 : index
    %691 = arith.index_cast %3 : i32 to index
    %c0_352 = arith.constant 0 : index
    %692 = vector.load %arg2[%c6_351, %691, %c0_352] : memref<9x8x128xf32, #tpu.memory_space<vmem>>, vector<1x8x128xf32>
    %693 = vector.shape_cast %692 : vector<1x8x128xf32> to vector<8x128xf32>
    %694 = arith.addf %690, %693 : vector<8x128xf32>
    %cst_353 = arith.constant 5.000000e-01 : f32
    %695 = vector.broadcast %cst_353 : f32 to vector<8x128xf32>
    %696 = arith.mulf %694, %695 : vector<8x128xf32>
    %cst_354 = arith.constant 1.000000e+00 : f32
    %697 = vector.broadcast %cst_354 : f32 to vector<8x128xf32>
    %698 = arith.subf %696, %697 : vector<8x128xf32>
    %cst_355 = arith.constant 0.000000e+00 : f32
    %699 = vector.broadcast %cst_355 : f32 to vector<8x128xf32>
    %700 = arith.maximumf %698, %699 : vector<8x128xf32>
    %701 = vector.broadcast %cst_355 : f32 to vector<8x128xf32>
    %702 = arith.subf %698, %701 : vector<8x128xf32>
    %703 = arith.cmpf one, %702, %702 : vector<8x128xf32>
    %704 = vector.broadcast %cst_355 : f32 to vector<8x128xf32>
    %705 = arith.addf %698, %704 : vector<8x128xf32>
    %706 = math.absf %702 : vector<8x128xf32>
    %cst_356 = arith.constant 0.000000e+00 : f32
    %707 = vector.broadcast %cst_356 : f32 to vector<8x128xf32>
    %708 = arith.subf %707, %706 : vector<8x128xf32>
    %709 = math.exp %708 : vector<8x128xf32>
    %710 = math.log1p %709 : vector<8x128xf32>
    %711 = arith.addf %700, %710 : vector<8x128xf32>
    %712 = arith.select %703, %705, %711 : vector<8x128xi1>, vector<8x128xf32>
    %713 = arith.subf %687, %684 : vector<8x128xf32>
    %714 = arith.addf %684, %687 : vector<8x128xf32>
    %cst_357 = arith.constant 5.000000e-01 : f32
    %715 = vector.broadcast %cst_357 : f32 to vector<8x128xf32>
    %716 = arith.mulf %714, %715 : vector<8x128xf32>
    %cst_358 = arith.constant 0.000000e+00 : f32
    %717 = vector.broadcast %cst_358 : f32 to vector<8x128xf32>
    %718 = arith.subf %717, %712 : vector<8x128xf32>
    %719 = arith.mulf %718, %713 : vector<8x128xf32>
    %720 = math.exp %719 : vector<8x128xf32>
    %cst_359 = arith.constant 1.000000e+00 : f32
    %721 = vector.broadcast %cst_359 : f32 to vector<8x128xf32>
    %722 = arith.subf %721, %720 : vector<8x128xf32>
    %723 = arith.mulf %722, %681 : vector<8x128xf32>
    %c5_360 = arith.constant 5 : index
    %724 = arith.index_cast %3 : i32 to index
    %c0_361 = arith.constant 0 : index
    %725 = vector.load %arg6[%c5_360, %724, %c0_361] : memref<8x8x128xf32, #tpu.memory_space<vmem>>, vector<1x8x128xf32>
    %726 = vector.shape_cast %725 : vector<1x8x128xf32> to vector<8x128xf32>
    %727 = vector.shape_cast %723 : vector<8x128xf32> to vector<1x8x128xf32>
    tpu.vector_store %arg6[%c5_360, %724, %c0_361], %727 {strides = array<i32>} : memref<8x8x128xf32, #tpu.memory_space<vmem>>, vector<1x8x128xf32>,
    %c0_362 = arith.constant 0 : index
    %c5_363 = arith.constant 5 : index
    %728 = arith.index_cast %3 : i32 to index
    %c0_364 = arith.constant 0 : index
    %729 = vector.load %arg3[%c0_362, %c5_363, %728, %c0_364] : memref<3x9x8x128xf32, #tpu.memory_space<vmem>>, vector<1x1x8x128xf32>
    %730 = vector.shape_cast %729 : vector<1x1x8x128xf32> to vector<8x128xf32>
    %c0_365 = arith.constant 0 : index
    %c6_366 = arith.constant 6 : index
    %731 = arith.index_cast %3 : i32 to index
    %c0_367 = arith.constant 0 : index
    %732 = vector.load %arg3[%c0_365, %c6_366, %731, %c0_367] : memref<3x9x8x128xf32, #tpu.memory_space<vmem>>, vector<1x1x8x128xf32>
    %733 = vector.shape_cast %732 : vector<1x1x8x128xf32> to vector<8x128xf32>
    %734 = arith.addf %730, %733 : vector<8x128xf32>
    %cst_368 = arith.constant 5.000000e-01 : f32
    %735 = vector.broadcast %cst_368 : f32 to vector<8x128xf32>
    %736 = arith.mulf %734, %735 : vector<8x128xf32>
    %737 = arith.mulf %723, %736 : vector<8x128xf32>
    %738 = arith.addf %605, %737 : vector<8x128xf32>
    %c1_369 = arith.constant 1 : index
    %c5_370 = arith.constant 5 : index
    %739 = arith.index_cast %3 : i32 to index
    %c0_371 = arith.constant 0 : index
    %740 = vector.load %arg3[%c1_369, %c5_370, %739, %c0_371] : memref<3x9x8x128xf32, #tpu.memory_space<vmem>>, vector<1x1x8x128xf32>
    %741 = vector.shape_cast %740 : vector<1x1x8x128xf32> to vector<8x128xf32>
    %c1_372 = arith.constant 1 : index
    %c6_373 = arith.constant 6 : index
    %742 = arith.index_cast %3 : i32 to index
    %c0_374 = arith.constant 0 : index
    %743 = vector.load %arg3[%c1_372, %c6_373, %742, %c0_374] : memref<3x9x8x128xf32, #tpu.memory_space<vmem>>, vector<1x1x8x128xf32>
    %744 = vector.shape_cast %743 : vector<1x1x8x128xf32> to vector<8x128xf32>
    %745 = arith.addf %741, %744 : vector<8x128xf32>
    %cst_375 = arith.constant 5.000000e-01 : f32
    %746 = vector.broadcast %cst_375 : f32 to vector<8x128xf32>
    %747 = arith.mulf %745, %746 : vector<8x128xf32>
    %748 = arith.mulf %723, %747 : vector<8x128xf32>
    %749 = arith.addf %616, %748 : vector<8x128xf32>
    %c2_376 = arith.constant 2 : index
    %c5_377 = arith.constant 5 : index
    %750 = arith.index_cast %3 : i32 to index
    %c0_378 = arith.constant 0 : index
    %751 = vector.load %arg3[%c2_376, %c5_377, %750, %c0_378] : memref<3x9x8x128xf32, #tpu.memory_space<vmem>>, vector<1x1x8x128xf32>
    %752 = vector.shape_cast %751 : vector<1x1x8x128xf32> to vector<8x128xf32>
    %c2_379 = arith.constant 2 : index
    %c6_380 = arith.constant 6 : index
    %753 = arith.index_cast %3 : i32 to index
    %c0_381 = arith.constant 0 : index
    %754 = vector.load %arg3[%c2_379, %c6_380, %753, %c0_381] : memref<3x9x8x128xf32, #tpu.memory_space<vmem>>, vector<1x1x8x128xf32>
    %755 = vector.shape_cast %754 : vector<1x1x8x128xf32> to vector<8x128xf32>
    %756 = arith.addf %752, %755 : vector<8x128xf32>
    %cst_382 = arith.constant 5.000000e-01 : f32
    %757 = vector.broadcast %cst_382 : f32 to vector<8x128xf32>
    %758 = arith.mulf %756, %757 : vector<8x128xf32>
    %759 = arith.mulf %723, %758 : vector<8x128xf32>
    %760 = arith.addf %627, %759 : vector<8x128xf32>
    %c0_383 = arith.constant 0 : index
    %c5_384 = arith.constant 5 : index
    %761 = arith.index_cast %3 : i32 to index
    %c0_385 = arith.constant 0 : index
    %762 = vector.load %arg4[%c0_383, %c5_384, %761, %c0_385] : memref<4x9x8x128xf32, #tpu.memory_space<vmem>>, vector<1x1x8x128xf32>
    %763 = vector.shape_cast %762 : vector<1x1x8x128xf32> to vector<8x128xf32>
    %c0_386 = arith.constant 0 : index
    %c6_387 = arith.constant 6 : index
    %764 = arith.index_cast %3 : i32 to index
    %c0_388 = arith.constant 0 : index
    %765 = vector.load %arg4[%c0_386, %c6_387, %764, %c0_388] : memref<4x9x8x128xf32, #tpu.memory_space<vmem>>, vector<1x1x8x128xf32>
    %766 = vector.shape_cast %765 : vector<1x1x8x128xf32> to vector<8x128xf32>
    %767 = arith.addf %763, %766 : vector<8x128xf32>
    %cst_389 = arith.constant 5.000000e-01 : f32
    %768 = vector.broadcast %cst_389 : f32 to vector<8x128xf32>
    %769 = arith.mulf %767, %768 : vector<8x128xf32>
    %770 = arith.mulf %723, %769 : vector<8x128xf32>
    %771 = arith.addf %638, %770 : vector<8x128xf32>
    %c1_390 = arith.constant 1 : index
    %c5_391 = arith.constant 5 : index
    %772 = arith.index_cast %3 : i32 to index
    %c0_392 = arith.constant 0 : index
    %773 = vector.load %arg4[%c1_390, %c5_391, %772, %c0_392] : memref<4x9x8x128xf32, #tpu.memory_space<vmem>>, vector<1x1x8x128xf32>
    %774 = vector.shape_cast %773 : vector<1x1x8x128xf32> to vector<8x128xf32>
    %c1_393 = arith.constant 1 : index
    %c6_394 = arith.constant 6 : index
    %775 = arith.index_cast %3 : i32 to index
    %c0_395 = arith.constant 0 : index
    %776 = vector.load %arg4[%c1_393, %c6_394, %775, %c0_395] : memref<4x9x8x128xf32, #tpu.memory_space<vmem>>, vector<1x1x8x128xf32>
    %777 = vector.shape_cast %776 : vector<1x1x8x128xf32> to vector<8x128xf32>
    %778 = arith.addf %774, %777 : vector<8x128xf32>
    %cst_396 = arith.constant 5.000000e-01 : f32
    %779 = vector.broadcast %cst_396 : f32 to vector<8x128xf32>
    %780 = arith.mulf %778, %779 : vector<8x128xf32>
    %781 = arith.mulf %723, %780 : vector<8x128xf32>
    %782 = arith.addf %649, %781 : vector<8x128xf32>
    %c2_397 = arith.constant 2 : index
    %c5_398 = arith.constant 5 : index
    %783 = arith.index_cast %3 : i32 to index
    %c0_399 = arith.constant 0 : index
    %784 = vector.load %arg4[%c2_397, %c5_398, %783, %c0_399] : memref<4x9x8x128xf32, #tpu.memory_space<vmem>>, vector<1x1x8x128xf32>
    %785 = vector.shape_cast %784 : vector<1x1x8x128xf32> to vector<8x128xf32>
    %c2_400 = arith.constant 2 : index
    %c6_401 = arith.constant 6 : index
    %786 = arith.index_cast %3 : i32 to index
    %c0_402 = arith.constant 0 : index
    %787 = vector.load %arg4[%c2_400, %c6_401, %786, %c0_402] : memref<4x9x8x128xf32, #tpu.memory_space<vmem>>, vector<1x1x8x128xf32>
    %788 = vector.shape_cast %787 : vector<1x1x8x128xf32> to vector<8x128xf32>
    %789 = arith.addf %785, %788 : vector<8x128xf32>
    %cst_403 = arith.constant 5.000000e-01 : f32
    %790 = vector.broadcast %cst_403 : f32 to vector<8x128xf32>
    %791 = arith.mulf %789, %790 : vector<8x128xf32>
    %792 = arith.mulf %723, %791 : vector<8x128xf32>
    %793 = arith.addf %660, %792 : vector<8x128xf32>
    %c3_404 = arith.constant 3 : index
    %c5_405 = arith.constant 5 : index
    %794 = arith.index_cast %3 : i32 to index
    %c0_406 = arith.constant 0 : index
    %795 = vector.load %arg4[%c3_404, %c5_405, %794, %c0_406] : memref<4x9x8x128xf32, #tpu.memory_space<vmem>>, vector<1x1x8x128xf32>
    %796 = vector.shape_cast %795 : vector<1x1x8x128xf32> to vector<8x128xf32>
    %c3_407 = arith.constant 3 : index
    %c6_408 = arith.constant 6 : index
    %797 = arith.index_cast %3 : i32 to index
    %c0_409 = arith.constant 0 : index
    %798 = vector.load %arg4[%c3_407, %c6_408, %797, %c0_409] : memref<4x9x8x128xf32, #tpu.memory_space<vmem>>, vector<1x1x8x128xf32>
    %799 = vector.shape_cast %798 : vector<1x1x8x128xf32> to vector<8x128xf32>
    %800 = arith.addf %796, %799 : vector<8x128xf32>
    %cst_410 = arith.constant 5.000000e-01 : f32
    %801 = vector.broadcast %cst_410 : f32 to vector<8x128xf32>
    %802 = arith.mulf %800, %801 : vector<8x128xf32>
    %803 = arith.mulf %723, %802 : vector<8x128xf32>
    %804 = arith.addf %671, %803 : vector<8x128xf32>
    %805 = arith.addf %672, %723 : vector<8x128xf32>
    %806 = arith.mulf %723, %716 : vector<8x128xf32>
    %807 = arith.addf %674, %806 : vector<8x128xf32>
    %808 = arith.minimumf %675, %687 : vector<8x128xf32>
    %809 = arith.maximumf %676, %687 : vector<8x128xf32>
    %cst_411 = arith.constant 1.000000e+00 : f32
    %810 = vector.broadcast %cst_411 : f32 to vector<8x128xf32>
    %811 = arith.subf %810, %722 : vector<8x128xf32>
    %cst_412 = arith.constant 1.000000e-10 : f32
    %812 = vector.broadcast %cst_412 : f32 to vector<8x128xf32>
    %813 = arith.addf %811, %812 : vector<8x128xf32>
    %814 = arith.mulf %681, %813 : vector<8x128xf32>
    %c6_413 = arith.constant 6 : index
    %815 = arith.index_cast %3 : i32 to index
    %c0_414 = arith.constant 0 : index
    %816 = vector.load %arg1[%c6_413, %815, %c0_414] : memref<9x8x128xf32, #tpu.memory_space<vmem>>, vector<1x8x128xf32>
    %817 = vector.shape_cast %816 : vector<1x8x128xf32> to vector<8x128xf32>
    %c7 = arith.constant 7 : index
    %818 = arith.index_cast %3 : i32 to index
    %c0_415 = arith.constant 0 : index
    %819 = vector.load %arg1[%c7, %818, %c0_415] : memref<9x8x128xf32, #tpu.memory_space<vmem>>, vector<1x8x128xf32>
    %820 = vector.shape_cast %819 : vector<1x8x128xf32> to vector<8x128xf32>
    %c6_416 = arith.constant 6 : index
    %821 = arith.index_cast %3 : i32 to index
    %c0_417 = arith.constant 0 : index
    %822 = vector.load %arg2[%c6_416, %821, %c0_417] : memref<9x8x128xf32, #tpu.memory_space<vmem>>, vector<1x8x128xf32>
    %823 = vector.shape_cast %822 : vector<1x8x128xf32> to vector<8x128xf32>
    %c7_418 = arith.constant 7 : index
    %824 = arith.index_cast %3 : i32 to index
    %c0_419 = arith.constant 0 : index
    %825 = vector.load %arg2[%c7_418, %824, %c0_419] : memref<9x8x128xf32, #tpu.memory_space<vmem>>, vector<1x8x128xf32>
    %826 = vector.shape_cast %825 : vector<1x8x128xf32> to vector<8x128xf32>
    %827 = arith.addf %823, %826 : vector<8x128xf32>
    %cst_420 = arith.constant 5.000000e-01 : f32
    %828 = vector.broadcast %cst_420 : f32 to vector<8x128xf32>
    %829 = arith.mulf %827, %828 : vector<8x128xf32>
    %cst_421 = arith.constant 1.000000e+00 : f32
    %830 = vector.broadcast %cst_421 : f32 to vector<8x128xf32>
    %831 = arith.subf %829, %830 : vector<8x128xf32>
    %cst_422 = arith.constant 0.000000e+00 : f32
    %832 = vector.broadcast %cst_422 : f32 to vector<8x128xf32>
    %833 = arith.maximumf %831, %832 : vector<8x128xf32>
    %834 = vector.broadcast %cst_422 : f32 to vector<8x128xf32>
    %835 = arith.subf %831, %834 : vector<8x128xf32>
    %836 = arith.cmpf one, %835, %835 : vector<8x128xf32>
    %837 = vector.broadcast %cst_422 : f32 to vector<8x128xf32>
    %838 = arith.addf %831, %837 : vector<8x128xf32>
    %839 = math.absf %835 : vector<8x128xf32>
    %cst_423 = arith.constant 0.000000e+00 : f32
    %840 = vector.broadcast %cst_423 : f32 to vector<8x128xf32>
    %841 = arith.subf %840, %839 : vector<8x128xf32>
    %842 = math.exp %841 : vector<8x128xf32>
    %843 = math.log1p %842 : vector<8x128xf32>
    %844 = arith.addf %833, %843 : vector<8x128xf32>
    %845 = arith.select %836, %838, %844 : vector<8x128xi1>, vector<8x128xf32>
    %846 = arith.subf %820, %817 : vector<8x128xf32>
    %847 = arith.addf %817, %820 : vector<8x128xf32>
    %cst_424 = arith.constant 5.000000e-01 : f32
    %848 = vector.broadcast %cst_424 : f32 to vector<8x128xf32>
    %849 = arith.mulf %847, %848 : vector<8x128xf32>
    %cst_425 = arith.constant 0.000000e+00 : f32
    %850 = vector.broadcast %cst_425 : f32 to vector<8x128xf32>
    %851 = arith.subf %850, %845 : vector<8x128xf32>
    %852 = arith.mulf %851, %846 : vector<8x128xf32>
    %853 = math.exp %852 : vector<8x128xf32>
    %cst_426 = arith.constant 1.000000e+00 : f32
    %854 = vector.broadcast %cst_426 : f32 to vector<8x128xf32>
    %855 = arith.subf %854, %853 : vector<8x128xf32>
    %856 = arith.mulf %855, %814 : vector<8x128xf32>
    %c6_427 = arith.constant 6 : index
    %857 = arith.index_cast %3 : i32 to index
    %c0_428 = arith.constant 0 : index
    %858 = vector.load %arg6[%c6_427, %857, %c0_428] : memref<8x8x128xf32, #tpu.memory_space<vmem>>, vector<1x8x128xf32>
    %859 = vector.shape_cast %858 : vector<1x8x128xf32> to vector<8x128xf32>
    %860 = vector.shape_cast %856 : vector<8x128xf32> to vector<1x8x128xf32>
    tpu.vector_store %arg6[%c6_427, %857, %c0_428], %860 {strides = array<i32>} : memref<8x8x128xf32, #tpu.memory_space<vmem>>, vector<1x8x128xf32>,
    %c0_429 = arith.constant 0 : index
    %c6_430 = arith.constant 6 : index
    %861 = arith.index_cast %3 : i32 to index
    %c0_431 = arith.constant 0 : index
    %862 = vector.load %arg3[%c0_429, %c6_430, %861, %c0_431] : memref<3x9x8x128xf32, #tpu.memory_space<vmem>>, vector<1x1x8x128xf32>
    %863 = vector.shape_cast %862 : vector<1x1x8x128xf32> to vector<8x128xf32>
    %c0_432 = arith.constant 0 : index
    %c7_433 = arith.constant 7 : index
    %864 = arith.index_cast %3 : i32 to index
    %c0_434 = arith.constant 0 : index
    %865 = vector.load %arg3[%c0_432, %c7_433, %864, %c0_434] : memref<3x9x8x128xf32, #tpu.memory_space<vmem>>, vector<1x1x8x128xf32>
    %866 = vector.shape_cast %865 : vector<1x1x8x128xf32> to vector<8x128xf32>
    %867 = arith.addf %863, %866 : vector<8x128xf32>
    %cst_435 = arith.constant 5.000000e-01 : f32
    %868 = vector.broadcast %cst_435 : f32 to vector<8x128xf32>
    %869 = arith.mulf %867, %868 : vector<8x128xf32>
    %870 = arith.mulf %856, %869 : vector<8x128xf32>
    %871 = arith.addf %738, %870 : vector<8x128xf32>
    %c1_436 = arith.constant 1 : index
    %c6_437 = arith.constant 6 : index
    %872 = arith.index_cast %3 : i32 to index
    %c0_438 = arith.constant 0 : index
    %873 = vector.load %arg3[%c1_436, %c6_437, %872, %c0_438] : memref<3x9x8x128xf32, #tpu.memory_space<vmem>>, vector<1x1x8x128xf32>
    %874 = vector.shape_cast %873 : vector<1x1x8x128xf32> to vector<8x128xf32>
    %c1_439 = arith.constant 1 : index
    %c7_440 = arith.constant 7 : index
    %875 = arith.index_cast %3 : i32 to index
    %c0_441 = arith.constant 0 : index
    %876 = vector.load %arg3[%c1_439, %c7_440, %875, %c0_441] : memref<3x9x8x128xf32, #tpu.memory_space<vmem>>, vector<1x1x8x128xf32>
    %877 = vector.shape_cast %876 : vector<1x1x8x128xf32> to vector<8x128xf32>
    %878 = arith.addf %874, %877 : vector<8x128xf32>
    %cst_442 = arith.constant 5.000000e-01 : f32
    %879 = vector.broadcast %cst_442 : f32 to vector<8x128xf32>
    %880 = arith.mulf %878, %879 : vector<8x128xf32>
    %881 = arith.mulf %856, %880 : vector<8x128xf32>
    %882 = arith.addf %749, %881 : vector<8x128xf32>
    %c2_443 = arith.constant 2 : index
    %c6_444 = arith.constant 6 : index
    %883 = arith.index_cast %3 : i32 to index
    %c0_445 = arith.constant 0 : index
    %884 = vector.load %arg3[%c2_443, %c6_444, %883, %c0_445] : memref<3x9x8x128xf32, #tpu.memory_space<vmem>>, vector<1x1x8x128xf32>
    %885 = vector.shape_cast %884 : vector<1x1x8x128xf32> to vector<8x128xf32>
    %c2_446 = arith.constant 2 : index
    %c7_447 = arith.constant 7 : index
    %886 = arith.index_cast %3 : i32 to index
    %c0_448 = arith.constant 0 : index
    %887 = vector.load %arg3[%c2_446, %c7_447, %886, %c0_448] : memref<3x9x8x128xf32, #tpu.memory_space<vmem>>, vector<1x1x8x128xf32>
    %888 = vector.shape_cast %887 : vector<1x1x8x128xf32> to vector<8x128xf32>
    %889 = arith.addf %885, %888 : vector<8x128xf32>
    %cst_449 = arith.constant 5.000000e-01 : f32
    %890 = vector.broadcast %cst_449 : f32 to vector<8x128xf32>
    %891 = arith.mulf %889, %890 : vector<8x128xf32>
    %892 = arith.mulf %856, %891 : vector<8x128xf32>
    %893 = arith.addf %760, %892 : vector<8x128xf32>
    %c0_450 = arith.constant 0 : index
    %c6_451 = arith.constant 6 : index
    %894 = arith.index_cast %3 : i32 to index
    %c0_452 = arith.constant 0 : index
    %895 = vector.load %arg4[%c0_450, %c6_451, %894, %c0_452] : memref<4x9x8x128xf32, #tpu.memory_space<vmem>>, vector<1x1x8x128xf32>
    %896 = vector.shape_cast %895 : vector<1x1x8x128xf32> to vector<8x128xf32>
    %c0_453 = arith.constant 0 : index
    %c7_454 = arith.constant 7 : index
    %897 = arith.index_cast %3 : i32 to index
    %c0_455 = arith.constant 0 : index
    %898 = vector.load %arg4[%c0_453, %c7_454, %897, %c0_455] : memref<4x9x8x128xf32, #tpu.memory_space<vmem>>, vector<1x1x8x128xf32>
    %899 = vector.shape_cast %898 : vector<1x1x8x128xf32> to vector<8x128xf32>
    %900 = arith.addf %896, %899 : vector<8x128xf32>
    %cst_456 = arith.constant 5.000000e-01 : f32
    %901 = vector.broadcast %cst_456 : f32 to vector<8x128xf32>
    %902 = arith.mulf %900, %901 : vector<8x128xf32>
    %903 = arith.mulf %856, %902 : vector<8x128xf32>
    %904 = arith.addf %771, %903 : vector<8x128xf32>
    %c1_457 = arith.constant 1 : index
    %c6_458 = arith.constant 6 : index
    %905 = arith.index_cast %3 : i32 to index
    %c0_459 = arith.constant 0 : index
    %906 = vector.load %arg4[%c1_457, %c6_458, %905, %c0_459] : memref<4x9x8x128xf32, #tpu.memory_space<vmem>>, vector<1x1x8x128xf32>
    %907 = vector.shape_cast %906 : vector<1x1x8x128xf32> to vector<8x128xf32>
    %c1_460 = arith.constant 1 : index
    %c7_461 = arith.constant 7 : index
    %908 = arith.index_cast %3 : i32 to index
    %c0_462 = arith.constant 0 : index
    %909 = vector.load %arg4[%c1_460, %c7_461, %908, %c0_462] : memref<4x9x8x128xf32, #tpu.memory_space<vmem>>, vector<1x1x8x128xf32>
    %910 = vector.shape_cast %909 : vector<1x1x8x128xf32> to vector<8x128xf32>
    %911 = arith.addf %907, %910 : vector<8x128xf32>
    %cst_463 = arith.constant 5.000000e-01 : f32
    %912 = vector.broadcast %cst_463 : f32 to vector<8x128xf32>
    %913 = arith.mulf %911, %912 : vector<8x128xf32>
    %914 = arith.mulf %856, %913 : vector<8x128xf32>
    %915 = arith.addf %782, %914 : vector<8x128xf32>
    %c2_464 = arith.constant 2 : index
    %c6_465 = arith.constant 6 : index
    %916 = arith.index_cast %3 : i32 to index
    %c0_466 = arith.constant 0 : index
    %917 = vector.load %arg4[%c2_464, %c6_465, %916, %c0_466] : memref<4x9x8x128xf32, #tpu.memory_space<vmem>>, vector<1x1x8x128xf32>
    %918 = vector.shape_cast %917 : vector<1x1x8x128xf32> to vector<8x128xf32>
    %c2_467 = arith.constant 2 : index
    %c7_468 = arith.constant 7 : index
    %919 = arith.index_cast %3 : i32 to index
    %c0_469 = arith.constant 0 : index
    %920 = vector.load %arg4[%c2_467, %c7_468, %919, %c0_469] : memref<4x9x8x128xf32, #tpu.memory_space<vmem>>, vector<1x1x8x128xf32>
    %921 = vector.shape_cast %920 : vector<1x1x8x128xf32> to vector<8x128xf32>
    %922 = arith.addf %918, %921 : vector<8x128xf32>
    %cst_470 = arith.constant 5.000000e-01 : f32
    %923 = vector.broadcast %cst_470 : f32 to vector<8x128xf32>
    %924 = arith.mulf %922, %923 : vector<8x128xf32>
    %925 = arith.mulf %856, %924 : vector<8x128xf32>
    %926 = arith.addf %793, %925 : vector<8x128xf32>
    %c3_471 = arith.constant 3 : index
    %c6_472 = arith.constant 6 : index
    %927 = arith.index_cast %3 : i32 to index
    %c0_473 = arith.constant 0 : index
    %928 = vector.load %arg4[%c3_471, %c6_472, %927, %c0_473] : memref<4x9x8x128xf32, #tpu.memory_space<vmem>>, vector<1x1x8x128xf32>
    %929 = vector.shape_cast %928 : vector<1x1x8x128xf32> to vector<8x128xf32>
    %c3_474 = arith.constant 3 : index
    %c7_475 = arith.constant 7 : index
    %930 = arith.index_cast %3 : i32 to index
    %c0_476 = arith.constant 0 : index
    %931 = vector.load %arg4[%c3_474, %c7_475, %930, %c0_476] : memref<4x9x8x128xf32, #tpu.memory_space<vmem>>, vector<1x1x8x128xf32>
    %932 = vector.shape_cast %931 : vector<1x1x8x128xf32> to vector<8x128xf32>
    %933 = arith.addf %929, %932 : vector<8x128xf32>
    %cst_477 = arith.constant 5.000000e-01 : f32
    %934 = vector.broadcast %cst_477 : f32 to vector<8x128xf32>
    %935 = arith.mulf %933, %934 : vector<8x128xf32>
    %936 = arith.mulf %856, %935 : vector<8x128xf32>
    %937 = arith.addf %804, %936 : vector<8x128xf32>
    %938 = arith.addf %805, %856 : vector<8x128xf32>
    %939 = arith.mulf %856, %849 : vector<8x128xf32>
    %940 = arith.addf %807, %939 : vector<8x128xf32>
    %941 = arith.minimumf %808, %820 : vector<8x128xf32>
    %942 = arith.maximumf %809, %820 : vector<8x128xf32>
    %cst_478 = arith.constant 1.000000e+00 : f32
    %943 = vector.broadcast %cst_478 : f32 to vector<8x128xf32>
    %944 = arith.subf %943, %855 : vector<8x128xf32>
    %cst_479 = arith.constant 1.000000e-10 : f32
    %945 = vector.broadcast %cst_479 : f32 to vector<8x128xf32>
    %946 = arith.addf %944, %945 : vector<8x128xf32>
    %947 = arith.mulf %814, %946 : vector<8x128xf32>
    %c7_480 = arith.constant 7 : index
    %948 = arith.index_cast %3 : i32 to index
    %c0_481 = arith.constant 0 : index
    %949 = vector.load %arg1[%c7_480, %948, %c0_481] : memref<9x8x128xf32, #tpu.memory_space<vmem>>, vector<1x8x128xf32>
    %950 = vector.shape_cast %949 : vector<1x8x128xf32> to vector<8x128xf32>
    %c8 = arith.constant 8 : index
    %951 = arith.index_cast %3 : i32 to index
    %c0_482 = arith.constant 0 : index
    %952 = vector.load %arg1[%c8, %951, %c0_482] : memref<9x8x128xf32, #tpu.memory_space<vmem>>, vector<1x8x128xf32>
    %953 = vector.shape_cast %952 : vector<1x8x128xf32> to vector<8x128xf32>
    %c7_483 = arith.constant 7 : index
    %954 = arith.index_cast %3 : i32 to index
    %c0_484 = arith.constant 0 : index
    %955 = vector.load %arg2[%c7_483, %954, %c0_484] : memref<9x8x128xf32, #tpu.memory_space<vmem>>, vector<1x8x128xf32>
    %956 = vector.shape_cast %955 : vector<1x8x128xf32> to vector<8x128xf32>
    %c8_485 = arith.constant 8 : index
    %957 = arith.index_cast %3 : i32 to index
    %c0_486 = arith.constant 0 : index
    %958 = vector.load %arg2[%c8_485, %957, %c0_486] : memref<9x8x128xf32, #tpu.memory_space<vmem>>, vector<1x8x128xf32>
    %959 = vector.shape_cast %958 : vector<1x8x128xf32> to vector<8x128xf32>
    %960 = arith.addf %956, %959 : vector<8x128xf32>
    %cst_487 = arith.constant 5.000000e-01 : f32
    %961 = vector.broadcast %cst_487 : f32 to vector<8x128xf32>
    %962 = arith.mulf %960, %961 : vector<8x128xf32>
    %cst_488 = arith.constant 1.000000e+00 : f32
    %963 = vector.broadcast %cst_488 : f32 to vector<8x128xf32>
    %964 = arith.subf %962, %963 : vector<8x128xf32>
    %cst_489 = arith.constant 0.000000e+00 : f32
    %965 = vector.broadcast %cst_489 : f32 to vector<8x128xf32>
    %966 = arith.maximumf %964, %965 : vector<8x128xf32>
    %967 = vector.broadcast %cst_489 : f32 to vector<8x128xf32>
    %968 = arith.subf %964, %967 : vector<8x128xf32>
    %969 = arith.cmpf one, %968, %968 : vector<8x128xf32>
    %970 = vector.broadcast %cst_489 : f32 to vector<8x128xf32>
    %971 = arith.addf %964, %970 : vector<8x128xf32>
    %972 = math.absf %968 : vector<8x128xf32>
    %cst_490 = arith.constant 0.000000e+00 : f32
    %973 = vector.broadcast %cst_490 : f32 to vector<8x128xf32>
    %974 = arith.subf %973, %972 : vector<8x128xf32>
    %975 = math.exp %974 : vector<8x128xf32>
    %976 = math.log1p %975 : vector<8x128xf32>
    %977 = arith.addf %966, %976 : vector<8x128xf32>
    %978 = arith.select %969, %971, %977 : vector<8x128xi1>, vector<8x128xf32>
    %979 = arith.subf %953, %950 : vector<8x128xf32>
    %980 = arith.addf %950, %953 : vector<8x128xf32>
    %cst_491 = arith.constant 5.000000e-01 : f32
    %981 = vector.broadcast %cst_491 : f32 to vector<8x128xf32>
    %982 = arith.mulf %980, %981 : vector<8x128xf32>
    %cst_492 = arith.constant 0.000000e+00 : f32
    %983 = vector.broadcast %cst_492 : f32 to vector<8x128xf32>
    %984 = arith.subf %983, %978 : vector<8x128xf32>
    %985 = arith.mulf %984, %979 : vector<8x128xf32>
    %986 = math.exp %985 : vector<8x128xf32>
    %cst_493 = arith.constant 1.000000e+00 : f32
    %987 = vector.broadcast %cst_493 : f32 to vector<8x128xf32>
    %988 = arith.subf %987, %986 : vector<8x128xf32>
    %989 = arith.mulf %988, %947 : vector<8x128xf32>
    %c7_494 = arith.constant 7 : index
    %990 = arith.index_cast %3 : i32 to index
    %c0_495 = arith.constant 0 : index
    %991 = vector.load %arg6[%c7_494, %990, %c0_495] : memref<8x8x128xf32, #tpu.memory_space<vmem>>, vector<1x8x128xf32>
    %992 = vector.shape_cast %991 : vector<1x8x128xf32> to vector<8x128xf32>
    %993 = vector.shape_cast %989 : vector<8x128xf32> to vector<1x8x128xf32>
    tpu.vector_store %arg6[%c7_494, %990, %c0_495], %993 {strides = array<i32>} : memref<8x8x128xf32, #tpu.memory_space<vmem>>, vector<1x8x128xf32>,
    %c0_496 = arith.constant 0 : index
    %c7_497 = arith.constant 7 : index
    %994 = arith.index_cast %3 : i32 to index
    %c0_498 = arith.constant 0 : index
    %995 = vector.load %arg3[%c0_496, %c7_497, %994, %c0_498] : memref<3x9x8x128xf32, #tpu.memory_space<vmem>>, vector<1x1x8x128xf32>
    %996 = vector.shape_cast %995 : vector<1x1x8x128xf32> to vector<8x128xf32>
    %c0_499 = arith.constant 0 : index
    %c8_500 = arith.constant 8 : index
    %997 = arith.index_cast %3 : i32 to index
    %c0_501 = arith.constant 0 : index
    %998 = vector.load %arg3[%c0_499, %c8_500, %997, %c0_501] : memref<3x9x8x128xf32, #tpu.memory_space<vmem>>, vector<1x1x8x128xf32>
    %999 = vector.shape_cast %998 : vector<1x1x8x128xf32> to vector<8x128xf32>
    %1000 = arith.addf %996, %999 : vector<8x128xf32>
    %cst_502 = arith.constant 5.000000e-01 : f32
    %1001 = vector.broadcast %cst_502 : f32 to vector<8x128xf32>
    %1002 = arith.mulf %1000, %1001 : vector<8x128xf32>
    %1003 = arith.mulf %989, %1002 : vector<8x128xf32>
    %1004 = arith.addf %871, %1003 : vector<8x128xf32>
    %c1_503 = arith.constant 1 : index
    %c7_504 = arith.constant 7 : index
    %1005 = arith.index_cast %3 : i32 to index
    %c0_505 = arith.constant 0 : index
    %1006 = vector.load %arg3[%c1_503, %c7_504, %1005, %c0_505] : memref<3x9x8x128xf32, #tpu.memory_space<vmem>>, vector<1x1x8x128xf32>
    %1007 = vector.shape_cast %1006 : vector<1x1x8x128xf32> to vector<8x128xf32>
    %c1_506 = arith.constant 1 : index
    %c8_507 = arith.constant 8 : index
    %1008 = arith.index_cast %3 : i32 to index
    %c0_508 = arith.constant 0 : index
    %1009 = vector.load %arg3[%c1_506, %c8_507, %1008, %c0_508] : memref<3x9x8x128xf32, #tpu.memory_space<vmem>>, vector<1x1x8x128xf32>
    %1010 = vector.shape_cast %1009 : vector<1x1x8x128xf32> to vector<8x128xf32>
    %1011 = arith.addf %1007, %1010 : vector<8x128xf32>
    %cst_509 = arith.constant 5.000000e-01 : f32
    %1012 = vector.broadcast %cst_509 : f32 to vector<8x128xf32>
    %1013 = arith.mulf %1011, %1012 : vector<8x128xf32>
    %1014 = arith.mulf %989, %1013 : vector<8x128xf32>
    %1015 = arith.addf %882, %1014 : vector<8x128xf32>
    %c2_510 = arith.constant 2 : index
    %c7_511 = arith.constant 7 : index
    %1016 = arith.index_cast %3 : i32 to index
    %c0_512 = arith.constant 0 : index
    %1017 = vector.load %arg3[%c2_510, %c7_511, %1016, %c0_512] : memref<3x9x8x128xf32, #tpu.memory_space<vmem>>, vector<1x1x8x128xf32>
    %1018 = vector.shape_cast %1017 : vector<1x1x8x128xf32> to vector<8x128xf32>
    %c2_513 = arith.constant 2 : index
    %c8_514 = arith.constant 8 : index
    %1019 = arith.index_cast %3 : i32 to index
    %c0_515 = arith.constant 0 : index
    %1020 = vector.load %arg3[%c2_513, %c8_514, %1019, %c0_515] : memref<3x9x8x128xf32, #tpu.memory_space<vmem>>, vector<1x1x8x128xf32>
    %1021 = vector.shape_cast %1020 : vector<1x1x8x128xf32> to vector<8x128xf32>
    %1022 = arith.addf %1018, %1021 : vector<8x128xf32>
    %cst_516 = arith.constant 5.000000e-01 : f32
    %1023 = vector.broadcast %cst_516 : f32 to vector<8x128xf32>
    %1024 = arith.mulf %1022, %1023 : vector<8x128xf32>
    %1025 = arith.mulf %989, %1024 : vector<8x128xf32>
    %1026 = arith.addf %893, %1025 : vector<8x128xf32>
    %c0_517 = arith.constant 0 : index
    %c7_518 = arith.constant 7 : index
    %1027 = arith.index_cast %3 : i32 to index
    %c0_519 = arith.constant 0 : index
    %1028 = vector.load %arg4[%c0_517, %c7_518, %1027, %c0_519] : memref<4x9x8x128xf32, #tpu.memory_space<vmem>>, vector<1x1x8x128xf32>
    %1029 = vector.shape_cast %1028 : vector<1x1x8x128xf32> to vector<8x128xf32>
    %c0_520 = arith.constant 0 : index
    %c8_521 = arith.constant 8 : index
    %1030 = arith.index_cast %3 : i32 to index
    %c0_522 = arith.constant 0 : index
    %1031 = vector.load %arg4[%c0_520, %c8_521, %1030, %c0_522] : memref<4x9x8x128xf32, #tpu.memory_space<vmem>>, vector<1x1x8x128xf32>
    %1032 = vector.shape_cast %1031 : vector<1x1x8x128xf32> to vector<8x128xf32>
    %1033 = arith.addf %1029, %1032 : vector<8x128xf32>
    %cst_523 = arith.constant 5.000000e-01 : f32
    %1034 = vector.broadcast %cst_523 : f32 to vector<8x128xf32>
    %1035 = arith.mulf %1033, %1034 : vector<8x128xf32>
    %1036 = arith.mulf %989, %1035 : vector<8x128xf32>
    %1037 = arith.addf %904, %1036 : vector<8x128xf32>
    %c1_524 = arith.constant 1 : index
    %c7_525 = arith.constant 7 : index
    %1038 = arith.index_cast %3 : i32 to index
    %c0_526 = arith.constant 0 : index
    %1039 = vector.load %arg4[%c1_524, %c7_525, %1038, %c0_526] : memref<4x9x8x128xf32, #tpu.memory_space<vmem>>, vector<1x1x8x128xf32>
    %1040 = vector.shape_cast %1039 : vector<1x1x8x128xf32> to vector<8x128xf32>
    %c1_527 = arith.constant 1 : index
    %c8_528 = arith.constant 8 : index
    %1041 = arith.index_cast %3 : i32 to index
    %c0_529 = arith.constant 0 : index
    %1042 = vector.load %arg4[%c1_527, %c8_528, %1041, %c0_529] : memref<4x9x8x128xf32, #tpu.memory_space<vmem>>, vector<1x1x8x128xf32>
    %1043 = vector.shape_cast %1042 : vector<1x1x8x128xf32> to vector<8x128xf32>
    %1044 = arith.addf %1040, %1043 : vector<8x128xf32>
    %cst_530 = arith.constant 5.000000e-01 : f32
    %1045 = vector.broadcast %cst_530 : f32 to vector<8x128xf32>
    %1046 = arith.mulf %1044, %1045 : vector<8x128xf32>
    %1047 = arith.mulf %989, %1046 : vector<8x128xf32>
    %1048 = arith.addf %915, %1047 : vector<8x128xf32>
    %c2_531 = arith.constant 2 : index
    %c7_532 = arith.constant 7 : index
    %1049 = arith.index_cast %3 : i32 to index
    %c0_533 = arith.constant 0 : index
    %1050 = vector.load %arg4[%c2_531, %c7_532, %1049, %c0_533] : memref<4x9x8x128xf32, #tpu.memory_space<vmem>>, vector<1x1x8x128xf32>
    %1051 = vector.shape_cast %1050 : vector<1x1x8x128xf32> to vector<8x128xf32>
    %c2_534 = arith.constant 2 : index
    %c8_535 = arith.constant 8 : index
    %1052 = arith.index_cast %3 : i32 to index
    %c0_536 = arith.constant 0 : index
    %1053 = vector.load %arg4[%c2_534, %c8_535, %1052, %c0_536] : memref<4x9x8x128xf32, #tpu.memory_space<vmem>>, vector<1x1x8x128xf32>
    %1054 = vector.shape_cast %1053 : vector<1x1x8x128xf32> to vector<8x128xf32>
    %1055 = arith.addf %1051, %1054 : vector<8x128xf32>
    %cst_537 = arith.constant 5.000000e-01 : f32
    %1056 = vector.broadcast %cst_537 : f32 to vector<8x128xf32>
    %1057 = arith.mulf %1055, %1056 : vector<8x128xf32>
    %1058 = arith.mulf %989, %1057 : vector<8x128xf32>
    %1059 = arith.addf %926, %1058 : vector<8x128xf32>
    %c3_538 = arith.constant 3 : index
    %c7_539 = arith.constant 7 : index
    %1060 = arith.index_cast %3 : i32 to index
    %c0_540 = arith.constant 0 : index
    %1061 = vector.load %arg4[%c3_538, %c7_539, %1060, %c0_540] : memref<4x9x8x128xf32, #tpu.memory_space<vmem>>, vector<1x1x8x128xf32>
    %1062 = vector.shape_cast %1061 : vector<1x1x8x128xf32> to vector<8x128xf32>
    %c3_541 = arith.constant 3 : index
    %c8_542 = arith.constant 8 : index
    %1063 = arith.index_cast %3 : i32 to index
    %c0_543 = arith.constant 0 : index
    %1064 = vector.load %arg4[%c3_541, %c8_542, %1063, %c0_543] : memref<4x9x8x128xf32, #tpu.memory_space<vmem>>, vector<1x1x8x128xf32>
    %1065 = vector.shape_cast %1064 : vector<1x1x8x128xf32> to vector<8x128xf32>
    %1066 = arith.addf %1062, %1065 : vector<8x128xf32>
    %cst_544 = arith.constant 5.000000e-01 : f32
    %1067 = vector.broadcast %cst_544 : f32 to vector<8x128xf32>
    %1068 = arith.mulf %1066, %1067 : vector<8x128xf32>
    %1069 = arith.mulf %989, %1068 : vector<8x128xf32>
    %1070 = arith.addf %937, %1069 : vector<8x128xf32>
    %1071 = arith.addf %938, %989 : vector<8x128xf32>
    %1072 = arith.mulf %989, %982 : vector<8x128xf32>
    %1073 = arith.addf %940, %1072 : vector<8x128xf32>
    %1074 = arith.minimumf %941, %953 : vector<8x128xf32>
    %1075 = arith.maximumf %942, %953 : vector<8x128xf32>
    %cst_545 = arith.constant 0.000000e+00 : f32
    %1076 = vector.broadcast %cst_545 : f32 to vector<8x128xf32>
    %c0_546 = arith.constant 0 : index
    %1077 = arith.index_cast %3 : i32 to index
    %c0_547 = arith.constant 0 : index
    %1078 = vector.load %arg1[%c0_546, %1077, %c0_547] : memref<9x8x128xf32, #tpu.memory_space<vmem>>, vector<1x8x128xf32>
    %1079 = vector.shape_cast %1078 : vector<1x8x128xf32> to vector<8x128xf32>
    %c1_548 = arith.constant 1 : index
    %1080 = arith.index_cast %3 : i32 to index
    %c0_549 = arith.constant 0 : index
    %1081 = vector.load %arg1[%c1_548, %1080, %c0_549] : memref<9x8x128xf32, #tpu.memory_space<vmem>>, vector<1x8x128xf32>
    %1082 = vector.shape_cast %1081 : vector<1x8x128xf32> to vector<8x128xf32>
    %1083 = arith.addf %1079, %1082 : vector<8x128xf32>
    %cst_550 = arith.constant 5.000000e-01 : f32
    %1084 = vector.broadcast %cst_550 : f32 to vector<8x128xf32>
    %1085 = arith.mulf %1083, %1084 : vector<8x128xf32>
    %1086 = arith.subf %1085, %1073 : vector<8x128xf32>
    %c0_551 = arith.constant 0 : index
    %1087 = arith.index_cast %3 : i32 to index
    %c0_552 = arith.constant 0 : index
    %1088 = vector.load %arg6[%c0_551, %1087, %c0_552] : memref<8x8x128xf32, #tpu.memory_space<vmem>>, vector<1x8x128xf32>
    %1089 = vector.shape_cast %1088 : vector<1x8x128xf32> to vector<8x128xf32>
    %1090 = arith.mulf %1089, %1086 : vector<8x128xf32>
    %1091 = arith.mulf %1090, %1086 : vector<8x128xf32>
    %1092 = arith.addf %1076, %1091 : vector<8x128xf32>
    %c1_553 = arith.constant 1 : index
    %1093 = arith.index_cast %3 : i32 to index
    %c0_554 = arith.constant 0 : index
    %1094 = vector.load %arg1[%c1_553, %1093, %c0_554] : memref<9x8x128xf32, #tpu.memory_space<vmem>>, vector<1x8x128xf32>
    %1095 = vector.shape_cast %1094 : vector<1x8x128xf32> to vector<8x128xf32>
    %c2_555 = arith.constant 2 : index
    %1096 = arith.index_cast %3 : i32 to index
    %c0_556 = arith.constant 0 : index
    %1097 = vector.load %arg1[%c2_555, %1096, %c0_556] : memref<9x8x128xf32, #tpu.memory_space<vmem>>, vector<1x8x128xf32>
    %1098 = vector.shape_cast %1097 : vector<1x8x128xf32> to vector<8x128xf32>
    %1099 = arith.addf %1095, %1098 : vector<8x128xf32>
    %cst_557 = arith.constant 5.000000e-01 : f32
    %1100 = vector.broadcast %cst_557 : f32 to vector<8x128xf32>
    %1101 = arith.mulf %1099, %1100 : vector<8x128xf32>
    %1102 = arith.subf %1101, %1073 : vector<8x128xf32>
    %c1_558 = arith.constant 1 : index
    %1103 = arith.index_cast %3 : i32 to index
    %c0_559 = arith.constant 0 : index
    %1104 = vector.load %arg6[%c1_558, %1103, %c0_559] : memref<8x8x128xf32, #tpu.memory_space<vmem>>, vector<1x8x128xf32>
    %1105 = vector.shape_cast %1104 : vector<1x8x128xf32> to vector<8x128xf32>
    %1106 = arith.mulf %1105, %1102 : vector<8x128xf32>
    %1107 = arith.mulf %1106, %1102 : vector<8x128xf32>
    %1108 = arith.addf %1092, %1107 : vector<8x128xf32>
    %c2_560 = arith.constant 2 : index
    %1109 = arith.index_cast %3 : i32 to index
    %c0_561 = arith.constant 0 : index
    %1110 = vector.load %arg1[%c2_560, %1109, %c0_561] : memref<9x8x128xf32, #tpu.memory_space<vmem>>, vector<1x8x128xf32>
    %1111 = vector.shape_cast %1110 : vector<1x8x128xf32> to vector<8x128xf32>
    %c3_562 = arith.constant 3 : index
    %1112 = arith.index_cast %3 : i32 to index
    %c0_563 = arith.constant 0 : index
    %1113 = vector.load %arg1[%c3_562, %1112, %c0_563] : memref<9x8x128xf32, #tpu.memory_space<vmem>>, vector<1x8x128xf32>
    %1114 = vector.shape_cast %1113 : vector<1x8x128xf32> to vector<8x128xf32>
    %1115 = arith.addf %1111, %1114 : vector<8x128xf32>
    %cst_564 = arith.constant 5.000000e-01 : f32
    %1116 = vector.broadcast %cst_564 : f32 to vector<8x128xf32>
    %1117 = arith.mulf %1115, %1116 : vector<8x128xf32>
    %1118 = arith.subf %1117, %1073 : vector<8x128xf32>
    %c2_565 = arith.constant 2 : index
    %1119 = arith.index_cast %3 : i32 to index
    %c0_566 = arith.constant 0 : index
    %1120 = vector.load %arg6[%c2_565, %1119, %c0_566] : memref<8x8x128xf32, #tpu.memory_space<vmem>>, vector<1x8x128xf32>
    %1121 = vector.shape_cast %1120 : vector<1x8x128xf32> to vector<8x128xf32>
    %1122 = arith.mulf %1121, %1118 : vector<8x128xf32>
    %1123 = arith.mulf %1122, %1118 : vector<8x128xf32>
    %1124 = arith.addf %1108, %1123 : vector<8x128xf32>
    %c3_567 = arith.constant 3 : index
    %1125 = arith.index_cast %3 : i32 to index
    %c0_568 = arith.constant 0 : index
    %1126 = vector.load %arg1[%c3_567, %1125, %c0_568] : memref<9x8x128xf32, #tpu.memory_space<vmem>>, vector<1x8x128xf32>
    %1127 = vector.shape_cast %1126 : vector<1x8x128xf32> to vector<8x128xf32>
    %c4_569 = arith.constant 4 : index
    %1128 = arith.index_cast %3 : i32 to index
    %c0_570 = arith.constant 0 : index
    %1129 = vector.load %arg1[%c4_569, %1128, %c0_570] : memref<9x8x128xf32, #tpu.memory_space<vmem>>, vector<1x8x128xf32>
    %1130 = vector.shape_cast %1129 : vector<1x8x128xf32> to vector<8x128xf32>
    %1131 = arith.addf %1127, %1130 : vector<8x128xf32>
    %cst_571 = arith.constant 5.000000e-01 : f32
    %1132 = vector.broadcast %cst_571 : f32 to vector<8x128xf32>
    %1133 = arith.mulf %1131, %1132 : vector<8x128xf32>
    %1134 = arith.subf %1133, %1073 : vector<8x128xf32>
    %c3_572 = arith.constant 3 : index
    %1135 = arith.index_cast %3 : i32 to index
    %c0_573 = arith.constant 0 : index
    %1136 = vector.load %arg6[%c3_572, %1135, %c0_573] : memref<8x8x128xf32, #tpu.memory_space<vmem>>, vector<1x8x128xf32>
    %1137 = vector.shape_cast %1136 : vector<1x8x128xf32> to vector<8x128xf32>
    %1138 = arith.mulf %1137, %1134 : vector<8x128xf32>
    %1139 = arith.mulf %1138, %1134 : vector<8x128xf32>
    %1140 = arith.addf %1124, %1139 : vector<8x128xf32>
    %c4_574 = arith.constant 4 : index
    %1141 = arith.index_cast %3 : i32 to index
    %c0_575 = arith.constant 0 : index
    %1142 = vector.load %arg1[%c4_574, %1141, %c0_575] : memref<9x8x128xf32, #tpu.memory_space<vmem>>, vector<1x8x128xf32>
    %1143 = vector.shape_cast %1142 : vector<1x8x128xf32> to vector<8x128xf32>
    %c5_576 = arith.constant 5 : index
    %1144 = arith.index_cast %3 : i32 to index
    %c0_577 = arith.constant 0 : index
    %1145 = vector.load %arg1[%c5_576, %1144, %c0_577] : memref<9x8x128xf32, #tpu.memory_space<vmem>>, vector<1x8x128xf32>
    %1146 = vector.shape_cast %1145 : vector<1x8x128xf32> to vector<8x128xf32>
    %1147 = arith.addf %1143, %1146 : vector<8x128xf32>
    %cst_578 = arith.constant 5.000000e-01 : f32
    %1148 = vector.broadcast %cst_578 : f32 to vector<8x128xf32>
    %1149 = arith.mulf %1147, %1148 : vector<8x128xf32>
    %1150 = arith.subf %1149, %1073 : vector<8x128xf32>
    %c4_579 = arith.constant 4 : index
    %1151 = arith.index_cast %3 : i32 to index
    %c0_580 = arith.constant 0 : index
    %1152 = vector.load %arg6[%c4_579, %1151, %c0_580] : memref<8x8x128xf32, #tpu.memory_space<vmem>>, vector<1x8x128xf32>
    %1153 = vector.shape_cast %1152 : vector<1x8x128xf32> to vector<8x128xf32>
    %1154 = arith.mulf %1153, %1150 : vector<8x128xf32>
    %1155 = arith.mulf %1154, %1150 : vector<8x128xf32>
    %1156 = arith.addf %1140, %1155 : vector<8x128xf32>
    %c5_581 = arith.constant 5 : index
    %1157 = arith.index_cast %3 : i32 to index
    %c0_582 = arith.constant 0 : index
    %1158 = vector.load %arg1[%c5_581, %1157, %c0_582] : memref<9x8x128xf32, #tpu.memory_space<vmem>>, vector<1x8x128xf32>
    %1159 = vector.shape_cast %1158 : vector<1x8x128xf32> to vector<8x128xf32>
    %c6_583 = arith.constant 6 : index
    %1160 = arith.index_cast %3 : i32 to index
    %c0_584 = arith.constant 0 : index
    %1161 = vector.load %arg1[%c6_583, %1160, %c0_584] : memref<9x8x128xf32, #tpu.memory_space<vmem>>, vector<1x8x128xf32>
    %1162 = vector.shape_cast %1161 : vector<1x8x128xf32> to vector<8x128xf32>
    %1163 = arith.addf %1159, %1162 : vector<8x128xf32>
    %cst_585 = arith.constant 5.000000e-01 : f32
    %1164 = vector.broadcast %cst_585 : f32 to vector<8x128xf32>
    %1165 = arith.mulf %1163, %1164 : vector<8x128xf32>
    %1166 = arith.subf %1165, %1073 : vector<8x128xf32>
    %c5_586 = arith.constant 5 : index
    %1167 = arith.index_cast %3 : i32 to index
    %c0_587 = arith.constant 0 : index
    %1168 = vector.load %arg6[%c5_586, %1167, %c0_587] : memref<8x8x128xf32, #tpu.memory_space<vmem>>, vector<1x8x128xf32>
    %1169 = vector.shape_cast %1168 : vector<1x8x128xf32> to vector<8x128xf32>
    %1170 = arith.mulf %1169, %1166 : vector<8x128xf32>
    %1171 = arith.mulf %1170, %1166 : vector<8x128xf32>
    %1172 = arith.addf %1156, %1171 : vector<8x128xf32>
    %c6_588 = arith.constant 6 : index
    %1173 = arith.index_cast %3 : i32 to index
    %c0_589 = arith.constant 0 : index
    %1174 = vector.load %arg1[%c6_588, %1173, %c0_589] : memref<9x8x128xf32, #tpu.memory_space<vmem>>, vector<1x8x128xf32>
    %1175 = vector.shape_cast %1174 : vector<1x8x128xf32> to vector<8x128xf32>
    %c7_590 = arith.constant 7 : index
    %1176 = arith.index_cast %3 : i32 to index
    %c0_591 = arith.constant 0 : index
    %1177 = vector.load %arg1[%c7_590, %1176, %c0_591] : memref<9x8x128xf32, #tpu.memory_space<vmem>>, vector<1x8x128xf32>
    %1178 = vector.shape_cast %1177 : vector<1x8x128xf32> to vector<8x128xf32>
    %1179 = arith.addf %1175, %1178 : vector<8x128xf32>
    %cst_592 = arith.constant 5.000000e-01 : f32
    %1180 = vector.broadcast %cst_592 : f32 to vector<8x128xf32>
    %1181 = arith.mulf %1179, %1180 : vector<8x128xf32>
    %1182 = arith.subf %1181, %1073 : vector<8x128xf32>
    %c6_593 = arith.constant 6 : index
    %1183 = arith.index_cast %3 : i32 to index
    %c0_594 = arith.constant 0 : index
    %1184 = vector.load %arg6[%c6_593, %1183, %c0_594] : memref<8x8x128xf32, #tpu.memory_space<vmem>>, vector<1x8x128xf32>
    %1185 = vector.shape_cast %1184 : vector<1x8x128xf32> to vector<8x128xf32>
    %1186 = arith.mulf %1185, %1182 : vector<8x128xf32>
    %1187 = arith.mulf %1186, %1182 : vector<8x128xf32>
    %1188 = arith.addf %1172, %1187 : vector<8x128xf32>
    %c7_595 = arith.constant 7 : index
    %1189 = arith.index_cast %3 : i32 to index
    %c0_596 = arith.constant 0 : index
    %1190 = vector.load %arg1[%c7_595, %1189, %c0_596] : memref<9x8x128xf32, #tpu.memory_space<vmem>>, vector<1x8x128xf32>
    %1191 = vector.shape_cast %1190 : vector<1x8x128xf32> to vector<8x128xf32>
    %c8_597 = arith.constant 8 : index
    %1192 = arith.index_cast %3 : i32 to index
    %c0_598 = arith.constant 0 : index
    %1193 = vector.load %arg1[%c8_597, %1192, %c0_598] : memref<9x8x128xf32, #tpu.memory_space<vmem>>, vector<1x8x128xf32>
    %1194 = vector.shape_cast %1193 : vector<1x8x128xf32> to vector<8x128xf32>
    %1195 = arith.addf %1191, %1194 : vector<8x128xf32>
    %cst_599 = arith.constant 5.000000e-01 : f32
    %1196 = vector.broadcast %cst_599 : f32 to vector<8x128xf32>
    %1197 = arith.mulf %1195, %1196 : vector<8x128xf32>
    %1198 = arith.subf %1197, %1073 : vector<8x128xf32>
    %c7_600 = arith.constant 7 : index
    %1199 = arith.index_cast %3 : i32 to index
    %c0_601 = arith.constant 0 : index
    %1200 = vector.load %arg6[%c7_600, %1199, %c0_601] : memref<8x8x128xf32, #tpu.memory_space<vmem>>, vector<1x8x128xf32>
    %1201 = vector.shape_cast %1200 : vector<1x8x128xf32> to vector<8x128xf32>
    %1202 = arith.mulf %1201, %1198 : vector<8x128xf32>
    %1203 = arith.mulf %1202, %1198 : vector<8x128xf32>
    %1204 = arith.addf %1188, %1203 : vector<8x128xf32>
    %cst_602 = arith.constant 1.000000e+00 : f32
    %1205 = vector.broadcast %cst_602 : f32 to vector<8x128xf32>
    %1206 = arith.subf %1205, %1071 : vector<8x128xf32>
    %1207 = arith.addf %1037, %1206 : vector<8x128xf32>
    %1208 = arith.addf %1048, %1206 : vector<8x128xf32>
    %1209 = arith.addf %1059, %1206 : vector<8x128xf32>
    %1210 = arith.addf %1070, %1206 : vector<8x128xf32>
    %cst_603 = arith.constant 2.000000e+00 : f32
    %1211 = vector.broadcast %cst_603 : f32 to vector<8x128xf32>
    %1212 = arith.mulf %1004, %1211 : vector<8x128xf32>
    %cst_604 = arith.constant 1.000000e+00 : f32
    %1213 = vector.broadcast %cst_604 : f32 to vector<8x128xf32>
    %1214 = arith.subf %1212, %1213 : vector<8x128xf32>
    %c0_605 = arith.constant 0 : index
    %1215 = arith.index_cast %3 : i32 to index
    %c0_606 = arith.constant 0 : index
    %1216 = vector.load %arg5[%c0_605, %1215, %c0_606] : memref<13x8x128xf32, #tpu.memory_space<vmem>>, vector<1x8x128xf32>
    %1217 = vector.shape_cast %1216 : vector<1x8x128xf32> to vector<8x128xf32>
    %1218 = vector.shape_cast %1214 : vector<8x128xf32> to vector<1x8x128xf32>
    tpu.vector_store %arg5[%c0_605, %1215, %c0_606], %1218 {strides = array<i32>} : memref<13x8x128xf32, #tpu.memory_space<vmem>>, vector<1x8x128xf32>,
    %cst_607 = arith.constant 2.000000e+00 : f32
    %1219 = vector.broadcast %cst_607 : f32 to vector<8x128xf32>
    %1220 = arith.mulf %1015, %1219 : vector<8x128xf32>
    %cst_608 = arith.constant 1.000000e+00 : f32
    %1221 = vector.broadcast %cst_608 : f32 to vector<8x128xf32>
    %1222 = arith.subf %1220, %1221 : vector<8x128xf32>
    %c1_609 = arith.constant 1 : index
    %1223 = arith.index_cast %3 : i32 to index
    %c0_610 = arith.constant 0 : index
    %1224 = vector.load %arg5[%c1_609, %1223, %c0_610] : memref<13x8x128xf32, #tpu.memory_space<vmem>>, vector<1x8x128xf32>
    %1225 = vector.shape_cast %1224 : vector<1x8x128xf32> to vector<8x128xf32>
    %1226 = vector.shape_cast %1222 : vector<8x128xf32> to vector<1x8x128xf32>
    tpu.vector_store %arg5[%c1_609, %1223, %c0_610], %1226 {strides = array<i32>} : memref<13x8x128xf32, #tpu.memory_space<vmem>>, vector<1x8x128xf32>,
    %cst_611 = arith.constant 2.000000e+00 : f32
    %1227 = vector.broadcast %cst_611 : f32 to vector<8x128xf32>
    %1228 = arith.mulf %1026, %1227 : vector<8x128xf32>
    %cst_612 = arith.constant 1.000000e+00 : f32
    %1229 = vector.broadcast %cst_612 : f32 to vector<8x128xf32>
    %1230 = arith.subf %1228, %1229 : vector<8x128xf32>
    %c2_613 = arith.constant 2 : index
    %1231 = arith.index_cast %3 : i32 to index
    %c0_614 = arith.constant 0 : index
    %1232 = vector.load %arg5[%c2_613, %1231, %c0_614] : memref<13x8x128xf32, #tpu.memory_space<vmem>>, vector<1x8x128xf32>
    %1233 = vector.shape_cast %1232 : vector<1x8x128xf32> to vector<8x128xf32>
    %1234 = vector.shape_cast %1230 : vector<8x128xf32> to vector<1x8x128xf32>
    tpu.vector_store %arg5[%c2_613, %1231, %c0_614], %1234 {strides = array<i32>} : memref<13x8x128xf32, #tpu.memory_space<vmem>>, vector<1x8x128xf32>,
    %cst_615 = arith.constant 2.000000e+00 : f32
    %1235 = vector.broadcast %cst_615 : f32 to vector<8x128xf32>
    %1236 = arith.mulf %1207, %1235 : vector<8x128xf32>
    %cst_616 = arith.constant 1.000000e+00 : f32
    %1237 = vector.broadcast %cst_616 : f32 to vector<8x128xf32>
    %1238 = arith.subf %1236, %1237 : vector<8x128xf32>
    %c3_617 = arith.constant 3 : index
    %1239 = arith.index_cast %3 : i32 to index
    %c0_618 = arith.constant 0 : index
    %1240 = vector.load %arg5[%c3_617, %1239, %c0_618] : memref<13x8x128xf32, #tpu.memory_space<vmem>>, vector<1x8x128xf32>
    %1241 = vector.shape_cast %1240 : vector<1x8x128xf32> to vector<8x128xf32>
    %1242 = vector.shape_cast %1238 : vector<8x128xf32> to vector<1x8x128xf32>
    tpu.vector_store %arg5[%c3_617, %1239, %c0_618], %1242 {strides = array<i32>} : memref<13x8x128xf32, #tpu.memory_space<vmem>>, vector<1x8x128xf32>,
    %cst_619 = arith.constant 2.000000e+00 : f32
    %1243 = vector.broadcast %cst_619 : f32 to vector<8x128xf32>
    %1244 = arith.mulf %1208, %1243 : vector<8x128xf32>
    %cst_620 = arith.constant 1.000000e+00 : f32
    %1245 = vector.broadcast %cst_620 : f32 to vector<8x128xf32>
    %1246 = arith.subf %1244, %1245 : vector<8x128xf32>
    %c4_621 = arith.constant 4 : index
    %1247 = arith.index_cast %3 : i32 to index
    %c0_622 = arith.constant 0 : index
    %1248 = vector.load %arg5[%c4_621, %1247, %c0_622] : memref<13x8x128xf32, #tpu.memory_space<vmem>>, vector<1x8x128xf32>
    %1249 = vector.shape_cast %1248 : vector<1x8x128xf32> to vector<8x128xf32>
    %1250 = vector.shape_cast %1246 : vector<8x128xf32> to vector<1x8x128xf32>
    tpu.vector_store %arg5[%c4_621, %1247, %c0_622], %1250 {strides = array<i32>} : memref<13x8x128xf32, #tpu.memory_space<vmem>>, vector<1x8x128xf32>,
    %cst_623 = arith.constant 2.000000e+00 : f32
    %1251 = vector.broadcast %cst_623 : f32 to vector<8x128xf32>
    %1252 = arith.mulf %1209, %1251 : vector<8x128xf32>
    %cst_624 = arith.constant 1.000000e+00 : f32
    %1253 = vector.broadcast %cst_624 : f32 to vector<8x128xf32>
    %1254 = arith.subf %1252, %1253 : vector<8x128xf32>
    %c5_625 = arith.constant 5 : index
    %1255 = arith.index_cast %3 : i32 to index
    %c0_626 = arith.constant 0 : index
    %1256 = vector.load %arg5[%c5_625, %1255, %c0_626] : memref<13x8x128xf32, #tpu.memory_space<vmem>>, vector<1x8x128xf32>
    %1257 = vector.shape_cast %1256 : vector<1x8x128xf32> to vector<8x128xf32>
    %1258 = vector.shape_cast %1254 : vector<8x128xf32> to vector<1x8x128xf32>
    tpu.vector_store %arg5[%c5_625, %1255, %c0_626], %1258 {strides = array<i32>} : memref<13x8x128xf32, #tpu.memory_space<vmem>>, vector<1x8x128xf32>,
    %cst_627 = arith.constant 2.000000e+00 : f32
    %1259 = vector.broadcast %cst_627 : f32 to vector<8x128xf32>
    %1260 = arith.mulf %1210, %1259 : vector<8x128xf32>
    %cst_628 = arith.constant 1.000000e+00 : f32
    %1261 = vector.broadcast %cst_628 : f32 to vector<8x128xf32>
    %1262 = arith.subf %1260, %1261 : vector<8x128xf32>
    %c6_629 = arith.constant 6 : index
    %1263 = arith.index_cast %3 : i32 to index
    %c0_630 = arith.constant 0 : index
    %1264 = vector.load %arg5[%c6_629, %1263, %c0_630] : memref<13x8x128xf32, #tpu.memory_space<vmem>>, vector<1x8x128xf32>
    %1265 = vector.shape_cast %1264 : vector<1x8x128xf32> to vector<8x128xf32>
    %1266 = vector.shape_cast %1262 : vector<8x128xf32> to vector<1x8x128xf32>
    tpu.vector_store %arg5[%c6_629, %1263, %c0_630], %1266 {strides = array<i32>} : memref<13x8x128xf32, #tpu.memory_space<vmem>>, vector<1x8x128xf32>,
    %1267 = arith.divf %1073, %1071 : vector<8x128xf32>
    %c7_631 = arith.constant 7 : index
    %1268 = arith.index_cast %3 : i32 to index
    %c0_632 = arith.constant 0 : index
    %1269 = vector.load %arg5[%c7_631, %1268, %c0_632] : memref<13x8x128xf32, #tpu.memory_space<vmem>>, vector<1x8x128xf32>
    %1270 = vector.shape_cast %1269 : vector<1x8x128xf32> to vector<8x128xf32>
    %1271 = vector.shape_cast %1267 : vector<8x128xf32> to vector<1x8x128xf32>
    tpu.vector_store %arg5[%c7_631, %1268, %c0_632], %1271 {strides = array<i32>} : memref<13x8x128xf32, #tpu.memory_space<vmem>>, vector<1x8x128xf32>,
    %c8_633 = arith.constant 8 : index
    %1272 = arith.index_cast %3 : i32 to index
    %c0_634 = arith.constant 0 : index
    %1273 = vector.load %arg5[%c8_633, %1272, %c0_634] : memref<13x8x128xf32, #tpu.memory_space<vmem>>, vector<1x8x128xf32>
    %1274 = vector.shape_cast %1273 : vector<1x8x128xf32> to vector<8x128xf32>
    %1275 = vector.shape_cast %947 : vector<8x128xf32> to vector<1x8x128xf32>
    tpu.vector_store %arg5[%c8_633, %1272, %c0_634], %1275 {strides = array<i32>} : memref<13x8x128xf32, #tpu.memory_space<vmem>>, vector<1x8x128xf32>,
    %c9 = arith.constant 9 : index
    %1276 = arith.index_cast %3 : i32 to index
    %c0_635 = arith.constant 0 : index
    %1277 = vector.load %arg5[%c9, %1276, %c0_635] : memref<13x8x128xf32, #tpu.memory_space<vmem>>, vector<1x8x128xf32>
    %1278 = vector.shape_cast %1277 : vector<1x8x128xf32> to vector<8x128xf32>
    %1279 = vector.shape_cast %1071 : vector<8x128xf32> to vector<1x8x128xf32>
    tpu.vector_store %arg5[%c9, %1276, %c0_635], %1279 {strides = array<i32>} : memref<13x8x128xf32, #tpu.memory_space<vmem>>, vector<1x8x128xf32>,
    %cst_636 = arith.constant 9.99999997E-7 : f32
    %1280 = vector.broadcast %cst_636 : f32 to vector<8x128xf32>
    %1281 = arith.addf %1071, %1280 : vector<8x128xf32>
    %1282 = arith.divf %1204, %1281 : vector<8x128xf32>
    %c10 = arith.constant 10 : index
    %1283 = arith.index_cast %3 : i32 to index
    %c0_637 = arith.constant 0 : index
    %1284 = vector.load %arg5[%c10, %1283, %c0_637] : memref<13x8x128xf32, #tpu.memory_space<vmem>>, vector<1x8x128xf32>
    %1285 = vector.shape_cast %1284 : vector<1x8x128xf32> to vector<8x128xf32>
    %1286 = vector.shape_cast %1282 : vector<8x128xf32> to vector<1x8x128xf32>
    tpu.vector_store %arg5[%c10, %1283, %c0_637], %1286 {strides = array<i32>} : memref<13x8x128xf32, #tpu.memory_space<vmem>>, vector<1x8x128xf32>,
    %c11 = arith.constant 11 : index
    %1287 = arith.index_cast %3 : i32 to index
    %c0_638 = arith.constant 0 : index
    %1288 = vector.load %arg5[%c11, %1287, %c0_638] : memref<13x8x128xf32, #tpu.memory_space<vmem>>, vector<1x8x128xf32>
    %1289 = vector.shape_cast %1288 : vector<1x8x128xf32> to vector<8x128xf32>
    %1290 = vector.shape_cast %1074 : vector<8x128xf32> to vector<1x8x128xf32>
    tpu.vector_store %arg5[%c11, %1287, %c0_638], %1290 {strides = array<i32>} : memref<13x8x128xf32, #tpu.memory_space<vmem>>, vector<1x8x128xf32>,
    %c12 = arith.constant 12 : index
    %1291 = arith.index_cast %3 : i32 to index
    %c0_639 = arith.constant 0 : index
    %1292 = vector.load %arg5[%c12, %1291, %c0_639] : memref<13x8x128xf32, #tpu.memory_space<vmem>>, vector<1x8x128xf32>
    %1293 = vector.shape_cast %1292 : vector<1x8x128xf32> to vector<8x128xf32>
    %1294 = vector.shape_cast %1075 : vector<8x128xf32> to vector<1x8x128xf32>
    tpu.vector_store %arg5[%c12, %1291, %c0_639], %1294 {strides = array<i32>} : memref<13x8x128xf32, #tpu.memory_space<vmem>>, vector<1x8x128xf32>,
    %c1_i32_640 = arith.constant 1 : i32
    return
  }
  func.func @transform_0(%arg0: i32) -> (i32, i32, i32) {
    %c0_i32 = arith.constant 0 : i32
    %c0_i32_0 = arith.constant 0 : i32
    %c0_i32_1 = arith.constant 0 : i32
    return %c0_i32, %arg0, %c0_i32_0 : i32, i32, i32
  }
  func.func @transform_1(%arg0: i32) -> (i32, i32, i32) {
    %c0_i32 = arith.constant 0 : i32
    %c0_i32_0 = arith.constant 0 : i32
    %c0_i32_1 = arith.constant 0 : i32
    return %c0_i32, %arg0, %c0_i32_0 : i32, i32, i32
  }
  func.func @transform_2(%arg0: i32) -> (i32, i32, i32, i32) {
    %c0_i32 = arith.constant 0 : i32
    %c0_i32_0 = arith.constant 0 : i32
    %c0_i32_1 = arith.constant 0 : i32
    %c0_i32_2 = arith.constant 0 : i32
    return %c0_i32, %c0_i32_0, %arg0, %c0_i32_1 : i32, i32, i32, i32
  }
  func.func @transform_3(%arg0: i32) -> (i32, i32, i32, i32) {
    %c0_i32 = arith.constant 0 : i32
    %c0_i32_0 = arith.constant 0 : i32
    %c0_i32_1 = arith.constant 0 : i32
    %c0_i32_2 = arith.constant 0 : i32
    return %c0_i32, %c0_i32_0, %arg0, %c0_i32_1 : i32, i32, i32, i32
  }
  func.func @transform_4(%arg0: i32) -> (i32, i32, i32) {
    %c0_i32 = arith.constant 0 : i32
    %c0_i32_0 = arith.constant 0 : i32
    %c0_i32_1 = arith.constant 0 : i32
    return %c0_i32, %arg0, %c0_i32_0 : i32, i32, i32
  }
  func.func @transform_5(%arg0: i32) -> (i32, i32, i32) {
    %c0_i32 = arith.constant 0 : i32
    %c0_i32_0 = arith.constant 0 : i32
    %c0_i32_1 = arith.constant 0 : i32
    return %c0_i32, %arg0, %c0_i32_0 : i32, i32, i32
  }
}

</mosaic_0001>

<llo_original>
// kernel: tpu_custom_call.1
$region0: #{tpu_custom_call.1}
  #allocation0 [shape = 'u32[]', space=smem, size = 0x4, offset = 0x4, fixed_abs, tag = 'smem constant byte address 0x4 - core index']
  #allocation1 [shape = 'u32[144,128]{1,0:T(1,128)}', space=vmem, size = 0x12000, scoped, tag = 'internal scratch']
  %s0 = inlined_call_operand.hbm [shape: f32[9,8,128], index: 0, kind: input, shape index: {}]
  %s1 = inlined_call_operand.hbm [shape: f32[9,8,128], index: 1, kind: input, shape index: {}]
  %s2 = inlined_call_operand.hbm [shape: f32[3,9,8,128], index: 2, kind: input, shape index: {}]
  %s3 = inlined_call_operand.hbm [shape: f32[4,9,8,128], index: 3, kind: input, shape index: {}]
  %s4 = inlined_call_operand.hbm [shape: f32[13,8,128], index: 4, kind: output, shape index: {0}]
  %s5 = inlined_call_operand.hbm [shape: f32[8,8,128], index: 5, kind: output, shape index: {1}]
  %6 = xla_tuple %s4, %s5
  %s7 = sld [smem:[#allocation0]]
  $region50: #{tpu_custom_call.1} parent=0
    _
  %s9 = ssub.s32 1, %s7
  %s10 = scalar_select 0, %s9, %s7
  $region1: #{tpu_custom_call.1} parent=0
    #allocation2 [shape = 'u8[36864]{0}', space=vmem, size = 0x9000, scoped, tag = 'input window, operand 0, single buffered']
    #allocation3 [shape = 's32[1]{0}', space=sflag, size = 0x4, scoped, tag = 'scoped memory for tpu_custom_call.1']
    #allocation4 [shape = 's32[1]{0}', space=sflag, size = 0x4, scoped, tag = 'scoped memory for tpu_custom_call.1']
    #allocation5 [shape = 'u8[36864]{0}', space=vmem, size = 0x9000, scoped, tag = 'input window, operand 1, single buffered']
    #allocation6 [shape = 's32[1]{0}', space=sflag, size = 0x4, scoped, tag = 'scoped memory for tpu_custom_call.1']
    #allocation7 [shape = 'u8[110592]{0}', space=vmem, size = 0x1b000, scoped, tag = 'input window, operand 2, single buffered']
    #allocation8 [shape = 'u8[147456]{0}', space=vmem, size = 0x24000, scoped, tag = 'input window, operand 3, single buffered']
    #allocation9 [shape = 's32[1]{0}', space=sflag, size = 0x4, scoped, tag = 'scoped memory for tpu_custom_call.1']
    #allocation10 [shape = 'u8[53248]{0}', space=vmem, size = 0xd000, scoped, tag = 'output window, operand 0, single buffered']
    #allocation11 [shape = 'u8[32768]{0}', space=vmem, size = 0x8000, scoped, tag = 'output window, operand 1, single buffered']
    #allocation12 [shape = 's32[1]{0}', space=sflag, size = 0x4, scoped, tag = 'scoped memory for tpu_custom_call.1']
    %11 = vsyncpa [#allocation3], 0
    %12 = vsyncpa [#allocation6], 0
    %13 = vsyncpa [#allocation9], 0
    %14 = vsyncpa [#allocation4], 0
    %15 = vsyncpa [#allocation12], 0
    // Predicated region
    $region2: #{tpu_custom_call.1} parent=1 // pred_check
      _
    $region3: #{tpu_custom_call.1} parent=1 // pred_check_branch
      %17 = sbr.rel (0) target = $region5
    $region4: #{tpu_custom_call.1} parent=1 // pred_region
      %s19 = ssub.s32 1152, 1152
      %20 = vsyncadd [#allocation3], %s19
      %s21 = sshll.u32 [#allocation2], 4
      %s22 = int_to_ptr.vmem [resolvable:$true] %s21
      %27 = dma.hbm_to_vmem [thread:$0]  %s0, 1152, %s22, [#allocation3], 128, 128, 8
    $region5: #{tpu_custom_call.1} parent=1 // pred_fallthru
      _
    // Predicated region
    $region6: #{tpu_custom_call.1} parent=1 // pred_check
      _
    $region7: #{tpu_custom_call.1} parent=1 // pred_check_branch
      %29 = sbr.rel (0) target = $region9
    $region8: #{tpu_custom_call.1} parent=1 // pred_region
      %s31 = ssub.s32 1152, 1152
      %32 = vsyncadd [#allocation6], %s31
      %s33 = sshll.u32 [#allocation5], 4
      %s34 = int_to_ptr.vmem [resolvable:$true] %s33
      %39 = dma.hbm_to_vmem [thread:$0]  %s1, 1152, %s34, [#allocation6], 128, 128, 8
    $region9: #{tpu_custom_call.1} parent=1 // pred_fallthru
      _
    // Predicated region
    $region10: #{tpu_custom_call.1} parent=1 // pred_check
      _
    $region11: #{tpu_custom_call.1} parent=1 // pred_check_branch
      %41 = sbr.rel (0) target = $region13
    $region12: #{tpu_custom_call.1} parent=1 // pred_region
      %s43 = ssub.s32 3456, 3456
      %44 = vsyncadd [#allocation6], %s43
      %s45 = sshll.u32 [#allocation7], 4
      %s46 = int_to_ptr.vmem [resolvable:$true] %s45
      %51 = dma.hbm_to_vmem [thread:$0]  %s2, 3456, %s46, [#allocation6], 128, 128, 8
    $region13: #{tpu_custom_call.1} parent=1 // pred_fallthru
      _
    // Predicated region
    $region14: #{tpu_custom_call.1} parent=1 // pred_check
      _
    $region15: #{tpu_custom_call.1} parent=1 // pred_check_branch
      %53 = sbr.rel (0) target = $region17
    $region16: #{tpu_custom_call.1} parent=1 // pred_region
      %s55 = ssub.s32 4608, 4608
      %56 = vsyncadd [#allocation9], %s55
      %s57 = sshll.u32 [#allocation8], 4
      %s58 = int_to_ptr.vmem [resolvable:$true] %s57
      %63 = dma.hbm_to_vmem [thread:$0]  %s3, 4608, %s58, [#allocation9], 128, 128, 8
    $region17: #{tpu_custom_call.1} parent=1 // pred_fallthru
      _
    // Predicated region
    $region18: #{tpu_custom_call.1} parent=1 // pred_check
      _
    $region19: #{tpu_custom_call.1} parent=1 // pred_check_branch
      %65 = sbr.rel (0) target = $region21
    $region20: #{tpu_custom_call.1} parent=1 // pred_region
      %66 = dma.done [#allocation3], 1152
    $region21: #{tpu_custom_call.1} parent=1 // pred_fallthru
      _
    // Predicated region
    $region22: #{tpu_custom_call.1} parent=1 // pred_check
      _
    $region23: #{tpu_custom_call.1} parent=1 // pred_check_branch
      %68 = sbr.rel (0) target = $region25
    $region24: #{tpu_custom_call.1} parent=1 // pred_region
      %69 = dma.done [#allocation6], 1152
    $region25: #{tpu_custom_call.1} parent=1 // pred_fallthru
      _
    // Predicated region
    $region26: #{tpu_custom_call.1} parent=1 // pred_check
      _
    $region27: #{tpu_custom_call.1} parent=1 // pred_check_branch
      %71 = sbr.rel (0) target = $region29
    $region28: #{tpu_custom_call.1} parent=1 // pred_region
      %72 = dma.done [#allocation6], 3456
    $region29: #{tpu_custom_call.1} parent=1 // pred_fallthru
      _
    // Predicated region
    $region30: #{tpu_custom_call.1} parent=1 // pred_check
      _
    $region31: #{tpu_custom_call.1} parent=1 // pred_check_branch
      %74 = sbr.rel (0) target = $region33
    $region32: #{tpu_custom_call.1} parent=1 // pred_region
      %75 = dma.done [#allocation9], 4608
    $region33: #{tpu_custom_call.1} parent=1 // pred_fallthru
      _
    %v76 = vld [vmem:[#allocation2] sm:$0xff]
    %s77 = sadd.s32 0, 8
    %s78 = scalar_lea.vmem [#allocation2], %s77
    %v79 = vld [vmem:[%s78] sm:$0xff]
    %v80 = vld [vmem:[#allocation5] sm:$0xff]
    %s81 = scalar_lea.vmem [#allocation5], %s77
    %v82 = vld [vmem:[%s81] sm:$0xff]
    %v83 = vadd.f32 %v80, %v82
    %v84 = vmul.f32 %v83, 0.5
    %v85 = vsub.f32 %v84, 1.0
    %v86 = vmax.f32 %v85, 0.0
    %vm87 = vcmp.ne.f32.partialorder %v85, %v85
    %v88 = vadd.f32 %v85, 0.0
    %v89 = vand.u32 2147483647, %v85
    %v90 = vsub.f32 0.0, %v89
    %v91 = vmul.f32 %v90, 1.442695
    %v92 = vpow.pop %v91
    %v93 = vadd.f32 %v92, 1.0
    %v94 = vlog2.pop %v93
    %v95 = vmul.f32 %v94, 0.6931472
    %v96 = vmul.f32 -0.5, %v92
    %v97 = vadd.f32 %v96, 1.0
    %v98 = vmul.f32 %v97, %v92
    %v99 = vand.u32 2147483647, %v92
    %vm100 = vcmp.lt.f32.partialorder %v99, 0.0004427343
    %v101 = vsel %vm100, %v98, %v95
    %v102 = vadd.f32 %v86, %v101
    %v103 = vsel %vm87, %v88, %v102
    %v104 = vsub.f32 %v79, %v76
    %v105 = vadd.f32 %v76, %v79
    %v106 = vmul.f32 %v105, 0.5
    %v107 = vsub.f32 0.0, %v103
    %v108 = vmul.f32 %v107, %v104
    %v109 = vmul.f32 %v108, 1.442695
    %v110 = vpow.pop %v109
    %v111 = vsub.f32 1.0, %v110
    %112 = vst [vmem:[#allocation11] sm:$0xff] %v111
    %v113 = vld [vmem:[#allocation7] sm:$0xff]
    %s114 = scalar_lea.vmem [#allocation7], %s77
    %v115 = vld [vmem:[%s114] sm:$0xff]
    %v116 = vadd.f32 %v113, %v115
    %v117 = vmul.f32 %v116, 0.5
    %v118 = vmul.f32 %v111, %v117
    %v119 = vadd.f32 %v118, 0.0
    %s120 = sadd.s32 0, 72
    %s121 = scalar_lea.vmem [#allocation7], %s120
    %v122 = vld [vmem:[%s121] sm:$0xff]
    %s123 = sadd.s32 %s77, 72
    %s124 = scalar_lea.vmem [#allocation7], %s123
    %v125 = vld [vmem:[%s124] sm:$0xff]
    %v126 = vadd.f32 %v122, %v125
    %v127 = vmul.f32 %v126, 0.5
    %v128 = vmul.f32 %v111, %v127
    %v129 = vadd.f32 %v128, 0.0
    %s130 = sadd.s32 0, 144
    %s131 = scalar_lea.vmem [#allocation7], %s130
    %v132 = vld [vmem:[%s131] sm:$0xff]
    %s133 = sadd.s32 %s77, 144
    %s134 = scalar_lea.vmem [#allocation7], %s133
    %v135 = vld [vmem:[%s134] sm:$0xff]
    %v136 = vadd.f32 %v132, %v135
    %v137 = vmul.f32 %v136, 0.5
    %v138 = vmul.f32 %v111, %v137
    %v139 = vadd.f32 %v138, 0.0
    %v140 = vld [vmem:[#allocation8] sm:$0xff]
    %s141 = scalar_lea.vmem [#allocation8], %s77
    %v142 = vld [vmem:[%s141] sm:$0xff]
    %v143 = vadd.f32 %v140, %v142
    %v144 = vmul.f32 %v143, 0.5
    %v145 = vmul.f32 %v111, %v144
    %v146 = vadd.f32 %v145, 0.0
    %s147 = scalar_lea.vmem [#allocation8], %s120
    %v148 = vld [vmem:[%s147] sm:$0xff]
    %s149 = scalar_lea.vmem [#allocation8], %s123
    %v150 = vld [vmem:[%s149] sm:$0xff]
    %v151 = vadd.f32 %v148, %v150
    %v152 = vmul.f32 %v151, 0.5
    %v153 = vmul.f32 %v111, %v152
    %v154 = vadd.f32 %v153, 0.0
    %s155 = scalar_lea.vmem [#allocation8], %s130
    %v156 = vld [vmem:[%s155] sm:$0xff]
    %s157 = scalar_lea.vmem [#allocation8], %s133
    %v158 = vld [vmem:[%s157] sm:$0xff]
    %v159 = vadd.f32 %v156, %v158
    %v160 = vmul.f32 %v159, 0.5
    %v161 = vmul.f32 %v111, %v160
    %v162 = vadd.f32 %v161, 0.0
    %s163 = sadd.s32 0, 216
    %s164 = scalar_lea.vmem [#allocation8], %s163
    %v165 = vld [vmem:[%s164] sm:$0xff]
    %s166 = sadd.s32 %s77, 216
    %s167 = scalar_lea.vmem [#allocation8], %s166
    %v168 = vld [vmem:[%s167] sm:$0xff]
    %v169 = vadd.f32 %v165, %v168
    %v170 = vmul.f32 %v169, 0.5
    %v171 = vmul.f32 %v111, %v170
    %v172 = vadd.f32 %v171, 0.0
    %v173 = vadd.f32 %v111, 0.0
    %v174 = vmul.f32 %v111, %v106
    %v175 = vadd.f32 %v174, 0.0
    %v176 = vmin.f32 %v76, %v79
    %v177 = vmax.f32 %v76, %v79
    %v178 = vsub.f32 1.0, %v111
    %v179 = vadd.f32 %v178, 1e-10
    %v180 = vld [vmem:[%s78] sm:$0xff]
    %s181 = sadd.s32 0, 16
    %s182 = scalar_lea.vmem [#allocation2], %s181
    %v183 = vld [vmem:[%s182] sm:$0xff]
    %v184 = vld [vmem:[%s81] sm:$0xff]
    %s185 = scalar_lea.vmem [#allocation5], %s181
    %v186 = vld [vmem:[%s185] sm:$0xff]
    %v187 = vadd.f32 %v184, %v186
    %v188 = vmul.f32 %v187, 0.5
    %v189 = vsub.f32 %v188, 1.0
    %v190 = vmax.f32 %v189, 0.0
    %vm191 = vcmp.ne.f32.partialorder %v189, %v189
    %v192 = vadd.f32 %v189, 0.0
    %v193 = vand.u32 2147483647, %v189
    %v194 = vsub.f32 0.0, %v193
    %v195 = vmul.f32 %v194, 1.442695
    %v196 = vpow.pop %v195
    %v197 = vadd.f32 %v196, 1.0
    %v198 = vlog2.pop %v197
    %v199 = vmul.f32 %v198, 0.6931472
    %v200 = vmul.f32 -0.5, %v196
    %v201 = vadd.f32 %v200, 1.0
    %v202 = vmul.f32 %v201, %v196
    %v203 = vand.u32 2147483647, %v196
    %vm204 = vcmp.lt.f32.partialorder %v203, 0.0004427343
    %v205 = vsel %vm204, %v202, %v199
    %v206 = vadd.f32 %v190, %v205
    %v207 = vsel %vm191, %v192, %v206
    %v208 = vsub.f32 %v183, %v180
    %v209 = vadd.f32 %v180, %v183
    %v210 = vmul.f32 %v209, 0.5
    %v211 = vsub.f32 0.0, %v207
    %v212 = vmul.f32 %v211, %v208
    %v213 = vmul.f32 %v212, 1.442695
    %v214 = vpow.pop %v213
    %v215 = vsub.f32 1.0, %v214
    %v216 = vmul.f32 %v215, %v179
    %s217 = scalar_lea.vmem [#allocation11], %s77
    %218 = vst [vmem:[%s217] sm:$0xff] %v216
    %v219 = vld [vmem:[%s114] sm:$0xff]
    %s220 = scalar_lea.vmem [#allocation7], %s181
    %v221 = vld [vmem:[%s220] sm:$0xff]
    %v222 = vadd.f32 %v219, %v221
    %v223 = vmul.f32 %v222, 0.5
    %v224 = vmul.f32 %v216, %v223
    %v225 = vadd.f32 %v119, %v224
    %v226 = vld [vmem:[%s124] sm:$0xff]
    %s227 = sadd.s32 %s181, 72
    %s228 = scalar_lea.vmem [#allocation7], %s227
    %v229 = vld [vmem:[%s228] sm:$0xff]
    %v230 = vadd.f32 %v226, %v229
    %v231 = vmul.f32 %v230, 0.5
    %v232 = vmul.f32 %v216, %v231
    %v233 = vadd.f32 %v129, %v232
    %v234 = vld [vmem:[%s134] sm:$0xff]
    %s235 = sadd.s32 %s181, 144
    %s236 = scalar_lea.vmem [#allocation7], %s235
    %v237 = vld [vmem:[%s236] sm:$0xff]
    %v238 = vadd.f32 %v234, %v237
    %v239 = vmul.f32 %v238, 0.5
    %v240 = vmul.f32 %v216, %v239
    %v241 = vadd.f32 %v139, %v240
    %v242 = vld [vmem:[%s141] sm:$0xff]
    %s243 = scalar_lea.vmem [#allocation8], %s181
    %v244 = vld [vmem:[%s243] sm:$0xff]
    %v245 = vadd.f32 %v242, %v244
    %v246 = vmul.f32 %v245, 0.5
    %v247 = vmul.f32 %v216, %v246
    %v248 = vadd.f32 %v146, %v247
    %v249 = vld [vmem:[%s149] sm:$0xff]
    %s250 = scalar_lea.vmem [#allocation8], %s227
    %v251 = vld [vmem:[%s250] sm:$0xff]
    %v252 = vadd.f32 %v249, %v251
    %v253 = vmul.f32 %v252, 0.5
    %v254 = vmul.f32 %v216, %v253
    %v255 = vadd.f32 %v154, %v254
    %v256 = vld [vmem:[%s157] sm:$0xff]
    %s257 = scalar_lea.vmem [#allocation8], %s235
    %v258 = vld [vmem:[%s257] sm:$0xff]
    %v259 = vadd.f32 %v256, %v258
    %v260 = vmul.f32 %v259, 0.5
    %v261 = vmul.f32 %v216, %v260
    %v262 = vadd.f32 %v162, %v261
    %v263 = vld [vmem:[%s167] sm:$0xff]
    %s264 = sadd.s32 %s181, 216
    %s265 = scalar_lea.vmem [#allocation8], %s264
    %v266 = vld [vmem:[%s265] sm:$0xff]
    %v267 = vadd.f32 %v263, %v266
    %v268 = vmul.f32 %v267, 0.5
    %v269 = vmul.f32 %v216, %v268
    %v270 = vadd.f32 %v172, %v269
    %v271 = vadd.f32 %v173, %v216
    %v272 = vmul.f32 %v216, %v210
    %v273 = vadd.f32 %v175, %v272
    %v274 = vmin.f32 %v176, %v183
    %v275 = vmax.f32 %v177, %v183
    %v276 = vsub.f32 1.0, %v215
    %v277 = vadd.f32 %v276, 1e-10
    %v278 = vmul.f32 %v179, %v277
    %v279 = vld [vmem:[%s182] sm:$0xff]
    %s280 = sadd.s32 0, 24
    %s281 = scalar_lea.vmem [#allocation2], %s280
    %v282 = vld [vmem:[%s281] sm:$0xff]
    %v283 = vld [vmem:[%s185] sm:$0xff]
    %s284 = scalar_lea.vmem [#allocation5], %s280
    %v285 = vld [vmem:[%s284] sm:$0xff]
    %v286 = vadd.f32 %v283, %v285
    %v287 = vmul.f32 %v286, 0.5
    %v288 = vsub.f32 %v287, 1.0
    %v289 = vmax.f32 %v288, 0.0
    %vm290 = vcmp.ne.f32.partialorder %v288, %v288
    %v291 = vadd.f32 %v288, 0.0
    %v292 = vand.u32 2147483647, %v288
    %v293 = vsub.f32 0.0, %v292
    %v294 = vmul.f32 %v293, 1.442695
    %v295 = vpow.pop %v294
    %v296 = vadd.f32 %v295, 1.0
    %v297 = vlog2.pop %v296
    %v298 = vmul.f32 %v297, 0.6931472
    %v299 = vmul.f32 -0.5, %v295
    %v300 = vadd.f32 %v299, 1.0
    %v301 = vmul.f32 %v300, %v295
    %v302 = vand.u32 2147483647, %v295
    %vm303 = vcmp.lt.f32.partialorder %v302, 0.0004427343
    %v304 = vsel %vm303, %v301, %v298
    %v305 = vadd.f32 %v289, %v304
    %v306 = vsel %vm290, %v291, %v305
    %v307 = vsub.f32 %v282, %v279
    %v308 = vadd.f32 %v279, %v282
    %v309 = vmul.f32 %v308, 0.5
    %v310 = vsub.f32 0.0, %v306
    %v311 = vmul.f32 %v310, %v307
    %v312 = vmul.f32 %v311, 1.442695
    %v313 = vpow.pop %v312
    %v314 = vsub.f32 1.0, %v313
    %v315 = vmul.f32 %v314, %v278
    %s316 = scalar_lea.vmem [#allocation11], %s181
    %317 = vst [vmem:[%s316] sm:$0xff] %v315
    %v318 = vld [vmem:[%s220] sm:$0xff]
    %s319 = scalar_lea.vmem [#allocation7], %s280
    %v320 = vld [vmem:[%s319] sm:$0xff]
    %v321 = vadd.f32 %v318, %v320
    %v322 = vmul.f32 %v321, 0.5
    %v323 = vmul.f32 %v315, %v322
    %v324 = vadd.f32 %v225, %v323
    %v325 = vld [vmem:[%s228] sm:$0xff]
    %s326 = sadd.s32 %s280, 72
    %s327 = scalar_lea.vmem [#allocation7], %s326
    %v328 = vld [vmem:[%s327] sm:$0xff]
    %v329 = vadd.f32 %v325, %v328
    %v330 = vmul.f32 %v329, 0.5
    %v331 = vmul.f32 %v315, %v330
    %v332 = vadd.f32 %v233, %v331
    %v333 = vld [vmem:[%s236] sm:$0xff]
    %s334 = sadd.s32 %s280, 144
    %s335 = scalar_lea.vmem [#allocation7], %s334
    %v336 = vld [vmem:[%s335] sm:$0xff]
    %v337 = vadd.f32 %v333, %v336
    %v338 = vmul.f32 %v337, 0.5
    %v339 = vmul.f32 %v315, %v338
    %v340 = vadd.f32 %v241, %v339
    %v341 = vld [vmem:[%s243] sm:$0xff]
    %s342 = scalar_lea.vmem [#allocation8], %s280
    %v343 = vld [vmem:[%s342] sm:$0xff]
    %v344 = vadd.f32 %v341, %v343
    %v345 = vmul.f32 %v344, 0.5
    %v346 = vmul.f32 %v315, %v345
    %v347 = vadd.f32 %v248, %v346
    %v348 = vld [vmem:[%s250] sm:$0xff]
    %s349 = scalar_lea.vmem [#allocation8], %s326
    %v350 = vld [vmem:[%s349] sm:$0xff]
    %v351 = vadd.f32 %v348, %v350
    %v352 = vmul.f32 %v351, 0.5
    %v353 = vmul.f32 %v315, %v352
    %v354 = vadd.f32 %v255, %v353
    %v355 = vld [vmem:[%s257] sm:$0xff]
    %s356 = scalar_lea.vmem [#allocation8], %s334
    %v357 = vld [vmem:[%s356] sm:$0xff]
    %v358 = vadd.f32 %v355, %v357
    %v359 = vmul.f32 %v358, 0.5
    %v360 = vmul.f32 %v315, %v359
    %v361 = vadd.f32 %v262, %v360
    %v362 = vld [vmem:[%s265] sm:$0xff]
    %s363 = sadd.s32 %s280, 216
    %s364 = scalar_lea.vmem [#allocation8], %s363
    %v365 = vld [vmem:[%s364] sm:$0xff]
    %v366 = vadd.f32 %v362, %v365
    %v367 = vmul.f32 %v366, 0.5
    %v368 = vmul.f32 %v315, %v367
    %v369 = vadd.f32 %v270, %v368
    %v370 = vadd.f32 %v271, %v315
    %v371 = vmul.f32 %v315, %v309
    %v372 = vadd.f32 %v273, %v371
    %v373 = vmin.f32 %v274, %v282
    %v374 = vmax.f32 %v275, %v282
    %v375 = vsub.f32 1.0, %v314
    %v376 = vadd.f32 %v375, 1e-10
    %v377 = vmul.f32 %v278, %v376
    %v378 = vld [vmem:[%s281] sm:$0xff]
    %s379 = sadd.s32 0, 32
    %s380 = scalar_lea.vmem [#allocation2], %s379
    %v381 = vld [vmem:[%s380] sm:$0xff]
    %v382 = vld [vmem:[%s284] sm:$0xff]
    %s383 = scalar_lea.vmem [#allocation5], %s379
    %v384 = vld [vmem:[%s383] sm:$0xff]
    %v385 = vadd.f32 %v382, %v384
    %v386 = vmul.f32 %v385, 0.5
    %v387 = vsub.f32 %v386, 1.0
    %v388 = vmax.f32 %v387, 0.0
    %vm389 = vcmp.ne.f32.partialorder %v387, %v387
    %v390 = vadd.f32 %v387, 0.0
    %v391 = vand.u32 2147483647, %v387
    %v392 = vsub.f32 0.0, %v391
    %v393 = vmul.f32 %v392, 1.442695
    %v394 = vpow.pop %v393
    %v395 = vadd.f32 %v394, 1.0
    %v396 = vlog2.pop %v395
    %v397 = vmul.f32 %v396, 0.6931472
    %v398 = vmul.f32 -0.5, %v394
    %v399 = vadd.f32 %v398, 1.0
    %v400 = vmul.f32 %v399, %v394
    %v401 = vand.u32 2147483647, %v394
    %vm402 = vcmp.lt.f32.partialorder %v401, 0.0004427343
    %v403 = vsel %vm402, %v400, %v397
    %v404 = vadd.f32 %v388, %v403
    %v405 = vsel %vm389, %v390, %v404
    %v406 = vsub.f32 %v381, %v378
    %v407 = vadd.f32 %v378, %v381
    %v408 = vmul.f32 %v407, 0.5
    %v409 = vsub.f32 0.0, %v405
    %v410 = vmul.f32 %v409, %v406
    %v411 = vmul.f32 %v410, 1.442695
    %v412 = vpow.pop %v411
    %v413 = vsub.f32 1.0, %v412
    %v414 = vmul.f32 %v413, %v377
    %s415 = scalar_lea.vmem [#allocation11], %s280
    %416 = vst [vmem:[%s415] sm:$0xff] %v414
    %v417 = vld [vmem:[%s319] sm:$0xff]
    %s418 = scalar_lea.vmem [#allocation7], %s379
    %v419 = vld [vmem:[%s418] sm:$0xff]
    %v420 = vadd.f32 %v417, %v419
    %v421 = vmul.f32 %v420, 0.5
    %v422 = vmul.f32 %v414, %v421
    %v423 = vadd.f32 %v324, %v422
    %v424 = vld [vmem:[%s327] sm:$0xff]
    %s425 = sadd.s32 %s379, 72
    %s426 = scalar_lea.vmem [#allocation7], %s425
    %v427 = vld [vmem:[%s426] sm:$0xff]
    %v428 = vadd.f32 %v424, %v427
    %v429 = vmul.f32 %v428, 0.5
    %v430 = vmul.f32 %v414, %v429
    %v431 = vadd.f32 %v332, %v430
    %v432 = vld [vmem:[%s335] sm:$0xff]
    %s433 = sadd.s32 %s379, 144
    %s434 = scalar_lea.vmem [#allocation7], %s433
    %v435 = vld [vmem:[%s434] sm:$0xff]
    %v436 = vadd.f32 %v432, %v435
    %v437 = vmul.f32 %v436, 0.5
    %v438 = vmul.f32 %v414, %v437
    %v439 = vadd.f32 %v340, %v438
    %v440 = vld [vmem:[%s342] sm:$0xff]
    %s441 = scalar_lea.vmem [#allocation8], %s379
    %v442 = vld [vmem:[%s441] sm:$0xff]
    %v443 = vadd.f32 %v440, %v442
    %v444 = vmul.f32 %v443, 0.5
    %v445 = vmul.f32 %v414, %v444
    %v446 = vadd.f32 %v347, %v445
    %v447 = vld [vmem:[%s349] sm:$0xff]
    %s448 = scalar_lea.vmem [#allocation8], %s425
    %v449 = vld [vmem:[%s448] sm:$0xff]
    %v450 = vadd.f32 %v447, %v449
    %v451 = vmul.f32 %v450, 0.5
    %v452 = vmul.f32 %v414, %v451
    %v453 = vadd.f32 %v354, %v452
    %v454 = vld [vmem:[%s356] sm:$0xff]
    %s455 = scalar_lea.vmem [#allocation8], %s433
    %v456 = vld [vmem:[%s455] sm:$0xff]
    %v457 = vadd.f32 %v454, %v456
    %v458 = vmul.f32 %v457, 0.5
    %v459 = vmul.f32 %v414, %v458
    %v460 = vadd.f32 %v361, %v459
    %v461 = vld [vmem:[%s364] sm:$0xff]
    %s462 = sadd.s32 %s379, 216
    %s463 = scalar_lea.vmem [#allocation8], %s462
    %v464 = vld [vmem:[%s463] sm:$0xff]
    %v465 = vadd.f32 %v461, %v464
    %v466 = vmul.f32 %v465, 0.5
    %v467 = vmul.f32 %v414, %v466
    %v468 = vadd.f32 %v369, %v467
    %v469 = vadd.f32 %v370, %v414
    %v470 = vmul.f32 %v414, %v408
    %v471 = vadd.f32 %v372, %v470
    %v472 = vmin.f32 %v373, %v381
    %v473 = vmax.f32 %v374, %v381
    %v474 = vsub.f32 1.0, %v413
    %v475 = vadd.f32 %v474, 1e-10
    %v476 = vmul.f32 %v377, %v475
    %v477 = vld [vmem:[%s380] sm:$0xff]
    %s478 = sadd.s32 0, 40
    %s479 = scalar_lea.vmem [#allocation2], %s478
    %v480 = vld [vmem:[%s479] sm:$0xff]
    %v481 = vld [vmem:[%s383] sm:$0xff]
    %s482 = scalar_lea.vmem [#allocation5], %s478
    %v483 = vld [vmem:[%s482] sm:$0xff]
    %v484 = vadd.f32 %v481, %v483
    %v485 = vmul.f32 %v484, 0.5
    %v486 = vsub.f32 %v485, 1.0
    %v487 = vmax.f32 %v486, 0.0
    %vm488 = vcmp.ne.f32.partialorder %v486, %v486
    %v489 = vadd.f32 %v486, 0.0
    %v490 = vand.u32 2147483647, %v486
    %v491 = vsub.f32 0.0, %v490
    %v492 = vmul.f32 %v491, 1.442695
    %v493 = vpow.pop %v492
    %v494 = vadd.f32 %v493, 1.0
    %v495 = vlog2.pop %v494
    %v496 = vmul.f32 %v495, 0.6931472
    %v497 = vmul.f32 -0.5, %v493
    %v498 = vadd.f32 %v497, 1.0
    %v499 = vmul.f32 %v498, %v493
    %v500 = vand.u32 2147483647, %v493
    %vm501 = vcmp.lt.f32.partialorder %v500, 0.0004427343
    %v502 = vsel %vm501, %v499, %v496
    %v503 = vadd.f32 %v487, %v502
    %v504 = vsel %vm488, %v489, %v503
    %v505 = vsub.f32 %v480, %v477
    %v506 = vadd.f32 %v477, %v480
    %v507 = vmul.f32 %v506, 0.5
    %v508 = vsub.f32 0.0, %v504
    %v509 = vmul.f32 %v508, %v505
    %v510 = vmul.f32 %v509, 1.442695
    %v511 = vpow.pop %v510
    %v512 = vsub.f32 1.0, %v511
    %v513 = vmul.f32 %v512, %v476
    %s514 = scalar_lea.vmem [#allocation11], %s379
    %515 = vst [vmem:[%s514] sm:$0xff] %v513
    %v516 = vld [vmem:[%s418] sm:$0xff]
    %s517 = scalar_lea.vmem [#allocation7], %s478
    %v518 = vld [vmem:[%s517] sm:$0xff]
    %v519 = vadd.f32 %v516, %v518
    %v520 = vmul.f32 %v519, 0.5
    %v521 = vmul.f32 %v513, %v520
    %v522 = vadd.f32 %v423, %v521
    %v523 = vld [vmem:[%s426] sm:$0xff]
    %s524 = sadd.s32 %s478, 72
    %s525 = scalar_lea.vmem [#allocation7], %s524
    %v526 = vld [vmem:[%s525] sm:$0xff]
    %v527 = vadd.f32 %v523, %v526
    %v528 = vmul.f32 %v527, 0.5
    %v529 = vmul.f32 %v513, %v528
    %v530 = vadd.f32 %v431, %v529
    %v531 = vld [vmem:[%s434] sm:$0xff]
    %s532 = sadd.s32 %s478, 144
    %s533 = scalar_lea.vmem [#allocation7], %s532
    %v534 = vld [vmem:[%s533] sm:$0xff]
    %v535 = vadd.f32 %v531, %v534
    %v536 = vmul.f32 %v535, 0.5
    %v537 = vmul.f32 %v513, %v536
    %v538 = vadd.f32 %v439, %v537
    %v539 = vld [vmem:[%s441] sm:$0xff]
    %s540 = scalar_lea.vmem [#allocation8], %s478
    %v541 = vld [vmem:[%s540] sm:$0xff]
    %v542 = vadd.f32 %v539, %v541
    %v543 = vmul.f32 %v542, 0.5
    %v544 = vmul.f32 %v513, %v543
    %v545 = vadd.f32 %v446, %v544
    %v546 = vld [vmem:[%s448] sm:$0xff]
    %s547 = scalar_lea.vmem [#allocation8], %s524
    %v548 = vld [vmem:[%s547] sm:$0xff]
    %v549 = vadd.f32 %v546, %v548
    %v550 = vmul.f32 %v549, 0.5
    %v551 = vmul.f32 %v513, %v550
    %v552 = vadd.f32 %v453, %v551
    %v553 = vld [vmem:[%s455] sm:$0xff]
    %s554 = scalar_lea.vmem [#allocation8], %s532
    %v555 = vld [vmem:[%s554] sm:$0xff]
    %v556 = vadd.f32 %v553, %v555
    %v557 = vmul.f32 %v556, 0.5
    %v558 = vmul.f32 %v513, %v557
    %v559 = vadd.f32 %v460, %v558
    %v560 = vld [vmem:[%s463] sm:$0xff]
    %s561 = sadd.s32 %s478, 216
    %s562 = scalar_lea.vmem [#allocation8], %s561
    %v563 = vld [vmem:[%s562] sm:$0xff]
    %v564 = vadd.f32 %v560, %v563
    %v565 = vmul.f32 %v564, 0.5
    %v566 = vmul.f32 %v513, %v565
    %v567 = vadd.f32 %v468, %v566
    %v568 = vadd.f32 %v469, %v513
    %v569 = vmul.f32 %v513, %v507
    %v570 = vadd.f32 %v471, %v569
    %v571 = vmin.f32 %v472, %v480
    %v572 = vmax.f32 %v473, %v480
    %v573 = vsub.f32 1.0, %v512
    %v574 = vadd.f32 %v573, 1e-10
    %v575 = vmul.f32 %v476, %v574
    %v576 = vld [vmem:[%s479] sm:$0xff]
    %s577 = sadd.s32 0, 48
    %s578 = scalar_lea.vmem [#allocation2], %s577
    %v579 = vld [vmem:[%s578] sm:$0xff]
    %v580 = vld [vmem:[%s482] sm:$0xff]
    %s581 = scalar_lea.vmem [#allocation5], %s577
    %v582 = vld [vmem:[%s581] sm:$0xff]
    %v583 = vadd.f32 %v580, %v582
    %v584 = vmul.f32 %v583, 0.5
    %v585 = vsub.f32 %v584, 1.0
    %v586 = vmax.f32 %v585, 0.0
    %vm587 = vcmp.ne.f32.partialorder %v585, %v585
    %v588 = vadd.f32 %v585, 0.0
    %v589 = vand.u32 2147483647, %v585
    %v590 = vsub.f32 0.0, %v589
    %v591 = vmul.f32 %v590, 1.442695
    %v592 = vpow.pop %v591
    %v593 = vadd.f32 %v592, 1.0
    %v594 = vlog2.pop %v593
    %v595 = vmul.f32 %v594, 0.6931472
    %v596 = vmul.f32 -0.5, %v592
    %v597 = vadd.f32 %v596, 1.0
    %v598 = vmul.f32 %v597, %v592
    %v599 = vand.u32 2147483647, %v592
    %vm600 = vcmp.lt.f32.partialorder %v599, 0.0004427343
    %v601 = vsel %vm600, %v598, %v595
    %v602 = vadd.f32 %v586, %v601
    %v603 = vsel %vm587, %v588, %v602
    %v604 = vsub.f32 %v579, %v576
    %v605 = vadd.f32 %v576, %v579
    %v606 = vmul.f32 %v605, 0.5
    %v607 = vsub.f32 0.0, %v603
    %v608 = vmul.f32 %v607, %v604
    %v609 = vmul.f32 %v608, 1.442695
    %v610 = vpow.pop %v609
    %v611 = vsub.f32 1.0, %v610
    %v612 = vmul.f32 %v611, %v575
    %s613 = scalar_lea.vmem [#allocation11], %s478
    %614 = vst [vmem:[%s613] sm:$0xff] %v612
    %v615 = vld [vmem:[%s517] sm:$0xff]
    %s616 = scalar_lea.vmem [#allocation7], %s577
    %v617 = vld [vmem:[%s616] sm:$0xff]
    %v618 = vadd.f32 %v615, %v617
    %v619 = vmul.f32 %v618, 0.5
    %v620 = vmul.f32 %v612, %v619
    %v621 = vadd.f32 %v522, %v620
    %v622 = vld [vmem:[%s525] sm:$0xff]
    %s623 = sadd.s32 %s577, 72
    %s624 = scalar_lea.vmem [#allocation7], %s623
    %v625 = vld [vmem:[%s624] sm:$0xff]
    %v626 = vadd.f32 %v622, %v625
    %v627 = vmul.f32 %v626, 0.5
    %v628 = vmul.f32 %v612, %v627
    %v629 = vadd.f32 %v530, %v628
    %v630 = vld [vmem:[%s533] sm:$0xff]
    %s631 = sadd.s32 %s577, 144
    %s632 = scalar_lea.vmem [#allocation7], %s631
    %v633 = vld [vmem:[%s632] sm:$0xff]
    %v634 = vadd.f32 %v630, %v633
    %v635 = vmul.f32 %v634, 0.5
    %v636 = vmul.f32 %v612, %v635
    %v637 = vadd.f32 %v538, %v636
    %v638 = vld [vmem:[%s540] sm:$0xff]
    %s639 = scalar_lea.vmem [#allocation8], %s577
    %v640 = vld [vmem:[%s639] sm:$0xff]
    %v641 = vadd.f32 %v638, %v640
    %v642 = vmul.f32 %v641, 0.5
    %v643 = vmul.f32 %v612, %v642
    %v644 = vadd.f32 %v545, %v643
    %v645 = vld [vmem:[%s547] sm:$0xff]
    %s646 = scalar_lea.vmem [#allocation8], %s623
    %v647 = vld [vmem:[%s646] sm:$0xff]
    %v648 = vadd.f32 %v645, %v647
    %v649 = vmul.f32 %v648, 0.5
    %v650 = vmul.f32 %v612, %v649
    %v651 = vadd.f32 %v552, %v650
    %v652 = vld [vmem:[%s554] sm:$0xff]
    %s653 = scalar_lea.vmem [#allocation8], %s631
    %v654 = vld [vmem:[%s653] sm:$0xff]
    %v655 = vadd.f32 %v652, %v654
    %v656 = vmul.f32 %v655, 0.5
    %v657 = vmul.f32 %v612, %v656
    %v658 = vadd.f32 %v559, %v657
    %v659 = vld [vmem:[%s562] sm:$0xff]
    %s660 = sadd.s32 %s577, 216
    %s661 = scalar_lea.vmem [#allocation8], %s660
    %v662 = vld [vmem:[%s661] sm:$0xff]
    %v663 = vadd.f32 %v659, %v662
    %v664 = vmul.f32 %v663, 0.5
    %v665 = vmul.f32 %v612, %v664
    %v666 = vadd.f32 %v567, %v665
    %v667 = vadd.f32 %v568, %v612
    %v668 = vmul.f32 %v612, %v606
    %v669 = vadd.f32 %v570, %v668
    %v670 = vmin.f32 %v571, %v579
    %v671 = vmax.f32 %v572, %v579
    %v672 = vsub.f32 1.0, %v611
    %v673 = vadd.f32 %v672, 1e-10
    %v674 = vmul.f32 %v575, %v673
    %v675 = vld [vmem:[%s578] sm:$0xff]
    %s676 = sadd.s32 0, 56
    %s677 = scalar_lea.vmem [#allocation2], %s676
    %v678 = vld [vmem:[%s677] sm:$0xff]
    %v679 = vld [vmem:[%s581] sm:$0xff]
    %s680 = scalar_lea.vmem [#allocation5], %s676
    %v681 = vld [vmem:[%s680] sm:$0xff]
    %v682 = vadd.f32 %v679, %v681
    %v683 = vmul.f32 %v682, 0.5
    %v684 = vsub.f32 %v683, 1.0
    %v685 = vmax.f32 %v684, 0.0
    %vm686 = vcmp.ne.f32.partialorder %v684, %v684
    %v687 = vadd.f32 %v684, 0.0
    %v688 = vand.u32 2147483647, %v684
    %v689 = vsub.f32 0.0, %v688
    %v690 = vmul.f32 %v689, 1.442695
    %v691 = vpow.pop %v690
    %v692 = vadd.f32 %v691, 1.0
    %v693 = vlog2.pop %v692
    %v694 = vmul.f32 %v693, 0.6931472
    %v695 = vmul.f32 -0.5, %v691
    %v696 = vadd.f32 %v695, 1.0
    %v697 = vmul.f32 %v696, %v691
    %v698 = vand.u32 2147483647, %v691
    %vm699 = vcmp.lt.f32.partialorder %v698, 0.0004427343
    %v700 = vsel %vm699, %v697, %v694
    %v701 = vadd.f32 %v685, %v700
    %v702 = vsel %vm686, %v687, %v701
    %v703 = vsub.f32 %v678, %v675
    %v704 = vadd.f32 %v675, %v678
    %v705 = vmul.f32 %v704, 0.5
    %v706 = vsub.f32 0.0, %v702
    %v707 = vmul.f32 %v706, %v703
    %v708 = vmul.f32 %v707, 1.442695
    %v709 = vpow.pop %v708
    %v710 = vsub.f32 1.0, %v709
    %v711 = vmul.f32 %v710, %v674
    %s712 = scalar_lea.vmem [#allocation11], %s577
    %713 = vst [vmem:[%s712] sm:$0xff] %v711
    %v714 = vld [vmem:[%s616] sm:$0xff]
    %s715 = scalar_lea.vmem [#allocation7], %s676
    %v716 = vld [vmem:[%s715] sm:$0xff]
    %v717 = vadd.f32 %v714, %v716
    %v718 = vmul.f32 %v717, 0.5
    %v719 = vmul.f32 %v711, %v718
    %v720 = vadd.f32 %v621, %v719
    %v721 = vld [vmem:[%s624] sm:$0xff]
    %s722 = sadd.s32 %s676, 72
    %s723 = scalar_lea.vmem [#allocation7], %s722
    %v724 = vld [vmem:[%s723] sm:$0xff]
    %v725 = vadd.f32 %v721, %v724
    %v726 = vmul.f32 %v725, 0.5
    %v727 = vmul.f32 %v711, %v726
    %v728 = vadd.f32 %v629, %v727
    %v729 = vld [vmem:[%s632] sm:$0xff]
    %s730 = sadd.s32 %s676, 144
    %s731 = scalar_lea.vmem [#allocation7], %s730
    %v732 = vld [vmem:[%s731] sm:$0xff]
    %v733 = vadd.f32 %v729, %v732
    %v734 = vmul.f32 %v733, 0.5
    %v735 = vmul.f32 %v711, %v734
    %v736 = vadd.f32 %v637, %v735
    %v737 = vld [vmem:[%s639] sm:$0xff]
    %s738 = scalar_lea.vmem [#allocation8], %s676
    %v739 = vld [vmem:[%s738] sm:$0xff]
    %v740 = vadd.f32 %v737, %v739
    %v741 = vmul.f32 %v740, 0.5
    %v742 = vmul.f32 %v711, %v741
    %v743 = vadd.f32 %v644, %v742
    %v744 = vld [vmem:[%s646] sm:$0xff]
    %s745 = scalar_lea.vmem [#allocation8], %s722
    %v746 = vld [vmem:[%s745] sm:$0xff]
    %v747 = vadd.f32 %v744, %v746
    %v748 = vmul.f32 %v747, 0.5
    %v749 = vmul.f32 %v711, %v748
    %v750 = vadd.f32 %v651, %v749
    %v751 = vld [vmem:[%s653] sm:$0xff]
    %s752 = scalar_lea.vmem [#allocation8], %s730
    %v753 = vld [vmem:[%s752] sm:$0xff]
    %v754 = vadd.f32 %v751, %v753
    %v755 = vmul.f32 %v754, 0.5
    %v756 = vmul.f32 %v711, %v755
    %v757 = vadd.f32 %v658, %v756
    %v758 = vld [vmem:[%s661] sm:$0xff]
    %s759 = sadd.s32 %s676, 216
    %s760 = scalar_lea.vmem [#allocation8], %s759
    %v761 = vld [vmem:[%s760] sm:$0xff]
    %v762 = vadd.f32 %v758, %v761
    %v763 = vmul.f32 %v762, 0.5
    %v764 = vmul.f32 %v711, %v763
    %v765 = vadd.f32 %v666, %v764
    %v766 = vadd.f32 %v667, %v711
    %v767 = vmul.f32 %v711, %v705
    %v768 = vadd.f32 %v669, %v767
    %v769 = vmin.f32 %v670, %v678
    %v770 = vmax.f32 %v671, %v678
    %v771 = vsub.f32 1.0, %v710
    %v772 = vadd.f32 %v771, 1e-10
    %v773 = vmul.f32 %v674, %v772
    %v774 = vld [vmem:[%s677] sm:$0xff]
    %s775 = sadd.s32 0, 64
    %s776 = scalar_lea.vmem [#allocation2], %s775
    %v777 = vld [vmem:[%s776] sm:$0xff]
    %v778 = vld [vmem:[%s680] sm:$0xff]
    %s779 = scalar_lea.vmem [#allocation5], %s775
    %v780 = vld [vmem:[%s779] sm:$0xff]
    %v781 = vadd.f32 %v778, %v780
    %v782 = vmul.f32 %v781, 0.5
    %v783 = vsub.f32 %v782, 1.0
    %v784 = vmax.f32 %v783, 0.0
    %vm785 = vcmp.ne.f32.partialorder %v783, %v783
    %v786 = vadd.f32 %v783, 0.0
    %v787 = vand.u32 2147483647, %v783
    %v788 = vsub.f32 0.0, %v787
    %v789 = vmul.f32 %v788, 1.442695
    %v790 = vpow.pop %v789
    %v791 = vadd.f32 %v790, 1.0
    %v792 = vlog2.pop %v791
    %v793 = vmul.f32 %v792, 0.6931472
    %v794 = vmul.f32 -0.5, %v790
    %v795 = vadd.f32 %v794, 1.0
    %v796 = vmul.f32 %v795, %v790
    %v797 = vand.u32 2147483647, %v790
    %vm798 = vcmp.lt.f32.partialorder %v797, 0.0004427343
    %v799 = vsel %vm798, %v796, %v793
    %v800 = vadd.f32 %v784, %v799
    %v801 = vsel %vm785, %v786, %v800
    %v802 = vsub.f32 %v777, %v774
    %v803 = vadd.f32 %v774, %v777
    %v804 = vmul.f32 %v803, 0.5
    %v805 = vsub.f32 0.0, %v801
    %v806 = vmul.f32 %v805, %v802
    %v807 = vmul.f32 %v806, 1.442695
    %v808 = vpow.pop %v807
    %v809 = vsub.f32 1.0, %v808
    %v810 = vmul.f32 %v809, %v773
    %s811 = scalar_lea.vmem [#allocation11], %s676
    %812 = vst [vmem:[%s811] sm:$0xff] %v810
    %v813 = vld [vmem:[%s715] sm:$0xff]
    %s814 = scalar_lea.vmem [#allocation7], %s775
    %v815 = vld [vmem:[%s814] sm:$0xff]
    %v816 = vadd.f32 %v813, %v815
    %v817 = vmul.f32 %v816, 0.5
    %v818 = vmul.f32 %v810, %v817
    %v819 = vadd.f32 %v720, %v818
    %v820 = vld [vmem:[%s723] sm:$0xff]
    %s821 = sadd.s32 %s775, 72
    %s822 = scalar_lea.vmem [#allocation7], %s821
    %v823 = vld [vmem:[%s822] sm:$0xff]
    %v824 = vadd.f32 %v820, %v823
    %v825 = vmul.f32 %v824, 0.5
    %v826 = vmul.f32 %v810, %v825
    %v827 = vadd.f32 %v728, %v826
    %v828 = vld [vmem:[%s731] sm:$0xff]
    %s829 = sadd.s32 %s775, 144
    %s830 = scalar_lea.vmem [#allocation7], %s829
    %v831 = vld [vmem:[%s830] sm:$0xff]
    %v832 = vadd.f32 %v828, %v831
    %v833 = vmul.f32 %v832, 0.5
    %v834 = vmul.f32 %v810, %v833
    %v835 = vadd.f32 %v736, %v834
    %v836 = vld [vmem:[%s738] sm:$0xff]
    %s837 = scalar_lea.vmem [#allocation8], %s775
    %v838 = vld [vmem:[%s837] sm:$0xff]
    %v839 = vadd.f32 %v836, %v838
    %v840 = vmul.f32 %v839, 0.5
    %v841 = vmul.f32 %v810, %v840
    %v842 = vadd.f32 %v743, %v841
    %v843 = vld [vmem:[%s745] sm:$0xff]
    %s844 = scalar_lea.vmem [#allocation8], %s821
    %v845 = vld [vmem:[%s844] sm:$0xff]
    %v846 = vadd.f32 %v843, %v845
    %v847 = vmul.f32 %v846, 0.5
    %v848 = vmul.f32 %v810, %v847
    %v849 = vadd.f32 %v750, %v848
    %v850 = vld [vmem:[%s752] sm:$0xff]
    %s851 = scalar_lea.vmem [#allocation8], %s829
    %v852 = vld [vmem:[%s851] sm:$0xff]
    %v853 = vadd.f32 %v850, %v852
    %v854 = vmul.f32 %v853, 0.5
    %v855 = vmul.f32 %v810, %v854
    %v856 = vadd.f32 %v757, %v855
    %v857 = vld [vmem:[%s760] sm:$0xff]
    %s858 = sadd.s32 %s775, 216
    %s859 = scalar_lea.vmem [#allocation8], %s858
    %v860 = vld [vmem:[%s859] sm:$0xff]
    %v861 = vadd.f32 %v857, %v860
    %v862 = vmul.f32 %v861, 0.5
    %v863 = vmul.f32 %v810, %v862
    %v864 = vadd.f32 %v765, %v863
    %v865 = vadd.f32 %v766, %v810
    %v866 = vmul.f32 %v810, %v804
    %v867 = vadd.f32 %v768, %v866
    %v868 = vmin.f32 %v769, %v777
    %v869 = vmax.f32 %v770, %v777
    %v870 = vld [vmem:[#allocation2] sm:$0xff]
    %v871 = vld [vmem:[%s78] sm:$0xff]
    %v872 = vadd.f32 %v870, %v871
    %v873 = vmul.f32 %v872, 0.5
    %v874 = vsub.f32 %v873, %v867
    %v875 = vld [vmem:[#allocation11] sm:$0xff]
    %v876 = vmul.f32 %v875, %v874
    %v877 = vmul.f32 %v876, %v874
    %v878 = vadd.f32 %v877, 0.0
    %v879 = vld [vmem:[%s182] sm:$0xff]
    %v880 = vadd.f32 %v871, %v879
    %v881 = vmul.f32 %v880, 0.5
    %v882 = vsub.f32 %v881, %v867
    %v883 = vld [vmem:[%s217] sm:$0xff]
    %v884 = vmul.f32 %v883, %v882
    %v885 = vmul.f32 %v884, %v882
    %v886 = vadd.f32 %v878, %v885
    %v887 = vld [vmem:[%s281] sm:$0xff]
    %v888 = vadd.f32 %v879, %v887
    %v889 = vmul.f32 %v888, 0.5
    %v890 = vsub.f32 %v889, %v867
    %v891 = vld [vmem:[%s316] sm:$0xff]
    %v892 = vmul.f32 %v891, %v890
    %v893 = vmul.f32 %v892, %v890
    %v894 = vadd.f32 %v886, %v893
    %v895 = vld [vmem:[%s380] sm:$0xff]
    %v896 = vadd.f32 %v887, %v895
    %v897 = vmul.f32 %v896, 0.5
    %v898 = vsub.f32 %v897, %v867
    %v899 = vld [vmem:[%s415] sm:$0xff]
    %v900 = vmul.f32 %v899, %v898
    %v901 = vmul.f32 %v900, %v898
    %v902 = vadd.f32 %v894, %v901
    %v903 = vld [vmem:[%s479] sm:$0xff]
    %v904 = vadd.f32 %v895, %v903
    %v905 = vmul.f32 %v904, 0.5
    %v906 = vsub.f32 %v905, %v867
    %v907 = vld [vmem:[%s514] sm:$0xff]
    %v908 = vmul.f32 %v907, %v906
    %v909 = vmul.f32 %v908, %v906
    %v910 = vadd.f32 %v902, %v909
    %v911 = vld [vmem:[%s578] sm:$0xff]
    %v912 = vadd.f32 %v903, %v911
    %v913 = vmul.f32 %v912, 0.5
    %v914 = vsub.f32 %v913, %v867
    %v915 = vld [vmem:[%s613] sm:$0xff]
    %v916 = vmul.f32 %v915, %v914
    %v917 = vmul.f32 %v916, %v914
    %v918 = vadd.f32 %v910, %v917
    %v919 = vld [vmem:[%s677] sm:$0xff]
    %v920 = vadd.f32 %v911, %v919
    %v921 = vmul.f32 %v920, 0.5
    %v922 = vsub.f32 %v921, %v867
    %v923 = vld [vmem:[%s712] sm:$0xff]
    %v924 = vmul.f32 %v923, %v922
    %v925 = vmul.f32 %v924, %v922
    %v926 = vadd.f32 %v918, %v925
    %v927 = vld [vmem:[%s776] sm:$0xff]
    %v928 = vadd.f32 %v919, %v927
    %v929 = vmul.f32 %v928, 0.5
    %v930 = vsub.f32 %v929, %v867
    %v931 = vld [vmem:[%s811] sm:$0xff]
    %v932 = vmul.f32 %v931, %v930
    %v933 = vmul.f32 %v932, %v930
    %v934 = vadd.f32 %v926, %v933
    %v935 = vsub.f32 1.0, %v865
    %v936 = vadd.f32 %v842, %v935
    %v937 = vadd.f32 %v849, %v935
    %v938 = vadd.f32 %v856, %v935
    %v939 = vadd.f32 %v864, %v935
    %v940 = vmul.f32 %v819, 2.0
    %v941 = vsub.f32 %v940, 1.0
    %942 = vst [vmem:[#allocation10] sm:$0xff] %v941
    %v943 = vmul.f32 %v827, 2.0
    %v944 = vsub.f32 %v943, 1.0
    %s945 = scalar_lea.vmem [#allocation10], %s77
    %946 = vst [vmem:[%s945] sm:$0xff] %v944
    %v947 = vmul.f32 %v835, 2.0
    %v948 = vsub.f32 %v947, 1.0
    %s949 = scalar_lea.vmem [#allocation10], %s181
    %950 = vst [vmem:[%s949] sm:$0xff] %v948
    %v951 = vmul.f32 %v936, 2.0
    %v952 = vsub.f32 %v951, 1.0
    %s953 = scalar_lea.vmem [#allocation10], %s280
    %954 = vst [vmem:[%s953] sm:$0xff] %v952
    %v955 = vmul.f32 %v937, 2.0
    %v956 = vsub.f32 %v955, 1.0
    %s957 = scalar_lea.vmem [#allocation10], %s379
    %958 = vst [vmem:[%s957] sm:$0xff] %v956
    %v959 = vmul.f32 %v938, 2.0
    %v960 = vsub.f32 %v959, 1.0
    %s961 = scalar_lea.vmem [#allocation10], %s478
    %962 = vst [vmem:[%s961] sm:$0xff] %v960
    %v963 = vmul.f32 %v939, 2.0
    %v964 = vsub.f32 %v963, 1.0
    %s965 = scalar_lea.vmem [#allocation10], %s577
    %966 = vst [vmem:[%s965] sm:$0xff] %v964
    %v967 = vrcp.pop %v865
    %v968 = vmul.f32 %v867, %v967
    %s969 = scalar_lea.vmem [#allocation10], %s676
    %970 = vst [vmem:[%s969] sm:$0xff] %v968
    %s971 = scalar_lea.vmem [#allocation10], %s775
    %972 = vst [vmem:[%s971] sm:$0xff] %v773
    %s973 = scalar_lea.vmem [#allocation10], %s120
    %974 = vst [vmem:[%s973] sm:$0xff] %v865
    %v975 = vadd.f32 %v865, 1e-06
    %v976 = vrcp.pop %v975
    %v977 = vmul.f32 %v934, %v976
    %s978 = sadd.s32 0, 80
    %s979 = scalar_lea.vmem [#allocation10], %s978
    %980 = vst [vmem:[%s979] sm:$0xff] %v977
    %s981 = sadd.s32 0, 88
    %s982 = scalar_lea.vmem [#allocation10], %s981
    %983 = vst [vmem:[%s982] sm:$0xff] %v868
    %s984 = sadd.s32 0, 96
    %s985 = scalar_lea.vmem [#allocation10], %s984
    %986 = vst [vmem:[%s985] sm:$0xff] %v869
    // Predicated region
    $region34: #{tpu_custom_call.1} parent=1 // pred_check
      _
    $region35: #{tpu_custom_call.1} parent=1 // pred_check_branch
      %988 = sbr.rel (0) target = $region37
    $region36: #{tpu_custom_call.1} parent=1 // pred_region
      %s990 = ssub.s32 1664, 1664
      %991 = vsyncadd [#allocation4], %s990
      %s992 = sshll.u32 [#allocation10], 4
      %s993 = int_to_ptr.vmem [resolvable:$true] %s992
      %998 = dma.vmem_to_hbm [thread:$0]  %s993, 1664, %s4, [#allocation4], 128, 128, 8
    $region37: #{tpu_custom_call.1} parent=1 // pred_fallthru
      _
    // Predicated region
    $region38: #{tpu_custom_call.1} parent=1 // pred_check
      _
    $region39: #{tpu_custom_call.1} parent=1 // pred_check_branch
      %1000 = sbr.rel (0) target = $region41
    $region40: #{tpu_custom_call.1} parent=1 // pred_region
      %s1002 = ssub.s32 1024, 1024
      %1003 = vsyncadd [#allocation12], %s1002
      %s1004 = sshll.u32 [#allocation11], 4
      %s1005 = int_to_ptr.vmem [resolvable:$true] %s1004
      %1010 = dma.vmem_to_hbm [thread:$0]  %s1005, 1024, %s5, [#allocation12], 128, 128, 8
    $region41: #{tpu_custom_call.1} parent=1 // pred_fallthru
      _
    // Predicated region
    $region42: #{tpu_custom_call.1} parent=1 // pred_check
      _
    $region43: #{tpu_custom_call.1} parent=1 // pred_check_branch
      %1012 = sbr.rel (0) target = $region45
    $region44: #{tpu_custom_call.1} parent=1 // pred_region
      %1013 = dma.done [#allocation4], 1664
    $region45: #{tpu_custom_call.1} parent=1 // pred_fallthru
      _
    // Predicated region
    $region46: #{tpu_custom_call.1} parent=1 // pred_check
      _
    $region47: #{tpu_custom_call.1} parent=1 // pred_check_branch
      %1015 = sbr.rel (0) target = $region49
    $region48: #{tpu_custom_call.1} parent=1 // pred_region
      %1016 = dma.done [#allocation12], 1024
    $region49: #{tpu_custom_call.1} parent=1 // pred_fallthru
      _
    %1017 = vsyncpa [#allocation3], 1
    %1018 = vsyncpa [#allocation6], 1
    %1019 = vsyncpa [#allocation9], 1
    %1020 = vsyncpa [#allocation4], 1
    %1021 = vsyncpa [#allocation12], 1

</llo_original>
